<compile_context>
chip_gen: v7x
topology: tpu7x:2x2x1
jax: 0.10.0
libtpu: 0.0.40
codegen_flags: <defaults>
</compile_context>

<pallas_src>
import functools
import math

import jax
import jax.numpy as jnp
from jax.experimental import pallas as pl
from jax.experimental.pallas import tpu as pltpu


def _round_up(x, m):
    return (x + m - 1) // m * m


def _choose_tm(M):
    # Big tiles amortize the per-grid-step pipeline overhead; keep >=2 grid
    # steps when possible so v7x's 2nd TensorCore gets work on the parallel axis.
    if M <= 16:
        return _round_up(M, 8)
    if M >= 1024:
        return 512
    return _round_up((M + 1) // 2, 8)


# --------------------------------------------------------------------------- #
# Pallas kernels
# --------------------------------------------------------------------------- #
def _pw_kernel(a_ref, w_ref, b_ref, o_ref, *, act, slope):
    # a_ref/w_ref are bf16 (no in-kernel cast); f32 accumulate + epilogue.
    acc = jnp.dot(a_ref[...], w_ref[...], preferred_element_type=jnp.float32)
    acc = acc + b_ref[...]
    if act == "leaky":
        acc = jnp.where(acc >= 0.0, acc, acc * slope)
    o_ref[...] = acc.astype(o_ref.dtype)


def _pw_res_kernel(a_ref, w_ref, b_ref, r_ref, o_ref, *, act, slope):
    acc = jnp.dot(a_ref[...], w_ref[...], preferred_element_type=jnp.float32)
    acc = acc + b_ref[...]
    if act == "leaky":
        acc = jnp.where(acc >= 0.0, acc, acc * slope)
    acc = acc + r_ref[...].astype(jnp.float32)                 # fused residual add
    o_ref[...] = acc.astype(o_ref.dtype)


def _ffn_kernel(a_ref, w1_ref, b1_ref, w2_ref, b2_ref, o_ref, *, internal):
    # ConvFFN2 fully fused: 1x1 -> chunk -> x1*relu(x2) -> 1x1 -> + identity.
    # Single (C, 2*internal) matmul, then a free lane-aligned split for x1/x2.
    a = a_ref[...]                                             # bf16 (tm, C)
    h = jnp.dot(a, w1_ref[...], preferred_element_type=jnp.float32) + b1_ref[...]
    x1 = h[:, :internal]
    x2 = h[:, internal:]
    g = (x1 * jnp.maximum(x2, 0.0)).astype(jnp.bfloat16)       # gate, back to bf16
    acc = jnp.dot(g, w2_ref[...], preferred_element_type=jnp.float32) + b2_ref[...]
    acc = acc + a.astype(jnp.float32)                          # identity residual
    o_ref[...] = acc.astype(o_ref.dtype)


def _dw_kernel(x_ref, w_ref, b_ref, o_ref, *, H, W):
    # Depthwise 3x3, stride 1.  x_ref: (1, H+2, Wp, CB), sublane axis = padded W.
    # W-direction (sublane) shifts are hoisted out of the 9-tap loop: 3 shifted
    # views built once, the inner loop only slices along H (a higher dim, i.e. a
    # free block offset) -> 3 sublane relayouts instead of 9.
    x = x_ref[...].astype(jnp.float32)
    w = w_ref[...]                                             # (9, CB) f32
    xw = [x[:, :, dw_:dw_ + W, :] for dw_ in range(3)]
    acc = jnp.zeros(o_ref.shape, jnp.float32)
    for dh in range(3):
        for dw_ in range(3):
            tap = w[dh * 3 + dw_, :].reshape(1, 1, 1, -1)
            acc = acc + xw[dw_][:, dh:dh + H, :, :] * tap
    acc = acc + b_ref[...].reshape(1, 1, 1, -1)
    o_ref[...] = acc.astype(o_ref.dtype)


# --------------------------------------------------------------------------- #
# Kernel wrappers
# --------------------------------------------------------------------------- #
def _pad_rows(x, Mp):
    M = x.shape[0]
    return x if Mp == M else jnp.pad(x, ((0, Mp - M), (0, 0)))


def pointwise_conv(x2d, w, b, *, act="none", slope=0.01, residual=None,
                   out_dtype=jnp.bfloat16):
    """(M,K) bf16 @ (K,N) bf16 + bias, optional fused LeakyReLU / residual add.
    Weight and bias stay VMEM-resident (constant index_map); grid tiles M only."""
    M, K = x2d.shape
    N = w.shape[1]
    tm = _choose_tm(M)
    Mp = _round_up(M, tm)
    a_p = _pad_rows(x2d, Mp)
    b2 = b.reshape(1, N).astype(jnp.float32)

    in_specs = [
        pl.BlockSpec((tm, K), lambda i: (i, 0)),
        pl.BlockSpec((K, N), lambda i: (0, 0)),      # resident weight
        pl.BlockSpec((1, N), lambda i: (0, 0)),      # resident bias
    ]
    args = [a_p, w, b2]
    if residual is None:
        kern = functools.partial(_pw_kernel, act=act, slope=slope)
    else:
        kern = functools.partial(_pw_res_kernel, act=act, slope=slope)
        in_specs.append(pl.BlockSpec((tm, N), lambda i: (i, 0)))
        args.append(_pad_rows(residual, Mp))

    out = pl.pallas_call(
        kern,
        out_shape=jax.ShapeDtypeStruct((Mp, N), out_dtype),
        grid=(Mp // tm,),
        in_specs=in_specs,
        out_specs=pl.BlockSpec((tm, N), lambda i: (i, 0)),
        compiler_params=pltpu.CompilerParams(dimension_semantics=("parallel",)),
    )(*args)
    return out[:M] if Mp != M else out


def conv_ffn2(x2d, w1, b1, w2, b2, *, out_dtype=jnp.float32):
    """Whole ConvFFN2 in one pallas_call (gate + second 1x1 + identity residual)."""
    M, C = x2d.shape
    internal = w2.shape[0]
    two_int = w1.shape[1]
    tm = _choose_tm(M)
    Mp = _round_up(M, tm)
    a_p = _pad_rows(x2d, Mp)
    out = pl.pallas_call(
        functools.partial(_ffn_kernel, internal=internal),
        out_shape=jax.ShapeDtypeStruct((Mp, C), out_dtype),
        grid=(Mp // tm,),
        in_specs=[
            pl.BlockSpec((tm, C), lambda i: (i, 0)),
            pl.BlockSpec((C, two_int), lambda i: (0, 0)),        # resident weights
            pl.BlockSpec((1, two_int), lambda i: (0, 0)),
            pl.BlockSpec((internal, C), lambda i: (0, 0)),
            pl.BlockSpec((1, C), lambda i: (0, 0)),
        ],
        out_specs=pl.BlockSpec((tm, C), lambda i: (i, 0)),
        compiler_params=pltpu.CompilerParams(dimension_semantics=("parallel",)),
    )(a_p, w1, b1, w2, b2)
    return out[:M] if Mp != M else out


def dwconv3x3(x, w9, b, *, out_dtype=jnp.bfloat16):
    """Depthwise 3x3 conv, stride 1, padding 1, NHWC.
    Padded width sublane-aligned (multiple of 8); tiled over (batch, 128-lane
    channel blocks) so each VMEM block is lane-dense."""
    B, H, W, C = x.shape
    cb = 128 if C % 128 == 0 else C
    Wp = _round_up(W + 2, 8)                     # sublane-align the padded width
    xp = jnp.pad(x, ((0, 0), (1, 1), (1, Wp - W - 1), (0, 0)))
    # TODO(synk): H-strip tiling with a 2-row halo for large frames (v7x's
    # 64 MiB VMEM); whole-frame blocks are fine at the latent sizes used here.
    return pl.pallas_call(
        functools.partial(_dw_kernel, H=H, W=W),
        out_shape=jax.ShapeDtypeStruct((B, H, W, C), out_dtype),
        grid=(B, C // cb),
        in_specs=[
            pl.BlockSpec((1, H + 2, Wp, cb), lambda b_, c: (b_, 0, 0, c)),
            pl.BlockSpec((9, cb), lambda b_, c: (0, c)),
            pl.BlockSpec((1, cb), lambda b_, c: (0, c)),
        ],
        out_specs=pl.BlockSpec((1, H, W, cb), lambda b_, c: (b_, 0, 0, c)),
        compiler_params=pltpu.CompilerParams(
            dimension_semantics=("parallel", "parallel")),
    )(xp, w9, b.reshape(1, C))


# --------------------------------------------------------------------------- #
# Parameters (PyTorch Conv2d-style init), weights stored bf16 once
# --------------------------------------------------------------------------- #
def make_spatial_prior_adaptor3_params(key, N=256):
    C = N * 2
    internal = C * 2  # ConvFFN2 expansion_factor = 2
    ks = jax.random.split(key, 10)

    def conv1x1(kw, kb, cin, cout):
        bound = 1.0 / math.sqrt(cin)
        w = jax.random.uniform(kw, (cin, cout), jnp.float32, -bound, bound)
        b = jax.random.uniform(kb, (cout,), jnp.float32, -bound, bound)
        return {"w": w.astype(jnp.bfloat16), "b": b}

    def conv_dw(kw, kb, c):
        bound = 1.0 / 3.0  # fan_in = 9
        w = jax.random.uniform(kw, (3, 3, c), jnp.float32, -bound, bound)
        b = jax.random.uniform(kb, (c,), jnp.float32, -bound, bound)
        return {"w": w.reshape(9, c), "b": b}

    return {
        "dc_conv1": conv1x1(ks[0], ks[1], C, C),
        "dc_dw": conv_dw(ks[2], ks[3], C),
        "dc_conv2": conv1x1(ks[4], ks[5], C, C),
        "ffn_conv1": conv1x1(ks[6], ks[7], C, 2 * internal),   # single fused gate weight
        "ffn_conv2": conv1x1(ks[8], ks[9], internal, C),
    }


# --------------------------------------------------------------------------- #
# Forward pass (DepthConvBlock2 = DepthConv + ConvFFN2)
# --------------------------------------------------------------------------- #
def spatial_prior_adaptor3_forward(P, x_nchw):
    # NCHW -> NHWC with the f32->bf16 cast folded into the same materialized copy.
    x = jnp.transpose(x_nchw, (0, 2, 3, 1)).astype(jnp.bfloat16)
    B, H, W, C = x.shape
    M = B * H * W
    x2d = x.reshape(M, C)

    # ---- DepthConv: 1x1 + LeakyReLU(0.01) -> depthwise 3x3 -> 1x1, + identity ----
    h = pointwise_conv(x2d, P["dc_conv1"]["w"], P["dc_conv1"]["b"],
                       act="leaky", slope=0.01, out_dtype=jnp.bfloat16)
    h = dwconv3x3(h.reshape(B, H, W, C), P["dc_dw"]["w"], P["dc_dw"]["b"],
                  out_dtype=jnp.bfloat16).reshape(M, C)
    # dc_out is the largest intermediate (written once, read twice) -> bf16.
    dc_out = pointwise_conv(h, P["dc_conv2"]["w"], P["dc_conv2"]["b"],
                            residual=x2d, out_dtype=jnp.bfloat16)

    # ---- ConvFFN2, fully fused in one kernel ----
    y = conv_ffn2(dc_out,
                  P["ffn_conv1"]["w"], P["ffn_conv1"]["b"].reshape(1, -1),
                  P["ffn_conv2"]["w"], P["ffn_conv2"]["b"].reshape(1, -1),
                  out_dtype=jnp.float32)

    return jnp.transpose(y.reshape(B, H, W, C), (0, 3, 1, 2))


# --------------------------------------------------------------------------- #
if __name__ == "__main__":
    key = jax.random.PRNGKey(0)
    k_param, k_x = jax.random.split(key)

    # Small test configuration (module default is N=256 -> 512 channels).
    N = 64                      # -> channels = N * 2 = 128 (lane-dense)
    B, H, W = 2, 16, 16
    C = N * 2

    x = jax.random.normal(k_x, (B, C, H, W), jnp.float32)
    params = make_spatial_prior_adaptor3_params(k_param, N=N)

    fwd = jax.jit(spatial_prior_adaptor3_forward)
    out = fwd(params, x)
    jax.block_until_ready(out)

    assert out.shape == (B, C, H, W)
    assert bool(jnp.all(jnp.isfinite(out)))
    print("KERNEL_OK")
</pallas_src>

<mosaic_0001>
module attributes {stable_mosaic.version = 11 : i64} {
  func.func @_dw_kernel(%arg0: i32, %arg1: i32, %arg2: memref<1x18x24x128xbf16, #tpu.memory_space<vmem>>, %arg3: memref<9x128xf32, #tpu.memory_space<vmem>>, %arg4: memref<1x128xf32, #tpu.memory_space<vmem>>, %arg5: memref<1x16x16x128xbf16, #tpu.memory_space<vmem>>) attributes {dimension_semantics = [#tpu.dimension_semantics<parallel>, #tpu.dimension_semantics<parallel>], iteration_bounds = array<i64: 2, 1>, scalar_prefetch = 0 : i64, scratch_operands = 0 : i64, tpu.core_type = #tpu.core_type<tc>, window_params = [{transform_indices = @transform_0, window_bounds = array<i64: 1, 18, 24, 128>}, {transform_indices = @transform_1, window_bounds = array<i64: 9, 128>}, {transform_indices = @transform_2, window_bounds = array<i64: 1, 128>}, {transform_indices = @transform_3, window_bounds = array<i64: 1, 16, 16, 128>}]} {
    %c0 = arith.constant 0 : index
    %c0_0 = arith.constant 0 : index
    %c0_1 = arith.constant 0 : index
    %c0_2 = arith.constant 0 : index
    %0 = vector.load %arg2[%c0, %c0_0, %c0_1, %c0_2] : memref<1x18x24x128xbf16, #tpu.memory_space<vmem>>, vector<1x18x24x128xbf16>
    %1 = arith.extf %0 : vector<1x18x24x128xbf16> to vector<1x18x24x128xf32>
    %c0_3 = arith.constant 0 : index
    %c0_4 = arith.constant 0 : index
    %2 = vector.load %arg3[%c0_3, %c0_4] : memref<9x128xf32, #tpu.memory_space<vmem>>, vector<9x128xf32>
    %3 = vector.extract_strided_slice %1 {offsets = [0, 0, 0, 0], sizes = [1, 18, 16, 128], strides = [1, 1, 1, 1]} : vector<1x18x24x128xf32> to vector<1x18x16x128xf32>
    %4 = vector.extract_strided_slice %1 {offsets = [0, 0, 1, 0], sizes = [1, 18, 16, 128], strides = [1, 1, 1, 1]} : vector<1x18x24x128xf32> to vector<1x18x16x128xf32>
    %5 = vector.extract_strided_slice %1 {offsets = [0, 0, 2, 0], sizes = [1, 18, 16, 128], strides = [1, 1, 1, 1]} : vector<1x18x24x128xf32> to vector<1x18x16x128xf32>
    %cst = arith.constant 0.000000e+00 : f32
    %6 = vector.broadcast %cst : f32 to vector<1x16x16x128xf32>
    %7 = vector.extract_strided_slice %2 {offsets = [0, 0], sizes = [1, 128], strides = [1, 1]} : vector<9x128xf32> to vector<1x128xf32>
    %8 = vector.shape_cast %7 : vector<1x128xf32> to vector<128xf32>
    %9 = vector.shape_cast %8 : vector<128xf32> to vector<1x1x1x128xf32>
    %10 = vector.extract_strided_slice %3 {offsets = [0, 0, 0, 0], sizes = [1, 16, 16, 128], strides = [1, 1, 1, 1]} : vector<1x18x16x128xf32> to vector<1x16x16x128xf32>
    %11 = vector.broadcast %9 : vector<1x1x1x128xf32> to vector<1x16x16x128xf32>
    %12 = arith.mulf %10, %11 : vector<1x16x16x128xf32>
    %13 = arith.addf %6, %12 : vector<1x16x16x128xf32>
    %14 = vector.extract_strided_slice %2 {offsets = [1, 0], sizes = [1, 128], strides = [1, 1]} : vector<9x128xf32> to vector<1x128xf32>
    %15 = vector.shape_cast %14 : vector<1x128xf32> to vector<128xf32>
    %16 = vector.shape_cast %15 : vector<128xf32> to vector<1x1x1x128xf32>
    %17 = vector.extract_strided_slice %4 {offsets = [0, 0, 0, 0], sizes = [1, 16, 16, 128], strides = [1, 1, 1, 1]} : vector<1x18x16x128xf32> to vector<1x16x16x128xf32>
    %18 = vector.broadcast %16 : vector<1x1x1x128xf32> to vector<1x16x16x128xf32>
    %19 = arith.mulf %17, %18 : vector<1x16x16x128xf32>
    %20 = arith.addf %13, %19 : vector<1x16x16x128xf32>
    %21 = vector.extract_strided_slice %2 {offsets = [2, 0], sizes = [1, 128], strides = [1, 1]} : vector<9x128xf32> to vector<1x128xf32>
    %22 = vector.shape_cast %21 : vector<1x128xf32> to vector<128xf32>
    %23 = vector.shape_cast %22 : vector<128xf32> to vector<1x1x1x128xf32>
    %24 = vector.extract_strided_slice %5 {offsets = [0, 0, 0, 0], sizes = [1, 16, 16, 128], strides = [1, 1, 1, 1]} : vector<1x18x16x128xf32> to vector<1x16x16x128xf32>
    %25 = vector.broadcast %23 : vector<1x1x1x128xf32> to vector<1x16x16x128xf32>
    %26 = arith.mulf %24, %25 : vector<1x16x16x128xf32>
    %27 = arith.addf %20, %26 : vector<1x16x16x128xf32>
    %28 = vector.extract_strided_slice %2 {offsets = [3, 0], sizes = [1, 128], strides = [1, 1]} : vector<9x128xf32> to vector<1x128xf32>
    %29 = vector.shape_cast %28 : vector<1x128xf32> to vector<128xf32>
    %30 = vector.shape_cast %29 : vector<128xf32> to vector<1x1x1x128xf32>
    %31 = vector.extract_strided_slice %3 {offsets = [0, 1, 0, 0], sizes = [1, 16, 16, 128], strides = [1, 1, 1, 1]} : vector<1x18x16x128xf32> to vector<1x16x16x128xf32>
    %32 = vector.broadcast %30 : vector<1x1x1x128xf32> to vector<1x16x16x128xf32>
    %33 = arith.mulf %31, %32 : vector<1x16x16x128xf32>
    %34 = arith.addf %27, %33 : vector<1x16x16x128xf32>
    %35 = vector.extract_strided_slice %2 {offsets = [4, 0], sizes = [1, 128], strides = [1, 1]} : vector<9x128xf32> to vector<1x128xf32>
    %36 = vector.shape_cast %35 : vector<1x128xf32> to vector<128xf32>
    %37 = vector.shape_cast %36 : vector<128xf32> to vector<1x1x1x128xf32>
    %38 = vector.extract_strided_slice %4 {offsets = [0, 1, 0, 0], sizes = [1, 16, 16, 128], strides = [1, 1, 1, 1]} : vector<1x18x16x128xf32> to vector<1x16x16x128xf32>
    %39 = vector.broadcast %37 : vector<1x1x1x128xf32> to vector<1x16x16x128xf32>
    %40 = arith.mulf %38, %39 : vector<1x16x16x128xf32>
    %41 = arith.addf %34, %40 : vector<1x16x16x128xf32>
    %42 = vector.extract_strided_slice %2 {offsets = [5, 0], sizes = [1, 128], strides = [1, 1]} : vector<9x128xf32> to vector<1x128xf32>
    %43 = vector.shape_cast %42 : vector<1x128xf32> to vector<128xf32>
    %44 = vector.shape_cast %43 : vector<128xf32> to vector<1x1x1x128xf32>
    %45 = vector.extract_strided_slice %5 {offsets = [0, 1, 0, 0], sizes = [1, 16, 16, 128], strides = [1, 1, 1, 1]} : vector<1x18x16x128xf32> to vector<1x16x16x128xf32>
    %46 = vector.broadcast %44 : vector<1x1x1x128xf32> to vector<1x16x16x128xf32>
    %47 = arith.mulf %45, %46 : vector<1x16x16x128xf32>
    %48 = arith.addf %41, %47 : vector<1x16x16x128xf32>
    %49 = vector.extract_strided_slice %2 {offsets = [6, 0], sizes = [1, 128], strides = [1, 1]} : vector<9x128xf32> to vector<1x128xf32>
    %50 = vector.shape_cast %49 : vector<1x128xf32> to vector<128xf32>
    %51 = vector.shape_cast %50 : vector<128xf32> to vector<1x1x1x128xf32>
    %52 = vector.extract_strided_slice %3 {offsets = [0, 2, 0, 0], sizes = [1, 16, 16, 128], strides = [1, 1, 1, 1]} : vector<1x18x16x128xf32> to vector<1x16x16x128xf32>
    %53 = vector.broadcast %51 : vector<1x1x1x128xf32> to vector<1x16x16x128xf32>
    %54 = arith.mulf %52, %53 : vector<1x16x16x128xf32>
    %55 = arith.addf %48, %54 : vector<1x16x16x128xf32>
    %56 = vector.extract_strided_slice %2 {offsets = [7, 0], sizes = [1, 128], strides = [1, 1]} : vector<9x128xf32> to vector<1x128xf32>
    %57 = vector.shape_cast %56 : vector<1x128xf32> to vector<128xf32>
    %58 = vector.shape_cast %57 : vector<128xf32> to vector<1x1x1x128xf32>
    %59 = vector.extract_strided_slice %4 {offsets = [0, 2, 0, 0], sizes = [1, 16, 16, 128], strides = [1, 1, 1, 1]} : vector<1x18x16x128xf32> to vector<1x16x16x128xf32>
    %60 = vector.broadcast %58 : vector<1x1x1x128xf32> to vector<1x16x16x128xf32>
    %61 = arith.mulf %59, %60 : vector<1x16x16x128xf32>
    %62 = arith.addf %55, %61 : vector<1x16x16x128xf32>
    %63 = vector.extract_strided_slice %2 {offsets = [8, 0], sizes = [1, 128], strides = [1, 1]} : vector<9x128xf32> to vector<1x128xf32>
    %64 = vector.shape_cast %63 : vector<1x128xf32> to vector<128xf32>
    %65 = vector.shape_cast %64 : vector<128xf32> to vector<1x1x1x128xf32>
    %66 = vector.extract_strided_slice %5 {offsets = [0, 2, 0, 0], sizes = [1, 16, 16, 128], strides = [1, 1, 1, 1]} : vector<1x18x16x128xf32> to vector<1x16x16x128xf32>
    %67 = vector.broadcast %65 : vector<1x1x1x128xf32> to vector<1x16x16x128xf32>
    %68 = arith.mulf %66, %67 : vector<1x16x16x128xf32>
    %69 = arith.addf %62, %68 : vector<1x16x16x128xf32>
    %c0_5 = arith.constant 0 : index
    %c0_6 = arith.constant 0 : index
    %70 = vector.load %arg4[%c0_5, %c0_6] : memref<1x128xf32, #tpu.memory_space<vmem>>, vector<1x128xf32>
    %71 = vector.shape_cast %70 : vector<1x128xf32> to vector<1x1x1x128xf32>
    %72 = vector.broadcast %71 : vector<1x1x1x128xf32> to vector<1x16x16x128xf32>
    %73 = arith.addf %69, %72 : vector<1x16x16x128xf32>
    %74 = arith.truncf %73 : vector<1x16x16x128xf32> to vector<1x16x16x128xbf16>
    %c0_7 = arith.constant 0 : index
    %c0_8 = arith.constant 0 : index
    %c0_9 = arith.constant 0 : index
    %c0_10 = arith.constant 0 : index
    %75 = vector.load %arg5[%c0_7, %c0_8, %c0_9, %c0_10] : memref<1x16x16x128xbf16, #tpu.memory_space<vmem>>, vector<1x16x16x128xbf16>
    tpu.vector_store %arg5[%c0_7, %c0_8, %c0_9, %c0_10], %74 {strides = array<i32>} : memref<1x16x16x128xbf16, #tpu.memory_space<vmem>>, vector<1x16x16x128xbf16>,
    return
  }
  func.func @transform_0(%arg0: i32, %arg1: i32) -> (i32, i32, i32, i32) {
    %c0_i32 = arith.constant 0 : i32
    %c0_i32_0 = arith.constant 0 : i32
    %c0_i32_1 = arith.constant 0 : i32
    return %arg0, %c0_i32, %c0_i32_0, %arg1 : i32, i32, i32, i32
  }
  func.func @transform_1(%arg0: i32, %arg1: i32) -> (i32, i32) {
    %c0_i32 = arith.constant 0 : i32
    %c0_i32_0 = arith.constant 0 : i32
    return %c0_i32, %arg1 : i32, i32
  }
  func.func @transform_2(%arg0: i32, %arg1: i32) -> (i32, i32) {
    %c0_i32 = arith.constant 0 : i32
    %c0_i32_0 = arith.constant 0 : i32
    return %c0_i32, %arg1 : i32, i32
  }
  func.func @transform_3(%arg0: i32, %arg1: i32) -> (i32, i32, i32, i32) {
    %c0_i32 = arith.constant 0 : i32
    %c0_i32_0 = arith.constant 0 : i32
    %c0_i32_1 = arith.constant 0 : i32
    return %arg0, %c0_i32, %c0_i32_0, %arg1 : i32, i32, i32, i32
  }
}

module attributes {stable_mosaic.version = 11 : i64} {
  func.func @_pw_kernel(%arg0: i32, %arg1: memref<256x128xbf16, #tpu.memory_space<vmem>>, %arg2: memref<128x128xbf16, #tpu.memory_space<vmem>>, %arg3: memref<1x128xf32, #tpu.memory_space<vmem>>, %arg4: memref<256x128xbf16, #tpu.memory_space<vmem>>) attributes {dimension_semantics = [#tpu.dimension_semantics<parallel>], iteration_bounds = array<i64: 2>, scalar_prefetch = 0 : i64, scratch_operands = 0 : i64, tpu.core_type = #tpu.core_type<tc>, window_params = [{transform_indices = @transform_0, window_bounds = array<i64: 256, 128>}, {pipeline_mode = #tpu.pipeline_mode<synchronous>, transform_indices = @transform_1, window_bounds = array<i64: 128, 128>}, {pipeline_mode = #tpu.pipeline_mode<synchronous>, transform_indices = @transform_2, window_bounds = array<i64: 1, 128>}, {transform_indices = @transform_3, window_bounds = array<i64: 256, 128>}]} {
    %c0 = arith.constant 0 : index
    %c0_0 = arith.constant 0 : index
    %0 = vector.load %arg1[%c0, %c0_0] : memref<256x128xbf16, #tpu.memory_space<vmem>>, vector<256x128xbf16>
    %c0_1 = arith.constant 0 : index
    %c0_2 = arith.constant 0 : index
    %1 = vector.load %arg2[%c0_1, %c0_2] : memref<128x128xbf16, #tpu.memory_space<vmem>>, vector<128x128xbf16>
    %cst = arith.constant dense<0.000000e+00> : vector<256x128xf32>
    %2 = tpu.matmul %0, %1, %cst {dimension_numbers = #tpu.dot_dimension_numbers<[1], [0], [0], [1], [0, 0, 1, 1], [], []>} : vector<256x128xbf16>, vector<128x128xbf16>, vector<256x128xf32> -> vector<256x128xf32>
    %c0_3 = arith.constant 0 : index
    %c0_4 = arith.constant 0 : index
    %3 = vector.load %arg3[%c0_3, %c0_4] : memref<1x128xf32, #tpu.memory_space<vmem>>, vector<1x128xf32>
    %4 = vector.broadcast %3 : vector<1x128xf32> to vector<256x128xf32>
    %5 = arith.addf %2, %4 : vector<256x128xf32>
    %cst_5 = arith.constant 0.000000e+00 : f32
    %6 = vector.broadcast %cst_5 : f32 to vector<256x128xf32>
    %7 = arith.cmpf oge, %5, %6 : vector<256x128xf32>
    %cst_6 = arith.constant 0.00999999977 : f32
    %8 = vector.broadcast %cst_6 : f32 to vector<256x128xf32>
    %9 = arith.mulf %5, %8 : vector<256x128xf32>
    %10 = arith.select %7, %5, %9 : vector<256x128xi1>, vector<256x128xf32>
    %11 = arith.truncf %10 : vector<256x128xf32> to vector<256x128xbf16>
    %c0_7 = arith.constant 0 : index
    %c0_8 = arith.constant 0 : index
    %12 = vector.load %arg4[%c0_7, %c0_8] : memref<256x128xbf16, #tpu.memory_space<vmem>>, vector<256x128xbf16>
    tpu.vector_store %arg4[%c0_7, %c0_8], %11 {strides = array<i32>} : memref<256x128xbf16, #tpu.memory_space<vmem>>, vector<256x128xbf16>,
    return
  }
  func.func @transform_0(%arg0: i32) -> (i32, i32) {
    %c0_i32 = arith.constant 0 : i32
    %c0_i32_0 = arith.constant 0 : i32
    return %arg0, %c0_i32 : i32, i32
  }
  func.func @transform_1(%arg0: i32) -> (i32, i32) {
    %c0_i32 = arith.constant 0 : i32
    %c0_i32_0 = arith.constant 0 : i32
    %c0_i32_1 = arith.constant 0 : i32
    return %c0_i32, %c0_i32_0 : i32, i32
  }
  func.func @transform_2(%arg0: i32) -> (i32, i32) {
    %c0_i32 = arith.constant 0 : i32
    %c0_i32_0 = arith.constant 0 : i32
    %c0_i32_1 = arith.constant 0 : i32
    return %c0_i32, %c0_i32_0 : i32, i32
  }
  func.func @transform_3(%arg0: i32) -> (i32, i32) {
    %c0_i32 = arith.constant 0 : i32
    %c0_i32_0 = arith.constant 0 : i32
    return %arg0, %c0_i32 : i32, i32
  }
}

module attributes {stable_mosaic.version = 11 : i64} {
  func.func @_pw_res_kernel(%arg0: i32, %arg1: memref<256x128xbf16, #tpu.memory_space<vmem>>, %arg2: memref<128x128xbf16, #tpu.memory_space<vmem>>, %arg3: memref<1x128xf32, #tpu.memory_space<vmem>>, %arg4: memref<256x128xbf16, #tpu.memory_space<vmem>>, %arg5: memref<256x128xbf16, #tpu.memory_space<vmem>>) attributes {dimension_semantics = [#tpu.dimension_semantics<parallel>], iteration_bounds = array<i64: 2>, scalar_prefetch = 0 : i64, scratch_operands = 0 : i64, tpu.core_type = #tpu.core_type<tc>, window_params = [{transform_indices = @transform_0, window_bounds = array<i64: 256, 128>}, {pipeline_mode = #tpu.pipeline_mode<synchronous>, transform_indices = @transform_1, window_bounds = array<i64: 128, 128>}, {pipeline_mode = #tpu.pipeline_mode<synchronous>, transform_indices = @transform_2, window_bounds = array<i64: 1, 128>}, {transform_indices = @transform_3, window_bounds = array<i64: 256, 128>}, {transform_indices = @transform_4, window_bounds = array<i64: 256, 128>}]} {
    %c0 = arith.constant 0 : index
    %c0_0 = arith.constant 0 : index
    %0 = vector.load %arg1[%c0, %c0_0] : memref<256x128xbf16, #tpu.memory_space<vmem>>, vector<256x128xbf16>
    %c0_1 = arith.constant 0 : index
    %c0_2 = arith.constant 0 : index
    %1 = vector.load %arg2[%c0_1, %c0_2] : memref<128x128xbf16, #tpu.memory_space<vmem>>, vector<128x128xbf16>
    %cst = arith.constant dense<0.000000e+00> : vector<256x128xf32>
    %2 = tpu.matmul %0, %1, %cst {dimension_numbers = #tpu.dot_dimension_numbers<[1], [0], [0], [1], [0, 0, 1, 1], [], []>} : vector<256x128xbf16>, vector<128x128xbf16>, vector<256x128xf32> -> vector<256x128xf32>
    %c0_3 = arith.constant 0 : index
    %c0_4 = arith.constant 0 : index
    %3 = vector.load %arg3[%c0_3, %c0_4] : memref<1x128xf32, #tpu.memory_space<vmem>>, vector<1x128xf32>
    %4 = vector.broadcast %3 : vector<1x128xf32> to vector<256x128xf32>
    %5 = arith.addf %2, %4 : vector<256x128xf32>
    %c0_5 = arith.constant 0 : index
    %c0_6 = arith.constant 0 : index
    %6 = vector.load %arg4[%c0_5, %c0_6] : memref<256x128xbf16, #tpu.memory_space<vmem>>, vector<256x128xbf16>
    %7 = arith.extf %6 : vector<256x128xbf16> to vector<256x128xf32>
    %8 = arith.addf %5, %7 : vector<256x128xf32>
    %9 = arith.truncf %8 : vector<256x128xf32> to vector<256x128xbf16>
    %c0_7 = arith.constant 0 : index
    %c0_8 = arith.constant 0 : index
    %10 = vector.load %arg5[%c0_7, %c0_8] : memref<256x128xbf16, #tpu.memory_space<vmem>>, vector<256x128xbf16>
    tpu.vector_store %arg5[%c0_7, %c0_8], %9 {strides = array<i32>} : memref<256x128xbf16, #tpu.memory_space<vmem>>, vector<256x128xbf16>,
    return
  }
  func.func @transform_0(%arg0: i32) -> (i32, i32) {
    %c0_i32 = arith.constant 0 : i32
    %c0_i32_0 = arith.constant 0 : i32
    return %arg0, %c0_i32 : i32, i32
  }
  func.func @transform_1(%arg0: i32) -> (i32, i32) {
    %c0_i32 = arith.constant 0 : i32
    %c0_i32_0 = arith.constant 0 : i32
    %c0_i32_1 = arith.constant 0 : i32
    return %c0_i32, %c0_i32_0 : i32, i32
  }
  func.func @transform_2(%arg0: i32) -> (i32, i32) {
    %c0_i32 = arith.constant 0 : i32
    %c0_i32_0 = arith.constant 0 : i32
    %c0_i32_1 = arith.constant 0 : i32
    return %c0_i32, %c0_i32_0 : i32, i32
  }
  func.func @transform_3(%arg0: i32) -> (i32, i32) {
    %c0_i32 = arith.constant 0 : i32
    %c0_i32_0 = arith.constant 0 : i32
    return %arg0, %c0_i32 : i32, i32
  }
  func.func @transform_4(%arg0: i32) -> (i32, i32) {
    %c0_i32 = arith.constant 0 : i32
    %c0_i32_0 = arith.constant 0 : i32
    return %arg0, %c0_i32 : i32, i32
  }
}

module attributes {stable_mosaic.version = 11 : i64} {
  func.func @_ffn_kernel(%arg0: i32, %arg1: memref<256x128xbf16, #tpu.memory_space<vmem>>, %arg2: memref<128x512xbf16, #tpu.memory_space<vmem>>, %arg3: memref<1x512xf32, #tpu.memory_space<vmem>>, %arg4: memref<256x128xbf16, #tpu.memory_space<vmem>>, %arg5: memref<1x128xf32, #tpu.memory_space<vmem>>, %arg6: memref<256x128xf32, #tpu.memory_space<vmem>>) attributes {dimension_semantics = [#tpu.dimension_semantics<parallel>], iteration_bounds = array<i64: 2>, scalar_prefetch = 0 : i64, scratch_operands = 0 : i64, tpu.core_type = #tpu.core_type<tc>, window_params = [{transform_indices = @transform_0, window_bounds = array<i64: 256, 128>}, {pipeline_mode = #tpu.pipeline_mode<synchronous>, transform_indices = @transform_1, window_bounds = array<i64: 128, 512>}, {pipeline_mode = #tpu.pipeline_mode<synchronous>, transform_indices = @transform_2, window_bounds = array<i64: 1, 512>}, {pipeline_mode = #tpu.pipeline_mode<synchronous>, transform_indices = @transform_3, window_bounds = array<i64: 256, 128>}, {pipeline_mode = #tpu.pipeline_mode<synchronous>, transform_indices = @transform_4, window_bounds = array<i64: 1, 128>}, {transform_indices = @transform_5, window_bounds = array<i64: 256, 128>}]} {
    %c0 = arith.constant 0 : index
    %c0_0 = arith.constant 0 : index
    %0 = vector.load %arg1[%c0, %c0_0] : memref<256x128xbf16, #tpu.memory_space<vmem>>, vector<256x128xbf16>
    %c0_1 = arith.constant 0 : index
    %c0_2 = arith.constant 0 : index
    %1 = vector.load %arg2[%c0_1, %c0_2] : memref<128x512xbf16, #tpu.memory_space<vmem>>, vector<128x512xbf16>
    %cst = arith.constant dense<0.000000e+00> : vector<256x512xf32>
    %2 = tpu.matmul %0, %1, %cst {dimension_numbers = #tpu.dot_dimension_numbers<[1], [0], [0], [1], [0, 0, 1, 1], [], []>} : vector<256x128xbf16>, vector<128x512xbf16>, vector<256x512xf32> -> vector<256x512xf32>
    %c0_3 = arith.constant 0 : index
    %c0_4 = arith.constant 0 : index
    %3 = vector.load %arg3[%c0_3, %c0_4] : memref<1x512xf32, #tpu.memory_space<vmem>>, vector<1x512xf32>
    %4 = vector.broadcast %3 : vector<1x512xf32> to vector<256x512xf32>
    %5 = arith.addf %2, %4 : vector<256x512xf32>
    %6 = vector.extract_strided_slice %5 {offsets = [0, 0], sizes = [256, 256], strides = [1, 1]} : vector<256x512xf32> to vector<256x256xf32>
    %7 = vector.extract_strided_slice %5 {offsets = [0, 256], sizes = [256, 256], strides = [1, 1]} : vector<256x512xf32> to vector<256x256xf32>
    %cst_5 = arith.constant 0.000000e+00 : f32
    %8 = vector.broadcast %cst_5 : f32 to vector<256x256xf32>
    %9 = arith.maximumf %7, %8 : vector<256x256xf32>
    %10 = arith.mulf %6, %9 : vector<256x256xf32>
    %11 = arith.truncf %10 : vector<256x256xf32> to vector<256x256xbf16>
    %c0_6 = arith.constant 0 : index
    %c0_7 = arith.constant 0 : index
    %12 = vector.load %arg4[%c0_6, %c0_7] : memref<256x128xbf16, #tpu.memory_space<vmem>>, vector<256x128xbf16>
    %cst_8 = arith.constant dense<0.000000e+00> : vector<256x128xf32>
    %13 = tpu.matmul %11, %12, %cst_8 {dimension_numbers = #tpu.dot_dimension_numbers<[1], [0], [0], [1], [0, 0, 1, 1], [], []>} : vector<256x256xbf16>, vector<256x128xbf16>, vector<256x128xf32> -> vector<256x128xf32>
    %c0_9 = arith.constant 0 : index
    %c0_10 = arith.constant 0 : index
    %14 = vector.load %arg5[%c0_9, %c0_10] : memref<1x128xf32, #tpu.memory_space<vmem>>, vector<1x128xf32>
    %15 = vector.broadcast %14 : vector<1x128xf32> to vector<256x128xf32>
    %16 = arith.addf %13, %15 : vector<256x128xf32>
    %17 = arith.extf %0 : vector<256x128xbf16> to vector<256x128xf32>
    %18 = arith.addf %16, %17 : vector<256x128xf32>
    %c0_11 = arith.constant 0 : index
    %c0_12 = arith.constant 0 : index
    %19 = vector.load %arg6[%c0_11, %c0_12] : memref<256x128xf32, #tpu.memory_space<vmem>>, vector<256x128xf32>
    tpu.vector_store %arg6[%c0_11, %c0_12], %18 {strides = array<i32>} : memref<256x128xf32, #tpu.memory_space<vmem>>, vector<256x128xf32>,
    return
  }
  func.func @transform_0(%arg0: i32) -> (i32, i32) {
    %c0_i32 = arith.constant 0 : i32
    %c0_i32_0 = arith.constant 0 : i32
    return %arg0, %c0_i32 : i32, i32
  }
  func.func @transform_1(%arg0: i32) -> (i32, i32) {
    %c0_i32 = arith.constant 0 : i32
    %c0_i32_0 = arith.constant 0 : i32
    %c0_i32_1 = arith.constant 0 : i32
    return %c0_i32, %c0_i32_0 : i32, i32
  }
  func.func @transform_2(%arg0: i32) -> (i32, i32) {
    %c0_i32 = arith.constant 0 : i32
    %c0_i32_0 = arith.constant 0 : i32
    %c0_i32_1 = arith.constant 0 : i32
    return %c0_i32, %c0_i32_0 : i32, i32
  }
  func.func @transform_3(%arg0: i32) -> (i32, i32) {
    %c0_i32 = arith.constant 0 : i32
    %c0_i32_0 = arith.constant 0 : i32
    %c0_i32_1 = arith.constant 0 : i32
    return %c0_i32, %c0_i32_0 : i32, i32
  }
  func.func @transform_4(%arg0: i32) -> (i32, i32) {
    %c0_i32 = arith.constant 0 : i32
    %c0_i32_0 = arith.constant 0 : i32
    %c0_i32_1 = arith.constant 0 : i32
    return %c0_i32, %c0_i32_0 : i32, i32
  }
  func.func @transform_5(%arg0: i32) -> (i32, i32) {
    %c0_i32 = arith.constant 0 : i32
    %c0_i32_0 = arith.constant 0 : i32
    return %arg0, %c0_i32 : i32, i32
  }
}

</mosaic_0001>

<llo_original>
// kernel: spatial_prior_adaptor3_forward.4
$region0: #{spatial_prior_adaptor3_forward.4}
  #allocation0 [shape = 'u32[]', space=smem, size = 0x4, offset = 0x4, fixed_abs, tag = 'smem constant byte address 0x4 - core index']
  #allocation1 [shape = 'u32[144,128]{1,0:T(1,128)}', space=vmem, size = 0x12000, scoped, tag = 'internal scratch']
  %s0 = inlined_call_operand.vmem [shape: bf16[512,128], index: 0, kind: input, shape index: {}]
  %s1 = inlined_call_operand.vmem [shape: bf16[128,128], index: 1, kind: input, shape index: {}]
  %s2 = inlined_call_operand.vmem [shape: f32[1,128], index: 2, kind: input, shape index: {}]
  %s3 = inlined_call_operand.vmem [shape: bf16[512,128], index: 3, kind: output, shape index: {}]
  %s4 = sld [smem:[#allocation0]]
  $region45: #{spatial_prior_adaptor3_forward.4} parent=0
    _
  %s6 = ssub.s32 1, %s4
  %s7 = scalar_select 0, %s6, %s4
  loop: start=0, step=1, limit=4
  $region2: #{spatial_prior_adaptor3_forward.4} parent=0 // loop_pre_header
    _
  $region3: #{spatial_prior_adaptor3_forward.4} parent=0 // loop_header
    %s9 = sphi 0, %s13
    %p10 = scmp.ge.s32.totalorder %s9, 4
    %s19 = sphi 0, %s21
    %s22 = sphi 0, %s19
    %s23 = sphi 0, %s22
    %s39 = sphi 0, %s23
    %s43 = sphi 0, %s43
    %s45 = sphi 0, %s43
    %s46 = sphi 0, %s45
    %s60 = sphi 0, %s46
    %s64 = sphi 0, %s64
    %s66 = sphi 0, %s64
    %s67 = sphi 0, %s66
    %s81 = sphi 0, %s67
    %s87 = sphi 0, %s89
    %s90 = sphi 0, %s87
    %s91 = sphi 0, %s90
    %s107 = sphi 0, %s91
  $region4: #{spatial_prior_adaptor3_forward.4} parent=0 // loop_header_branch
    %12 = sbr.rel (%p10) target = $region8
  $region5: #{spatial_prior_adaptor3_forward.4} parent=0 // loop_body
    %s14 = ssub.s32 %s9, 1
    %s15 = ssub.s32 %s9, 2
    %s16 = sadd.s32 %s9, 1
    %s17 = ssub.s32 %s9, %s16
    %p18 = scmp.eq.s32.totalorder %s17, 0
    %s20 = sadd.s32 %s19, 1
    %s21 = scalar_select %p18, %s19, %s20
    %p24 = pneg %p18
    %p25 = scmp.eq.s32.totalorder %s9, 1
    %p26 = por %p24, %p25
    %p27 = scmp.ne.s32.totalorder %s19, %s22
    %p28 = scmp.eq.s32.totalorder %s9, 0
    %p29 = por %p27, %p28
    %p30 = scmp.ne.s32.totalorder %s19, %s22
    %p31 = scmp.eq.s32.totalorder %s14, 1
    %p32 = por %p30, %p31
    %p33 = scmp.ne.s32.totalorder %s22, %s23
    %p34 = scmp.eq.s32.totalorder %s14, 0
    %p35 = por %p33, %p34
    %p36 = scmp.ne.s32.totalorder %s22, %s23
    %p37 = scmp.eq.s32.totalorder %s15, 1
    %p38 = por %p36, %p37
    %p40 = scmp.ne.s32.totalorder %s23, %s39
    %p41 = scmp.eq.s32.totalorder %s15, 0
    %p42 = por %p40, %p41
    %s44 = sadd.s32 %s43, 1
    %p47 = scmp.eq.s32.totalorder %s9, 1
    %p48 = scmp.ne.s32.totalorder %s43, %s45
    %p49 = scmp.eq.s32.totalorder %s9, 0
    %p50 = por %p48, %p49
    %p51 = scmp.ne.s32.totalorder %s43, %s45
    %p52 = scmp.eq.s32.totalorder %s14, 1
    %p53 = por %p51, %p52
    %p54 = scmp.ne.s32.totalorder %s45, %s46
    %p55 = scmp.eq.s32.totalorder %s14, 0
    %p56 = por %p54, %p55
    %p57 = scmp.ne.s32.totalorder %s45, %s46
    %p58 = scmp.eq.s32.totalorder %s15, 1
    %p59 = por %p57, %p58
    %p61 = scmp.ne.s32.totalorder %s46, %s60
    %p62 = scmp.eq.s32.totalorder %s15, 0
    %p63 = por %p61, %p62
    %s65 = sadd.s32 %s64, 1
    %p68 = scmp.eq.s32.totalorder %s9, 1
    %p69 = scmp.ne.s32.totalorder %s64, %s66
    %p70 = scmp.eq.s32.totalorder %s9, 0
    %p71 = por %p69, %p70
    %p72 = scmp.ne.s32.totalorder %s64, %s66
    %p73 = scmp.eq.s32.totalorder %s14, 1
    %p74 = por %p72, %p73
    %p75 = scmp.ne.s32.totalorder %s66, %s67
    %p76 = scmp.eq.s32.totalorder %s14, 0
    %p77 = por %p75, %p76
    %p78 = scmp.ne.s32.totalorder %s66, %s67
    %p79 = scmp.eq.s32.totalorder %s15, 1
    %p80 = por %p78, %p79
    %p82 = scmp.ne.s32.totalorder %s67, %s81
    %p83 = scmp.eq.s32.totalorder %s15, 0
    %p84 = por %p82, %p83
    %s85 = ssub.s32 %s9, %s16
    %p86 = scmp.eq.s32.totalorder %s85, 0
    %s88 = sadd.s32 %s87, 1
    %s89 = scalar_select %p86, %s87, %s88
    %p92 = pneg %p86
    %p93 = scmp.eq.s32.totalorder %s9, 1
    %p94 = por %p92, %p93
    %p95 = scmp.ne.s32.totalorder %s87, %s90
    %p96 = scmp.eq.s32.totalorder %s9, 0
    %p97 = por %p95, %p96
    %p98 = scmp.ne.s32.totalorder %s87, %s90
    %p99 = scmp.eq.s32.totalorder %s14, 1
    %p100 = por %p98, %p99
    %p101 = scmp.ne.s32.totalorder %s90, %s91
    %p102 = scmp.eq.s32.totalorder %s14, 0
    %p103 = por %p101, %p102
    %p104 = scmp.ne.s32.totalorder %s90, %s91
    %p105 = scmp.eq.s32.totalorder %s15, 1
    %p106 = por %p104, %p105
    %p108 = scmp.ne.s32.totalorder %s91, %s107
    %p109 = scmp.eq.s32.totalorder %s15, 0
    %p110 = por %p108, %p109
    %p111 = scmp.le.s32.totalorder 1, %s9
    %p112 = scmp.lt.s32.totalorder %s9, 3
    %p113 = pnand %p111, %p112
    %p114 = pneg %p113
    // Predicated region
    $region9: #{spatial_prior_adaptor3_forward.4} parent=5 // pred_check
      _
    $region10: #{spatial_prior_adaptor3_forward.4} parent=5 // pred_check_branch
      %116 = sbr.rel (%p113) target = $region12
    $region11: #{spatial_prior_adaptor3_forward.4} parent=5 // pred_region
      %s117 = ssub.s32 %s9, 1
      // Predicated region
      $region13: #{spatial_prior_adaptor3_forward.4} parent=11 // pred_check
        %p118 = pneg %p56
      $region14: #{spatial_prior_adaptor3_forward.4} parent=11 // pred_check_branch
        %120 = sbr.rel (%p118) target = $region16
      $region15: #{spatial_prior_adaptor3_forward.4} parent=11 // pred_region
        _
      $region16: #{spatial_prior_adaptor3_forward.4} parent=11 // pred_fallthru
        _
      // Predicated region
      $region17: #{spatial_prior_adaptor3_forward.4} parent=11 // pred_check
        %p121 = pneg %p77
      $region18: #{spatial_prior_adaptor3_forward.4} parent=11 // pred_check_branch
        %123 = sbr.rel (%p121) target = $region20
      $region19: #{spatial_prior_adaptor3_forward.4} parent=11 // pred_region
        _
      $region20: #{spatial_prior_adaptor3_forward.4} parent=11 // pred_fallthru
        _
    $region12: #{spatial_prior_adaptor3_forward.4} parent=5 // pred_fallthru
      _
    %p124 = scmp.lt.s32.totalorder %s9, 2
    // Predicated region
    $region21: #{spatial_prior_adaptor3_forward.4} parent=5 // pred_check
      %p125 = pneg %p124
    $region22: #{spatial_prior_adaptor3_forward.4} parent=5 // pred_check_branch
      %127 = sbr.rel (%p125) target = $region24
    $region23: #{spatial_prior_adaptor3_forward.4} parent=5 // pred_region
      // Predicated region
      $region25: #{spatial_prior_adaptor3_forward.4} parent=23 // pred_check
        %p128 = pneg %p29
      $region26: #{spatial_prior_adaptor3_forward.4} parent=23 // pred_check_branch
        %130 = sbr.rel (%p128) target = $region28
      $region27: #{spatial_prior_adaptor3_forward.4} parent=23 // pred_region
        %s131 = smul.u32 32, %s9
        %p132 = scmp.lt.s32.totalorder %s131, 63
        %s133 = scalar_select %p132, %s131, 63
        %s134 = smul.addr %s133, 4
        %s135 = scalar_lea.vmem %s0, %s134
        %s136 = smul.u32 32, %s9
      $region28: #{spatial_prior_adaptor3_forward.4} parent=23 // pred_fallthru
        _
    $region24: #{spatial_prior_adaptor3_forward.4} parent=5 // pred_fallthru
      _
    %p137 = scmp.le.s32.totalorder 1, %s9
    %p138 = scmp.lt.s32.totalorder %s9, 3
    %p139 = pnand %p137, %p138
    %p140 = pneg %p139
    // Predicated region
    $region29: #{spatial_prior_adaptor3_forward.4} parent=5 // pred_check
      _
    $region30: #{spatial_prior_adaptor3_forward.4} parent=5 // pred_check_branch
      %142 = sbr.rel (%p139) target = $region32
    $region31: #{spatial_prior_adaptor3_forward.4} parent=5 // pred_region
      %s143 = ssub.s32 %s9, 1
      %s144 = smul.u32 32, %s14
      %p145 = scmp.lt.s32.totalorder %s144, 63
      %s146 = scalar_select %p145, %s144, 63
      %s147 = smul.addr %s146, 4
      %s148 = scalar_lea.vmem %s0, %s147
      %p149 = pneg %p35
      %p150 = pneg %p32
      %p151 = pneg %p56
      %p152 = pneg %p53
      %p153 = pneg %p77
      %p154 = pneg %p74
      %p155 = pneg %p103
      %p156 = pneg %p100
      %s157 = smul.u32 32, %s14
      %p158 = scmp.lt.s32.totalorder %s157, 63
      %s159 = scalar_select %p158, %s157, 63
      %s160 = smul.addr %s159, 4
      %s161 = scalar_lea.vmem %s3, %s160
      %s162 = smul.u32 32, %s14
      %p163 = scmp.lt.s32.totalorder %s162, 63
      %s164 = scalar_select %p163, %s162, 63
      %s165 = smul.addr %s164, 4
      %s166 = scalar_lea.vmem %s0, %s165
      %s167 = smul.u32 32, %s14
      %s168 = smul.u32 32, %s14
      %p169 = scmp.lt.s32.totalorder %s168, 63
      %s170 = scalar_select %p169, %s168, 63
      %s171 = smul.addr %s170, 4
      %s172 = scalar_lea.vmem %s3, %s171
      %s173 = smul.u32 32, %s14
      %v175 = vld [vmem:[%s166] sm:$0xf]
      %v176 = vld [vmem:[%s166 + $0x4] sm:$0xf]
      %v177 = vld [vmem:[%s166 + $0x8] sm:$0xf]
      %v178 = vld [vmem:[%s166 + $0xc] sm:$0xf]
      %v179 = vld [vmem:[%s166 + $0x10] sm:$0xf]
      %v180 = vld [vmem:[%s166 + $0x14] sm:$0xf]
      %v181 = vld [vmem:[%s166 + $0x18] sm:$0xf]
      %v182 = vld [vmem:[%s166 + $0x1c] sm:$0xf]
      %v183 = vld [vmem:[%s166 + $0x20] sm:$0xf]
      %v184 = vld [vmem:[%s166 + $0x24] sm:$0xf]
      %v185 = vld [vmem:[%s166 + $0x28] sm:$0xf]
      %v186 = vld [vmem:[%s166 + $0x2c] sm:$0xf]
      %v187 = vld [vmem:[%s166 + $0x30] sm:$0xf]
      %v188 = vld [vmem:[%s166 + $0x34] sm:$0xf]
      %v189 = vld [vmem:[%s166 + $0x38] sm:$0xf]
      %v190 = vld [vmem:[%s166 + $0x3c] sm:$0xf]
      %v191 = vld [vmem:[%s166 + $0x40] sm:$0xf]
      %v192 = vld [vmem:[%s166 + $0x44] sm:$0xf]
      %v193 = vld [vmem:[%s166 + $0x48] sm:$0xf]
      %v194 = vld [vmem:[%s166 + $0x4c] sm:$0xf]
      %v195 = vld [vmem:[%s166 + $0x50] sm:$0xf]
      %v196 = vld [vmem:[%s166 + $0x54] sm:$0xf]
      %v197 = vld [vmem:[%s166 + $0x58] sm:$0xf]
      %v198 = vld [vmem:[%s166 + $0x5c] sm:$0xf]
      %v199 = vld [vmem:[%s166 + $0x60] sm:$0xf]
      %v200 = vld [vmem:[%s166 + $0x64] sm:$0xf]
      %v201 = vld [vmem:[%s166 + $0x68] sm:$0xf]
      %v202 = vld [vmem:[%s166 + $0x6c] sm:$0xf]
      %v203 = vld [vmem:[%s166 + $0x70] sm:$0xf]
      %v204 = vld [vmem:[%s166 + $0x74] sm:$0xf]
      %v205 = vld [vmem:[%s166 + $0x78] sm:$0xf]
      %v206 = vld [vmem:[%s166 + $0x7c] sm:$0xf]
      %v207 = vld [vmem:[%s1] sm:$0xf]
      %v208 = vld [vmem:[%s1 + $0x4] sm:$0xf]
      %v209 = vld [vmem:[%s1 + $0x8] sm:$0xf]
      %v210 = vld [vmem:[%s1 + $0xc] sm:$0xf]
      %v211 = vld [vmem:[%s1 + $0x10] sm:$0xf]
      %v212 = vld [vmem:[%s1 + $0x14] sm:$0xf]
      %v213 = vld [vmem:[%s1 + $0x18] sm:$0xf]
      %v214 = vld [vmem:[%s1 + $0x1c] sm:$0xf]
      %v215 = vld [vmem:[%s1 + $0x20] sm:$0xf]
      %v216 = vld [vmem:[%s1 + $0x24] sm:$0xf]
      %v217 = vld [vmem:[%s1 + $0x28] sm:$0xf]
      %v218 = vld [vmem:[%s1 + $0x2c] sm:$0xf]
      %v219 = vld [vmem:[%s1 + $0x30] sm:$0xf]
      %v220 = vld [vmem:[%s1 + $0x34] sm:$0xf]
      %v221 = vld [vmem:[%s1 + $0x38] sm:$0xf]
      %v222 = vld [vmem:[%s1 + $0x3c] sm:$0xf]
      %v223 = vld [vmem:[%s2] sm:$0x1]
      %v225 = vlaneseq
      %v226 = vshrl.u32 %v225, 7
      %v227 = vsub.s32 0, %v226
      %v228 = vrot.slane %v223, %v227
      %v262 = vunpack.c.l.b16 %v175
      %v263 = vunpack.c.l.b16 %v176
      %v264 = vunpack.c.l.b16 %v177
      %v265 = vunpack.c.l.b16 %v178
      %v266 = vunpack.c.l.b16 %v179
      %v267 = vunpack.c.l.b16 %v180
      %v268 = vunpack.c.l.b16 %v181
      %v269 = vunpack.c.l.b16 %v182
      %v270 = vunpack.c.l.b16 %v183
      %v271 = vunpack.c.l.b16 %v184
      %v272 = vunpack.c.l.b16 %v185
      %v273 = vunpack.c.l.b16 %v186
      %v274 = vunpack.c.l.b16 %v187
      %v275 = vunpack.c.l.b16 %v188
      %v276 = vunpack.c.l.b16 %v189
      %v277 = vunpack.c.l.b16 %v190
      %v278 = vunpack.c.l.b16 %v191
      %v279 = vunpack.c.l.b16 %v192
      %v280 = vunpack.c.l.b16 %v193
      %v281 = vunpack.c.l.b16 %v194
      %v282 = vunpack.c.l.b16 %v195
      %v283 = vunpack.c.l.b16 %v196
      %v284 = vunpack.c.l.b16 %v197
      %v285 = vunpack.c.l.b16 %v198
      %v286 = vunpack.c.l.b16 %v199
      %v287 = vunpack.c.l.b16 %v200
      %v288 = vunpack.c.l.b16 %v201
      %v289 = vunpack.c.l.b16 %v202
      %v290 = vunpack.c.l.b16 %v203
      %v291 = vunpack.c.l.b16 %v204
      %v292 = vunpack.c.l.b16 %v205
      %v293 = vunpack.c.l.b16 %v206
      %v294 = vpack.c.b16 %v263, %v262
      %v295 = vpack.c.b16 %v265, %v264
      %v296 = vpack.c.b16 %v267, %v266
      %v297 = vpack.c.b16 %v269, %v268
      %v298 = vpack.c.b16 %v271, %v270
      %v299 = vpack.c.b16 %v273, %v272
      %v300 = vpack.c.b16 %v275, %v274
      %v301 = vpack.c.b16 %v277, %v276
      %v302 = vpack.c.b16 %v279, %v278
      %v303 = vpack.c.b16 %v281, %v280
      %v304 = vpack.c.b16 %v283, %v282
      %v305 = vpack.c.b16 %v285, %v284
      %v306 = vpack.c.b16 %v287, %v286
      %v307 = vpack.c.b16 %v289, %v288
      %v308 = vpack.c.b16 %v291, %v290
      %v309 = vpack.c.b16 %v293, %v292
      %v342 = vunpack.c.l.b16 %v207
      %v343 = vunpack.c.l.b16 %v208
      %v344 = vunpack.c.l.b16 %v209
      %v345 = vunpack.c.l.b16 %v210
      %v346 = vunpack.c.l.b16 %v211
      %v347 = vunpack.c.l.b16 %v212
      %v348 = vunpack.c.l.b16 %v213
      %v349 = vunpack.c.l.b16 %v214
      %v350 = vunpack.c.l.b16 %v215
      %v351 = vunpack.c.l.b16 %v216
      %v352 = vunpack.c.l.b16 %v217
      %v353 = vunpack.c.l.b16 %v218
      %v354 = vunpack.c.l.b16 %v219
      %v355 = vunpack.c.l.b16 %v220
      %v356 = vunpack.c.l.b16 %v221
      %v357 = vunpack.c.l.b16 %v222
      %v358 = vpack.c.b16 %v343, %v342
      %v359 = vpack.c.b16 %v345, %v344
      %v360 = vpack.c.b16 %v347, %v346
      %v361 = vpack.c.b16 %v349, %v348
      %v362 = vpack.c.b16 %v351, %v350
      %v363 = vpack.c.b16 %v353, %v352
      %v364 = vpack.c.b16 %v355, %v354
      %v365 = vpack.c.b16 %v357, %v356
      %374 = vmatprep.subr.bf16.mxu0 0
      %375 = vmatpush1.bf16.msra.mxu0 %v358
      %376 = vmatprep.subr.bf16.mxu0 0
      %377 = vmatpush1.bf16.msra.mxu0 %v359
      %378 = vmatprep.subr.bf16.mxu0 0
      %379 = vmatpush1.bf16.msra.mxu0 %v360
      %380 = vmatprep.subr.bf16.mxu0 0
      %381 = vmatpush1.bf16.msra.mxu0 %v361
      %382 = vmatprep.subr.bf16.mxu0 0
      %383 = vmatpush1.bf16.msra.mxu0 %v362
      %384 = vmatprep.subr.bf16.mxu0 0
      %385 = vmatpush1.bf16.msra.mxu0 %v363
      %386 = vmatprep.subr.bf16.mxu0 0
      %387 = vmatpush1.bf16.msra.mxu0 %v364
      %388 = vmatprep.subr.bf16.mxu0 0
      %389 = vmatpush1.bf16.msra.mxu0 %v365
      %390 = vmatprep.subr.bf16.mxu0 0
      %391 = vmatpush1.bf16.msra.mxu0 0
      %392 = vmatprep.subr.bf16.mxu0 0
      %393 = vmatpush1.bf16.msra.mxu0 0
      %394 = vmatprep.subr.bf16.mxu0 0
      %395 = vmatpush1.bf16.msra.mxu0 0
      %396 = vmatprep.subr.bf16.mxu0 0
      %397 = vmatpush1.bf16.msra.mxu0 0
      %398 = vmatprep.subr.bf16.mxu0 0
      %399 = vmatpush1.bf16.msra.mxu0 0
      %400 = vmatprep.subr.bf16.mxu0 0
      %401 = vmatpush1.bf16.msra.mxu0 0
      %402 = vmatprep.subr.bf16.mxu0 0
      %403 = vmatpush1.bf16.msra.mxu0 0
      %404 = vmatprep.subr.bf16.mxu0 0
      %405 = vmatpush1.bf16.msra.mxu0 0
      %406 = vmatprep.mubr.bf16.mxu0 0
      %407 = vmatmul.mubr.bf16.gmra.mrb[0].mxu0 %v294
      %v408 = vpop.f32.mrb[0].mxu0
      %v409 = vadd.f32 %v228, %v408
      %v410 = vpop.f32.mrb[0].mxu0
      %v411 = vpop.f32.mrb[0].mxu0
      %v412 = vadd.f32 %v228, %v411
      %v413 = vpop.f32.mrb[0].mxu0
      %414 = vmatprep.mubr.bf16.mxu0 0
      %415 = vmatmul.mubr.bf16.gmra.mrb[0].mxu0 %v295
      %v416 = vpop.f32.mrb[0].mxu0
      %v417 = vadd.f32 %v228, %v416
      %v418 = vpop.f32.mrb[0].mxu0
      %v419 = vpop.f32.mrb[0].mxu0
      %v420 = vadd.f32 %v228, %v419
      %v421 = vpop.f32.mrb[0].mxu0
      %422 = vmatprep.mubr.bf16.mxu0 0
      %423 = vmatmul.mubr.bf16.gmra.mrb[0].mxu0 %v296
      %v424 = vpop.f32.mrb[0].mxu0
      %v425 = vadd.f32 %v228, %v424
      %v426 = vpop.f32.mrb[0].mxu0
      %v427 = vpop.f32.mrb[0].mxu0
      %v428 = vadd.f32 %v228, %v427
      %v429 = vpop.f32.mrb[0].mxu0
      %430 = vmatprep.mubr.bf16.mxu0 0
      %431 = vmatmul.mubr.bf16.gmra.mrb[0].mxu0 %v297
      %v432 = vpop.f32.mrb[0].mxu0
      %v433 = vadd.f32 %v228, %v432
      %v434 = vpop.f32.mrb[0].mxu0
      %v435 = vpop.f32.mrb[0].mxu0
      %v436 = vadd.f32 %v228, %v435
      %v437 = vpop.f32.mrb[0].mxu0
      %438 = vmatprep.mubr.bf16.mxu0 0
      %439 = vmatmul.mubr.bf16.gmra.mrb[0].mxu0 %v298
      %v440 = vpop.f32.mrb[0].mxu0
      %v441 = vadd.f32 %v228, %v440
      %v442 = vpop.f32.mrb[0].mxu0
      %v443 = vpop.f32.mrb[0].mxu0
      %v444 = vadd.f32 %v228, %v443
      %v445 = vpop.f32.mrb[0].mxu0
      %446 = vmatprep.mubr.bf16.mxu0 0
      %447 = vmatmul.mubr.bf16.gmra.mrb[0].mxu0 %v299
      %v448 = vpop.f32.mrb[0].mxu0
      %v449 = vadd.f32 %v228, %v448
      %v450 = vpop.f32.mrb[0].mxu0
      %v451 = vpop.f32.mrb[0].mxu0
      %v452 = vadd.f32 %v228, %v451
      %v453 = vpop.f32.mrb[0].mxu0
      %454 = vmatprep.mubr.bf16.mxu0 0
      %455 = vmatmul.mubr.bf16.gmra.mrb[0].mxu0 %v300
      %v456 = vpop.f32.mrb[0].mxu0
      %v457 = vadd.f32 %v228, %v456
      %v458 = vpop.f32.mrb[0].mxu0
      %v459 = vpop.f32.mrb[0].mxu0
      %v460 = vadd.f32 %v228, %v459
      %v461 = vpop.f32.mrb[0].mxu0
      %462 = vmatprep.mubr.bf16.mxu0 0
      %463 = vmatmul.mubr.bf16.gmra.mrb[0].mxu0 %v301
      %v464 = vpop.f32.mrb[0].mxu0
      %v465 = vadd.f32 %v228, %v464
      %v466 = vpop.f32.mrb[0].mxu0
      %v467 = vpop.f32.mrb[0].mxu0
      %v468 = vadd.f32 %v228, %v467
      %v469 = vpop.f32.mrb[0].mxu0
      %470 = vmatprep.mubr.bf16.mxu0 0
      %471 = vmatmul.mubr.bf16.gmra.mrb[0].mxu0 %v302
      %v472 = vpop.f32.mrb[0].mxu0
      %v473 = vadd.f32 %v228, %v472
      %v474 = vpop.f32.mrb[0].mxu0
      %v475 = vpop.f32.mrb[0].mxu0
      %v476 = vadd.f32 %v228, %v475
      %v477 = vpop.f32.mrb[0].mxu0
      %478 = vmatprep.mubr.bf16.mxu0 0
      %479 = vmatmul.mubr.bf16.gmra.mrb[0].mxu0 %v303
      %v480 = vpop.f32.mrb[0].mxu0
      %v481 = vadd.f32 %v228, %v480
      %v482 = vpop.f32.mrb[0].mxu0
      %v483 = vpop.f32.mrb[0].mxu0
      %v484 = vadd.f32 %v228, %v483
      %v485 = vpop.f32.mrb[0].mxu0
      %486 = vmatprep.mubr.bf16.mxu0 0
      %487 = vmatmul.mubr.bf16.gmra.mrb[0].mxu0 %v304
      %v488 = vpop.f32.mrb[0].mxu0
      %v489 = vadd.f32 %v228, %v488
      %v490 = vpop.f32.mrb[0].mxu0
      %v491 = vpop.f32.mrb[0].mxu0
      %v492 = vadd.f32 %v228, %v491
      %v493 = vpop.f32.mrb[0].mxu0
      %494 = vmatprep.mubr.bf16.mxu0 0
      %495 = vmatmul.mubr.bf16.gmra.mrb[0].mxu0 %v305
      %v496 = vpop.f32.mrb[0].mxu0
      %v497 = vadd.f32 %v228, %v496
      %v498 = vpop.f32.mrb[0].mxu0
      %v499 = vpop.f32.mrb[0].mxu0
      %v500 = vadd.f32 %v228, %v499
      %v501 = vpop.f32.mrb[0].mxu0
      %502 = vmatprep.mubr.bf16.mxu0 0
      %503 = vmatmul.mubr.bf16.gmra.mrb[0].mxu0 %v306
      %v504 = vpop.f32.mrb[0].mxu0
      %v505 = vadd.f32 %v228, %v504
      %v506 = vpop.f32.mrb[0].mxu0
      %v507 = vpop.f32.mrb[0].mxu0
      %v508 = vadd.f32 %v228, %v507
      %v509 = vpop.f32.mrb[0].mxu0
      %510 = vmatprep.mubr.bf16.mxu0 0
      %511 = vmatmul.mubr.bf16.gmra.mrb[0].mxu0 %v307
      %v512 = vpop.f32.mrb[0].mxu0
      %v513 = vadd.f32 %v228, %v512
      %v514 = vpop.f32.mrb[0].mxu0
      %v515 = vpop.f32.mrb[0].mxu0
      %v516 = vadd.f32 %v228, %v515
      %v517 = vpop.f32.mrb[0].mxu0
      %518 = vmatprep.mubr.bf16.mxu0 0
      %519 = vmatmul.mubr.bf16.gmra.mrb[0].mxu0 %v308
      %v520 = vpop.f32.mrb[0].mxu0
      %v521 = vadd.f32 %v228, %v520
      %v522 = vpop.f32.mrb[0].mxu0
      %v523 = vpop.f32.mrb[0].mxu0
      %v524 = vadd.f32 %v228, %v523
      %v525 = vpop.f32.mrb[0].mxu0
      %526 = vmatprep.mubr.bf16.mxu0 0
      %527 = vmatmul.mubr.bf16.gmra.mrb[0].mxu0 %v309
      %v528 = vpop.f32.mrb[0].mxu0
      %v529 = vadd.f32 %v228, %v528
      %v530 = vpop.f32.mrb[0].mxu0
      %v531 = vpop.f32.mrb[0].mxu0
      %v532 = vadd.f32 %v228, %v531
      %v533 = vpop.f32.mrb[0].mxu0
      %534 = vdwg.mxu0
      %vm535 = vcmp.ge.f32.partialorder %v409, 0.0
      %vm536 = vcmp.ge.f32.partialorder %v412, 0.0
      %vm537 = vcmp.ge.f32.partialorder %v417, 0.0
      %vm538 = vcmp.ge.f32.partialorder %v420, 0.0
      %vm539 = vcmp.ge.f32.partialorder %v425, 0.0
      %vm540 = vcmp.ge.f32.partialorder %v428, 0.0
      %vm541 = vcmp.ge.f32.partialorder %v433, 0.0
      %vm542 = vcmp.ge.f32.partialorder %v436, 0.0
      %vm543 = vcmp.ge.f32.partialorder %v441, 0.0
      %vm544 = vcmp.ge.f32.partialorder %v444, 0.0
      %vm545 = vcmp.ge.f32.partialorder %v449, 0.0
      %vm546 = vcmp.ge.f32.partialorder %v452, 0.0
      %vm547 = vcmp.ge.f32.partialorder %v457, 0.0
      %vm548 = vcmp.ge.f32.partialorder %v460, 0.0
      %vm549 = vcmp.ge.f32.partialorder %v465, 0.0
      %vm550 = vcmp.ge.f32.partialorder %v468, 0.0
      %vm551 = vcmp.ge.f32.partialorder %v473, 0.0
      %vm552 = vcmp.ge.f32.partialorder %v476, 0.0
      %vm553 = vcmp.ge.f32.partialorder %v481, 0.0
      %vm554 = vcmp.ge.f32.partialorder %v484, 0.0
      %vm555 = vcmp.ge.f32.partialorder %v489, 0.0
      %vm556 = vcmp.ge.f32.partialorder %v492, 0.0
      %vm557 = vcmp.ge.f32.partialorder %v497, 0.0
      %vm558 = vcmp.ge.f32.partialorder %v500, 0.0
      %vm559 = vcmp.ge.f32.partialorder %v505, 0.0
      %vm560 = vcmp.ge.f32.partialorder %v508, 0.0
      %vm561 = vcmp.ge.f32.partialorder %v513, 0.0
      %vm562 = vcmp.ge.f32.partialorder %v516, 0.0
      %vm563 = vcmp.ge.f32.partialorder %v521, 0.0
      %vm564 = vcmp.ge.f32.partialorder %v524, 0.0
      %vm565 = vcmp.ge.f32.partialorder %v529, 0.0
      %vm566 = vcmp.ge.f32.partialorder %v532, 0.0
      %v567 = vmul.f32 %v409, 0.01
      %v568 = vmul.f32 %v412, 0.01
      %v569 = vmul.f32 %v417, 0.01
      %v570 = vmul.f32 %v420, 0.01
      %v571 = vmul.f32 %v425, 0.01
      %v572 = vmul.f32 %v428, 0.01
      %v573 = vmul.f32 %v433, 0.01
      %v574 = vmul.f32 %v436, 0.01
      %v575 = vmul.f32 %v441, 0.01
      %v576 = vmul.f32 %v444, 0.01
      %v577 = vmul.f32 %v449, 0.01
      %v578 = vmul.f32 %v452, 0.01
      %v579 = vmul.f32 %v457, 0.01
      %v580 = vmul.f32 %v460, 0.01
      %v581 = vmul.f32 %v465, 0.01
      %v582 = vmul.f32 %v468, 0.01
      %v583 = vmul.f32 %v473, 0.01
      %v584 = vmul.f32 %v476, 0.01
      %v585 = vmul.f32 %v481, 0.01
      %v586 = vmul.f32 %v484, 0.01
      %v587 = vmul.f32 %v489, 0.01
      %v588 = vmul.f32 %v492, 0.01
      %v589 = vmul.f32 %v497, 0.01
      %v590 = vmul.f32 %v500, 0.01
      %v591 = vmul.f32 %v505, 0.01
      %v592 = vmul.f32 %v508, 0.01
      %v593 = vmul.f32 %v513, 0.01
      %v594 = vmul.f32 %v516, 0.01
      %v595 = vmul.f32 %v521, 0.01
      %v596 = vmul.f32 %v524, 0.01
      %v597 = vmul.f32 %v529, 0.01
      %v598 = vmul.f32 %v532, 0.01
      %v599 = vsel %vm535, %v409, %v567
      %v600 = vsel %vm536, %v412, %v568
      %v601 = vsel %vm537, %v417, %v569
      %v602 = vsel %vm538, %v420, %v570
      %v603 = vsel %vm539, %v425, %v571
      %v604 = vsel %vm540, %v428, %v572
      %v605 = vsel %vm541, %v433, %v573
      %v606 = vsel %vm542, %v436, %v574
      %v607 = vsel %vm543, %v441, %v575
      %v608 = vsel %vm544, %v444, %v576
      %v609 = vsel %vm545, %v449, %v577
      %v610 = vsel %vm546, %v452, %v578
      %v611 = vsel %vm547, %v457, %v579
      %v612 = vsel %vm548, %v460, %v580
      %v613 = vsel %vm549, %v465, %v581
      %v614 = vsel %vm550, %v468, %v582
      %v615 = vsel %vm551, %v473, %v583
      %v616 = vsel %vm552, %v476, %v584
      %v617 = vsel %vm553, %v481, %v585
      %v618 = vsel %vm554, %v484, %v586
      %v619 = vsel %vm555, %v489, %v587
      %v620 = vsel %vm556, %v492, %v588
      %v621 = vsel %vm557, %v497, %v589
      %v622 = vsel %vm558, %v500, %v590
      %v623 = vsel %vm559, %v505, %v591
      %v624 = vsel %vm560, %v508, %v592
      %v625 = vsel %vm561, %v513, %v593
      %v626 = vsel %vm562, %v516, %v594
      %v627 = vsel %vm563, %v521, %v595
      %v628 = vsel %vm564, %v524, %v596
      %v629 = vsel %vm565, %v529, %v597
      %v630 = vsel %vm566, %v532, %v598
      %v631 = vpack.c.bf16 %v600, %v599
      %v632 = vpack.c.bf16 %v602, %v601
      %v633 = vpack.c.bf16 %v604, %v603
      %v634 = vpack.c.bf16 %v606, %v605
      %v635 = vpack.c.bf16 %v608, %v607
      %v636 = vpack.c.bf16 %v610, %v609
      %v637 = vpack.c.bf16 %v612, %v611
      %v638 = vpack.c.bf16 %v614, %v613
      %v639 = vpack.c.bf16 %v616, %v615
      %v640 = vpack.c.bf16 %v618, %v617
      %v641 = vpack.c.bf16 %v620, %v619
      %v642 = vpack.c.bf16 %v622, %v621
      %v643 = vpack.c.bf16 %v624, %v623
      %v644 = vpack.c.bf16 %v626, %v625
      %v645 = vpack.c.bf16 %v628, %v627
      %v646 = vpack.c.bf16 %v630, %v629
      %v663 = vunpack.c.l.b16 %v631
      %v664 = vunpack.c.h.b16 %v631
      %v665 = vunpack.c.l.b16 %v632
      %v666 = vunpack.c.h.b16 %v632
      %v667 = vunpack.c.l.b16 %v633
      %v668 = vunpack.c.h.b16 %v633
      %v669 = vunpack.c.l.b16 %v634
      %v670 = vunpack.c.h.b16 %v634
      %v671 = vunpack.c.l.b16 %v635
      %v672 = vunpack.c.h.b16 %v635
      %v673 = vunpack.c.l.b16 %v636
      %v674 = vunpack.c.h.b16 %v636
      %v675 = vunpack.c.l.b16 %v637
      %v676 = vunpack.c.h.b16 %v637
      %v677 = vunpack.c.l.b16 %v638
      %v678 = vunpack.c.h.b16 %v638
      %v679 = vunpack.c.l.b16 %v639
      %v680 = vunpack.c.h.b16 %v639
      %v681 = vunpack.c.l.b16 %v640
      %v682 = vunpack.c.h.b16 %v640
      %v683 = vunpack.c.l.b16 %v641
      %v684 = vunpack.c.h.b16 %v641
      %v685 = vunpack.c.l.b16 %v642
      %v686 = vunpack.c.h.b16 %v642
      %v687 = vunpack.c.l.b16 %v643
      %v688 = vunpack.c.h.b16 %v643
      %v689 = vunpack.c.l.b16 %v644
      %v690 = vunpack.c.h.b16 %v644
      %v691 = vunpack.c.l.b16 %v645
      %v692 = vunpack.c.h.b16 %v645
      %v693 = vunpack.c.l.b16 %v646
      %v694 = vunpack.c.h.b16 %v646
      %v695 = vpack.c.b16 %v663, %v663
      %v696 = vpack.c.b16 %v664, %v664
      %v697 = vpack.c.b16 %v665, %v665
      %v698 = vpack.c.b16 %v666, %v666
      %v699 = vpack.c.b16 %v667, %v667
      %v700 = vpack.c.b16 %v668, %v668
      %v701 = vpack.c.b16 %v669, %v669
      %v702 = vpack.c.b16 %v670, %v670
      %v703 = vpack.c.b16 %v671, %v671
      %v704 = vpack.c.b16 %v672, %v672
      %v705 = vpack.c.b16 %v673, %v673
      %v706 = vpack.c.b16 %v674, %v674
      %v707 = vpack.c.b16 %v675, %v675
      %v708 = vpack.c.b16 %v676, %v676
      %v709 = vpack.c.b16 %v677, %v677
      %v710 = vpack.c.b16 %v678, %v678
      %v711 = vpack.c.b16 %v679, %v679
      %v712 = vpack.c.b16 %v680, %v680
      %v713 = vpack.c.b16 %v681, %v681
      %v714 = vpack.c.b16 %v682, %v682
      %v715 = vpack.c.b16 %v683, %v683
      %v716 = vpack.c.b16 %v684, %v684
      %v717 = vpack.c.b16 %v685, %v685
      %v718 = vpack.c.b16 %v686, %v686
      %v719 = vpack.c.b16 %v687, %v687
      %v720 = vpack.c.b16 %v688, %v688
      %v721 = vpack.c.b16 %v689, %v689
      %v722 = vpack.c.b16 %v690, %v690
      %v723 = vpack.c.b16 %v691, %v691
      %v724 = vpack.c.b16 %v692, %v692
      %v725 = vpack.c.b16 %v693, %v693
      %v726 = vpack.c.b16 %v694, %v694
      %759 = vst [vmem:[%s172] sm:$0xf] %v695
      %760 = vst [vmem:[%s172 + $0x4] sm:$0xf] %v696
      %761 = vst [vmem:[%s172 + $0x8] sm:$0xf] %v697
      %762 = vst [vmem:[%s172 + $0xc] sm:$0xf] %v698
      %763 = vst [vmem:[%s172 + $0x10] sm:$0xf] %v699
      %764 = vst [vmem:[%s172 + $0x14] sm:$0xf] %v700
      %765 = vst [vmem:[%s172 + $0x18] sm:$0xf] %v701
      %766 = vst [vmem:[%s172 + $0x1c] sm:$0xf] %v702
      %767 = vst [vmem:[%s172 + $0x20] sm:$0xf] %v703
      %768 = vst [vmem:[%s172 + $0x24] sm:$0xf] %v704
      %769 = vst [vmem:[%s172 + $0x28] sm:$0xf] %v705
      %770 = vst [vmem:[%s172 + $0x2c] sm:$0xf] %v706
      %771 = vst [vmem:[%s172 + $0x30] sm:$0xf] %v707
      %772 = vst [vmem:[%s172 + $0x34] sm:$0xf] %v708
      %773 = vst [vmem:[%s172 + $0x38] sm:$0xf] %v709
      %774 = vst [vmem:[%s172 + $0x3c] sm:$0xf] %v710
      %775 = vst [vmem:[%s172 + $0x40] sm:$0xf] %v711
      %776 = vst [vmem:[%s172 + $0x44] sm:$0xf] %v712
      %777 = vst [vmem:[%s172 + $0x48] sm:$0xf] %v713
      %778 = vst [vmem:[%s172 + $0x4c] sm:$0xf] %v714
      %779 = vst [vmem:[%s172 + $0x50] sm:$0xf] %v715
      %780 = vst [vmem:[%s172 + $0x54] sm:$0xf] %v716
      %781 = vst [vmem:[%s172 + $0x58] sm:$0xf] %v717
      %782 = vst [vmem:[%s172 + $0x5c] sm:$0xf] %v718
      %783 = vst [vmem:[%s172 + $0x60] sm:$0xf] %v719
      %784 = vst [vmem:[%s172 + $0x64] sm:$0xf] %v720
      %785 = vst [vmem:[%s172 + $0x68] sm:$0xf] %v721
      %786 = vst [vmem:[%s172 + $0x6c] sm:$0xf] %v722
      %787 = vst [vmem:[%s172 + $0x70] sm:$0xf] %v723
      %788 = vst [vmem:[%s172 + $0x74] sm:$0xf] %v724
      %789 = vst [vmem:[%s172 + $0x78] sm:$0xf] %v725
      %790 = vst [vmem:[%s172 + $0x7c] sm:$0xf] %v726
      %s791 = smul.u32 32, %s14
      %p792 = scmp.lt.s32.totalorder %s791, 63
      %s793 = scalar_select %p792, %s791, 63
      %s794 = smul.addr %s793, 4
      %s795 = scalar_lea.vmem %s3, %s794
      // Predicated region
      $region33: #{spatial_prior_adaptor3_forward.4} parent=31 // pred_check
        %p796 = pneg %p100
      $region34: #{spatial_prior_adaptor3_forward.4} parent=31 // pred_check_branch
        %798 = sbr.rel (%p796) target = $region36
      $region35: #{spatial_prior_adaptor3_forward.4} parent=31 // pred_region
        %s799 = smul.u32 32, %s14
      $region36: #{spatial_prior_adaptor3_forward.4} parent=31 // pred_fallthru
        _
    $region32: #{spatial_prior_adaptor3_forward.4} parent=5 // pred_fallthru
      _
    %p800 = scmp.le.s32.totalorder 2, %s9
    // Predicated region
    $region37: #{spatial_prior_adaptor3_forward.4} parent=5 // pred_check
      %p801 = pneg %p800
    $region38: #{spatial_prior_adaptor3_forward.4} parent=5 // pred_check_branch
      %803 = sbr.rel (%p801) target = $region40
    $region39: #{spatial_prior_adaptor3_forward.4} parent=5 // pred_region
      %s804 = ssub.s32 %s9, 2
      // Predicated region
      $region41: #{spatial_prior_adaptor3_forward.4} parent=39 // pred_check
        %p805 = pneg %p106
      $region42: #{spatial_prior_adaptor3_forward.4} parent=39 // pred_check_branch
        %807 = sbr.rel (%p805) target = $region44
      $region43: #{spatial_prior_adaptor3_forward.4} parent=39 // pred_region
        %s808 = smul.u32 32, %s15
        %p809 = scmp.lt.s32.totalorder %s808, 63
        %s810 = scalar_select %p809, %s808, 63
        %s811 = smul.addr %s810, 4
        %s812 = scalar_lea.vmem %s3, %s811
      $region44: #{spatial_prior_adaptor3_forward.4} parent=39 // pred_fallthru
        _
    $region40: #{spatial_prior_adaptor3_forward.4} parent=5 // pred_fallthru
      _
  $region6: #{spatial_prior_adaptor3_forward.4} parent=0 // loop_footer
    %s13 = sadd.s32 1, %s9
  $region7: #{spatial_prior_adaptor3_forward.4} parent=0 // loop_footer_branch
    %8 = sbr.rel target = $region3
  $region8: #{spatial_prior_adaptor3_forward.4} parent=0 // loop_exit
    _

// kernel: spatial_prior_adaptor3_forward.6
$region0: #{spatial_prior_adaptor3_forward.6}
  #allocation0 [shape = 'u32[]', space=smem, size = 0x4, offset = 0x4, fixed_abs, tag = 'smem constant byte address 0x4 - core index']
  #allocation1 [shape = 'u32[144,128]{1,0:T(1,128)}', space=vmem, size = 0x12000, scoped, tag = 'internal scratch']
  %s0 = inlined_call_operand.vmem [shape: bf16[512,128], index: 0, kind: input, shape index: {}]
  %s1 = inlined_call_operand.vmem [shape: bf16[128,128], index: 1, kind: input, shape index: {}]
  %s2 = inlined_call_operand.vmem [shape: f32[1,128], index: 2, kind: input, shape index: {}]
  %s3 = inlined_call_operand.vmem [shape: bf16[512,128], index: 3, kind: input, shape index: {}]
  %s4 = inlined_call_operand.vmem [shape: bf16[512,128], index: 4, kind: output, shape index: {}]
  %s5 = sld [smem:[#allocation0]]
  $region49: #{spatial_prior_adaptor3_forward.6} parent=0
    _
  %s7 = ssub.s32 1, %s5
  %s8 = scalar_select 0, %s7, %s5
  loop: start=0, step=1, limit=4
  $region2: #{spatial_prior_adaptor3_forward.6} parent=0 // loop_pre_header
    _
  $region3: #{spatial_prior_adaptor3_forward.6} parent=0 // loop_header
    %s10 = sphi 0, %s14
    %p11 = scmp.ge.s32.totalorder %s10, 4
    %s20 = sphi 0, %s22
    %s23 = sphi 0, %s20
    %s24 = sphi 0, %s23
    %s40 = sphi 0, %s24
    %s44 = sphi 0, %s44
    %s46 = sphi 0, %s44
    %s47 = sphi 0, %s46
    %s61 = sphi 0, %s47
    %s65 = sphi 0, %s65
    %s67 = sphi 0, %s65
    %s68 = sphi 0, %s67
    %s82 = sphi 0, %s68
    %s88 = sphi 0, %s90
    %s91 = sphi 0, %s88
    %s92 = sphi 0, %s91
    %s108 = sphi 0, %s92
    %s114 = sphi 0, %s116
    %s117 = sphi 0, %s114
    %s118 = sphi 0, %s117
    %s134 = sphi 0, %s118
  $region4: #{spatial_prior_adaptor3_forward.6} parent=0 // loop_header_branch
    %13 = sbr.rel (%p11) target = $region8
  $region5: #{spatial_prior_adaptor3_forward.6} parent=0 // loop_body
    %s15 = ssub.s32 %s10, 1
    %s16 = ssub.s32 %s10, 2
    %s17 = sadd.s32 %s10, 1
    %s18 = ssub.s32 %s10, %s17
    %p19 = scmp.eq.s32.totalorder %s18, 0
    %s21 = sadd.s32 %s20, 1
    %s22 = scalar_select %p19, %s20, %s21
    %p25 = pneg %p19
    %p26 = scmp.eq.s32.totalorder %s10, 1
    %p27 = por %p25, %p26
    %p28 = scmp.ne.s32.totalorder %s20, %s23
    %p29 = scmp.eq.s32.totalorder %s10, 0
    %p30 = por %p28, %p29
    %p31 = scmp.ne.s32.totalorder %s20, %s23
    %p32 = scmp.eq.s32.totalorder %s15, 1
    %p33 = por %p31, %p32
    %p34 = scmp.ne.s32.totalorder %s23, %s24
    %p35 = scmp.eq.s32.totalorder %s15, 0
    %p36 = por %p34, %p35
    %p37 = scmp.ne.s32.totalorder %s23, %s24
    %p38 = scmp.eq.s32.totalorder %s16, 1
    %p39 = por %p37, %p38
    %p41 = scmp.ne.s32.totalorder %s24, %s40
    %p42 = scmp.eq.s32.totalorder %s16, 0
    %p43 = por %p41, %p42
    %s45 = sadd.s32 %s44, 1
    %p48 = scmp.eq.s32.totalorder %s10, 1
    %p49 = scmp.ne.s32.totalorder %s44, %s46
    %p50 = scmp.eq.s32.totalorder %s10, 0
    %p51 = por %p49, %p50
    %p52 = scmp.ne.s32.totalorder %s44, %s46
    %p53 = scmp.eq.s32.totalorder %s15, 1
    %p54 = por %p52, %p53
    %p55 = scmp.ne.s32.totalorder %s46, %s47
    %p56 = scmp.eq.s32.totalorder %s15, 0
    %p57 = por %p55, %p56
    %p58 = scmp.ne.s32.totalorder %s46, %s47
    %p59 = scmp.eq.s32.totalorder %s16, 1
    %p60 = por %p58, %p59
    %p62 = scmp.ne.s32.totalorder %s47, %s61
    %p63 = scmp.eq.s32.totalorder %s16, 0
    %p64 = por %p62, %p63
    %s66 = sadd.s32 %s65, 1
    %p69 = scmp.eq.s32.totalorder %s10, 1
    %p70 = scmp.ne.s32.totalorder %s65, %s67
    %p71 = scmp.eq.s32.totalorder %s10, 0
    %p72 = por %p70, %p71
    %p73 = scmp.ne.s32.totalorder %s65, %s67
    %p74 = scmp.eq.s32.totalorder %s15, 1
    %p75 = por %p73, %p74
    %p76 = scmp.ne.s32.totalorder %s67, %s68
    %p77 = scmp.eq.s32.totalorder %s15, 0
    %p78 = por %p76, %p77
    %p79 = scmp.ne.s32.totalorder %s67, %s68
    %p80 = scmp.eq.s32.totalorder %s16, 1
    %p81 = por %p79, %p80
    %p83 = scmp.ne.s32.totalorder %s68, %s82
    %p84 = scmp.eq.s32.totalorder %s16, 0
    %p85 = por %p83, %p84
    %s86 = ssub.s32 %s10, %s17
    %p87 = scmp.eq.s32.totalorder %s86, 0
    %s89 = sadd.s32 %s88, 1
    %s90 = scalar_select %p87, %s88, %s89
    %p93 = pneg %p87
    %p94 = scmp.eq.s32.totalorder %s10, 1
    %p95 = por %p93, %p94
    %p96 = scmp.ne.s32.totalorder %s88, %s91
    %p97 = scmp.eq.s32.totalorder %s10, 0
    %p98 = por %p96, %p97
    %p99 = scmp.ne.s32.totalorder %s88, %s91
    %p100 = scmp.eq.s32.totalorder %s15, 1
    %p101 = por %p99, %p100
    %p102 = scmp.ne.s32.totalorder %s91, %s92
    %p103 = scmp.eq.s32.totalorder %s15, 0
    %p104 = por %p102, %p103
    %p105 = scmp.ne.s32.totalorder %s91, %s92
    %p106 = scmp.eq.s32.totalorder %s16, 1
    %p107 = por %p105, %p106
    %p109 = scmp.ne.s32.totalorder %s92, %s108
    %p110 = scmp.eq.s32.totalorder %s16, 0
    %p111 = por %p109, %p110
    %s112 = ssub.s32 %s10, %s17
    %p113 = scmp.eq.s32.totalorder %s112, 0
    %s115 = sadd.s32 %s114, 1
    %s116 = scalar_select %p113, %s114, %s115
    %p119 = pneg %p113
    %p120 = scmp.eq.s32.totalorder %s10, 1
    %p121 = por %p119, %p120
    %p122 = scmp.ne.s32.totalorder %s114, %s117
    %p123 = scmp.eq.s32.totalorder %s10, 0
    %p124 = por %p122, %p123
    %p125 = scmp.ne.s32.totalorder %s114, %s117
    %p126 = scmp.eq.s32.totalorder %s15, 1
    %p127 = por %p125, %p126
    %p128 = scmp.ne.s32.totalorder %s117, %s118
    %p129 = scmp.eq.s32.totalorder %s15, 0
    %p130 = por %p128, %p129
    %p131 = scmp.ne.s32.totalorder %s117, %s118
    %p132 = scmp.eq.s32.totalorder %s16, 1
    %p133 = por %p131, %p132
    %p135 = scmp.ne.s32.totalorder %s118, %s134
    %p136 = scmp.eq.s32.totalorder %s16, 0
    %p137 = por %p135, %p136
    %p138 = scmp.le.s32.totalorder 1, %s10
    %p139 = scmp.lt.s32.totalorder %s10, 3
    %p140 = pnand %p138, %p139
    %p141 = pneg %p140
    // Predicated region
    $region9: #{spatial_prior_adaptor3_forward.6} parent=5 // pred_check
      _
    $region10: #{spatial_prior_adaptor3_forward.6} parent=5 // pred_check_branch
      %143 = sbr.rel (%p140) target = $region12
    $region11: #{spatial_prior_adaptor3_forward.6} parent=5 // pred_region
      %s144 = ssub.s32 %s10, 1
      // Predicated region
      $region13: #{spatial_prior_adaptor3_forward.6} parent=11 // pred_check
        %p145 = pneg %p57
      $region14: #{spatial_prior_adaptor3_forward.6} parent=11 // pred_check_branch
        %147 = sbr.rel (%p145) target = $region16
      $region15: #{spatial_prior_adaptor3_forward.6} parent=11 // pred_region
        _
      $region16: #{spatial_prior_adaptor3_forward.6} parent=11 // pred_fallthru
        _
      // Predicated region
      $region17: #{spatial_prior_adaptor3_forward.6} parent=11 // pred_check
        %p148 = pneg %p78
      $region18: #{spatial_prior_adaptor3_forward.6} parent=11 // pred_check_branch
        %150 = sbr.rel (%p148) target = $region20
      $region19: #{spatial_prior_adaptor3_forward.6} parent=11 // pred_region
        _
      $region20: #{spatial_prior_adaptor3_forward.6} parent=11 // pred_fallthru
        _
    $region12: #{spatial_prior_adaptor3_forward.6} parent=5 // pred_fallthru
      _
    %p151 = scmp.lt.s32.totalorder %s10, 2
    // Predicated region
    $region21: #{spatial_prior_adaptor3_forward.6} parent=5 // pred_check
      %p152 = pneg %p151
    $region22: #{spatial_prior_adaptor3_forward.6} parent=5 // pred_check_branch
      %154 = sbr.rel (%p152) target = $region24
    $region23: #{spatial_prior_adaptor3_forward.6} parent=5 // pred_region
      // Predicated region
      $region25: #{spatial_prior_adaptor3_forward.6} parent=23 // pred_check
        %p155 = pneg %p30
      $region26: #{spatial_prior_adaptor3_forward.6} parent=23 // pred_check_branch
        %157 = sbr.rel (%p155) target = $region28
      $region27: #{spatial_prior_adaptor3_forward.6} parent=23 // pred_region
        %s158 = smul.u32 32, %s10
        %p159 = scmp.lt.s32.totalorder %s158, 63
        %s160 = scalar_select %p159, %s158, 63
        %s161 = smul.addr %s160, 4
        %s162 = scalar_lea.vmem %s0, %s161
        %s163 = smul.u32 32, %s10
      $region28: #{spatial_prior_adaptor3_forward.6} parent=23 // pred_fallthru
        _
      // Predicated region
      $region29: #{spatial_prior_adaptor3_forward.6} parent=23 // pred_check
        %p164 = pneg %p98
      $region30: #{spatial_prior_adaptor3_forward.6} parent=23 // pred_check_branch
        %166 = sbr.rel (%p164) target = $region32
      $region31: #{spatial_prior_adaptor3_forward.6} parent=23 // pred_region
        %s167 = smul.u32 32, %s10
        %p168 = scmp.lt.s32.totalorder %s167, 63
        %s169 = scalar_select %p168, %s167, 63
        %s170 = smul.addr %s169, 4
        %s171 = scalar_lea.vmem %s3, %s170
        %s172 = smul.u32 32, %s10
      $region32: #{spatial_prior_adaptor3_forward.6} parent=23 // pred_fallthru
        _
    $region24: #{spatial_prior_adaptor3_forward.6} parent=5 // pred_fallthru
      _
    %p173 = scmp.le.s32.totalorder 1, %s10
    %p174 = scmp.lt.s32.totalorder %s10, 3
    %p175 = pnand %p173, %p174
    %p176 = pneg %p175
    // Predicated region
    $region33: #{spatial_prior_adaptor3_forward.6} parent=5 // pred_check
      _
    $region34: #{spatial_prior_adaptor3_forward.6} parent=5 // pred_check_branch
      %178 = sbr.rel (%p175) target = $region36
    $region35: #{spatial_prior_adaptor3_forward.6} parent=5 // pred_region
      %s179 = ssub.s32 %s10, 1
      %s180 = smul.u32 32, %s15
      %p181 = scmp.lt.s32.totalorder %s180, 63
      %s182 = scalar_select %p181, %s180, 63
      %s183 = smul.addr %s182, 4
      %s184 = scalar_lea.vmem %s0, %s183
      %p185 = pneg %p36
      %p186 = pneg %p33
      %p187 = pneg %p57
      %p188 = pneg %p54
      %p189 = pneg %p78
      %p190 = pneg %p75
      %s191 = smul.u32 32, %s15
      %p192 = scmp.lt.s32.totalorder %s191, 63
      %s193 = scalar_select %p192, %s191, 63
      %s194 = smul.addr %s193, 4
      %s195 = scalar_lea.vmem %s3, %s194
      %p196 = pneg %p104
      %p197 = pneg %p101
      %p198 = pneg %p130
      %p199 = pneg %p127
      %s200 = smul.u32 32, %s15
      %p201 = scmp.lt.s32.totalorder %s200, 63
      %s202 = scalar_select %p201, %s200, 63
      %s203 = smul.addr %s202, 4
      %s204 = scalar_lea.vmem %s4, %s203
      %s205 = smul.u32 32, %s15
      %p206 = scmp.lt.s32.totalorder %s205, 63
      %s207 = scalar_select %p206, %s205, 63
      %s208 = smul.addr %s207, 4
      %s209 = scalar_lea.vmem %s0, %s208
      %s210 = smul.u32 32, %s15
      %s211 = smul.u32 32, %s15
      %p212 = scmp.lt.s32.totalorder %s211, 63
      %s213 = scalar_select %p212, %s211, 63
      %s214 = smul.addr %s213, 4
      %s215 = scalar_lea.vmem %s3, %s214
      %s216 = smul.u32 32, %s15
      %s217 = smul.u32 32, %s15
      %p218 = scmp.lt.s32.totalorder %s217, 63
      %s219 = scalar_select %p218, %s217, 63
      %s220 = smul.addr %s219, 4
      %s221 = scalar_lea.vmem %s4, %s220
      %s222 = smul.u32 32, %s15
      %v224 = vld [vmem:[%s209] sm:$0xf]
      %v225 = vld [vmem:[%s209 + $0x4] sm:$0xf]
      %v226 = vld [vmem:[%s209 + $0x8] sm:$0xf]
      %v227 = vld [vmem:[%s209 + $0xc] sm:$0xf]
      %v228 = vld [vmem:[%s209 + $0x10] sm:$0xf]
      %v229 = vld [vmem:[%s209 + $0x14] sm:$0xf]
      %v230 = vld [vmem:[%s209 + $0x18] sm:$0xf]
      %v231 = vld [vmem:[%s209 + $0x1c] sm:$0xf]
      %v232 = vld [vmem:[%s209 + $0x20] sm:$0xf]
      %v233 = vld [vmem:[%s209 + $0x24] sm:$0xf]
      %v234 = vld [vmem:[%s209 + $0x28] sm:$0xf]
      %v235 = vld [vmem:[%s209 + $0x2c] sm:$0xf]
      %v236 = vld [vmem:[%s209 + $0x30] sm:$0xf]
      %v237 = vld [vmem:[%s209 + $0x34] sm:$0xf]
      %v238 = vld [vmem:[%s209 + $0x38] sm:$0xf]
      %v239 = vld [vmem:[%s209 + $0x3c] sm:$0xf]
      %v240 = vld [vmem:[%s209 + $0x40] sm:$0xf]
      %v241 = vld [vmem:[%s209 + $0x44] sm:$0xf]
      %v242 = vld [vmem:[%s209 + $0x48] sm:$0xf]
      %v243 = vld [vmem:[%s209 + $0x4c] sm:$0xf]
      %v244 = vld [vmem:[%s209 + $0x50] sm:$0xf]
      %v245 = vld [vmem:[%s209 + $0x54] sm:$0xf]
      %v246 = vld [vmem:[%s209 + $0x58] sm:$0xf]
      %v247 = vld [vmem:[%s209 + $0x5c] sm:$0xf]
      %v248 = vld [vmem:[%s209 + $0x60] sm:$0xf]
      %v249 = vld [vmem:[%s209 + $0x64] sm:$0xf]
      %v250 = vld [vmem:[%s209 + $0x68] sm:$0xf]
      %v251 = vld [vmem:[%s209 + $0x6c] sm:$0xf]
      %v252 = vld [vmem:[%s209 + $0x70] sm:$0xf]
      %v253 = vld [vmem:[%s209 + $0x74] sm:$0xf]
      %v254 = vld [vmem:[%s209 + $0x78] sm:$0xf]
      %v255 = vld [vmem:[%s209 + $0x7c] sm:$0xf]
      %v256 = vld [vmem:[%s1] sm:$0xf]
      %v257 = vld [vmem:[%s1 + $0x4] sm:$0xf]
      %v258 = vld [vmem:[%s1 + $0x8] sm:$0xf]
      %v259 = vld [vmem:[%s1 + $0xc] sm:$0xf]
      %v260 = vld [vmem:[%s1 + $0x10] sm:$0xf]
      %v261 = vld [vmem:[%s1 + $0x14] sm:$0xf]
      %v262 = vld [vmem:[%s1 + $0x18] sm:$0xf]
      %v263 = vld [vmem:[%s1 + $0x1c] sm:$0xf]
      %v264 = vld [vmem:[%s1 + $0x20] sm:$0xf]
      %v265 = vld [vmem:[%s1 + $0x24] sm:$0xf]
      %v266 = vld [vmem:[%s1 + $0x28] sm:$0xf]
      %v267 = vld [vmem:[%s1 + $0x2c] sm:$0xf]
      %v268 = vld [vmem:[%s1 + $0x30] sm:$0xf]
      %v269 = vld [vmem:[%s1 + $0x34] sm:$0xf]
      %v270 = vld [vmem:[%s1 + $0x38] sm:$0xf]
      %v271 = vld [vmem:[%s1 + $0x3c] sm:$0xf]
      %v272 = vld [vmem:[%s2] sm:$0x1]
      %v274 = vlaneseq
      %v275 = vshrl.u32 %v274, 7
      %v276 = vsub.s32 0, %v275
      %v277 = vrot.slane %v272, %v276
      %v311 = vunpack.c.l.b16 %v224
      %v312 = vunpack.c.l.b16 %v225
      %v313 = vunpack.c.l.b16 %v226
      %v314 = vunpack.c.l.b16 %v227
      %v315 = vunpack.c.l.b16 %v228
      %v316 = vunpack.c.l.b16 %v229
      %v317 = vunpack.c.l.b16 %v230
      %v318 = vunpack.c.l.b16 %v231
      %v319 = vunpack.c.l.b16 %v232
      %v320 = vunpack.c.l.b16 %v233
      %v321 = vunpack.c.l.b16 %v234
      %v322 = vunpack.c.l.b16 %v235
      %v323 = vunpack.c.l.b16 %v236
      %v324 = vunpack.c.l.b16 %v237
      %v325 = vunpack.c.l.b16 %v238
      %v326 = vunpack.c.l.b16 %v239
      %v327 = vunpack.c.l.b16 %v240
      %v328 = vunpack.c.l.b16 %v241
      %v329 = vunpack.c.l.b16 %v242
      %v330 = vunpack.c.l.b16 %v243
      %v331 = vunpack.c.l.b16 %v244
      %v332 = vunpack.c.l.b16 %v245
      %v333 = vunpack.c.l.b16 %v246
      %v334 = vunpack.c.l.b16 %v247
      %v335 = vunpack.c.l.b16 %v248
      %v336 = vunpack.c.l.b16 %v249
      %v337 = vunpack.c.l.b16 %v250
      %v338 = vunpack.c.l.b16 %v251
      %v339 = vunpack.c.l.b16 %v252
      %v340 = vunpack.c.l.b16 %v253
      %v341 = vunpack.c.l.b16 %v254
      %v342 = vunpack.c.l.b16 %v255
      %v343 = vpack.c.b16 %v312, %v311
      %v344 = vpack.c.b16 %v314, %v313
      %v345 = vpack.c.b16 %v316, %v315
      %v346 = vpack.c.b16 %v318, %v317
      %v347 = vpack.c.b16 %v320, %v319
      %v348 = vpack.c.b16 %v322, %v321
      %v349 = vpack.c.b16 %v324, %v323
      %v350 = vpack.c.b16 %v326, %v325
      %v351 = vpack.c.b16 %v328, %v327
      %v352 = vpack.c.b16 %v330, %v329
      %v353 = vpack.c.b16 %v332, %v331
      %v354 = vpack.c.b16 %v334, %v333
      %v355 = vpack.c.b16 %v336, %v335
      %v356 = vpack.c.b16 %v338, %v337
      %v357 = vpack.c.b16 %v340, %v339
      %v358 = vpack.c.b16 %v342, %v341
      %v391 = vunpack.c.l.b16 %v256
      %v392 = vunpack.c.l.b16 %v257
      %v393 = vunpack.c.l.b16 %v258
      %v394 = vunpack.c.l.b16 %v259
      %v395 = vunpack.c.l.b16 %v260
      %v396 = vunpack.c.l.b16 %v261
      %v397 = vunpack.c.l.b16 %v262
      %v398 = vunpack.c.l.b16 %v263
      %v399 = vunpack.c.l.b16 %v264
      %v400 = vunpack.c.l.b16 %v265
      %v401 = vunpack.c.l.b16 %v266
      %v402 = vunpack.c.l.b16 %v267
      %v403 = vunpack.c.l.b16 %v268
      %v404 = vunpack.c.l.b16 %v269
      %v405 = vunpack.c.l.b16 %v270
      %v406 = vunpack.c.l.b16 %v271
      %v407 = vpack.c.b16 %v392, %v391
      %v408 = vpack.c.b16 %v394, %v393
      %v409 = vpack.c.b16 %v396, %v395
      %v410 = vpack.c.b16 %v398, %v397
      %v411 = vpack.c.b16 %v400, %v399
      %v412 = vpack.c.b16 %v402, %v401
      %v413 = vpack.c.b16 %v404, %v403
      %v414 = vpack.c.b16 %v406, %v405
      %423 = vmatprep.subr.bf16.mxu0 0
      %424 = vmatpush1.bf16.msra.mxu0 %v407
      %425 = vmatprep.subr.bf16.mxu0 0
      %426 = vmatpush1.bf16.msra.mxu0 %v408
      %427 = vmatprep.subr.bf16.mxu0 0
      %428 = vmatpush1.bf16.msra.mxu0 %v409
      %429 = vmatprep.subr.bf16.mxu0 0
      %430 = vmatpush1.bf16.msra.mxu0 %v410
      %431 = vmatprep.subr.bf16.mxu0 0
      %432 = vmatpush1.bf16.msra.mxu0 %v411
      %433 = vmatprep.subr.bf16.mxu0 0
      %434 = vmatpush1.bf16.msra.mxu0 %v412
      %435 = vmatprep.subr.bf16.mxu0 0
      %436 = vmatpush1.bf16.msra.mxu0 %v413
      %437 = vmatprep.subr.bf16.mxu0 0
      %438 = vmatpush1.bf16.msra.mxu0 %v414
      %439 = vmatprep.subr.bf16.mxu0 0
      %440 = vmatpush1.bf16.msra.mxu0 0
      %441 = vmatprep.subr.bf16.mxu0 0
      %442 = vmatpush1.bf16.msra.mxu0 0
      %443 = vmatprep.subr.bf16.mxu0 0
      %444 = vmatpush1.bf16.msra.mxu0 0
      %445 = vmatprep.subr.bf16.mxu0 0
      %446 = vmatpush1.bf16.msra.mxu0 0
      %447 = vmatprep.subr.bf16.mxu0 0
      %448 = vmatpush1.bf16.msra.mxu0 0
      %449 = vmatprep.subr.bf16.mxu0 0
      %450 = vmatpush1.bf16.msra.mxu0 0
      %451 = vmatprep.subr.bf16.mxu0 0
      %452 = vmatpush1.bf16.msra.mxu0 0
      %453 = vmatprep.subr.bf16.mxu0 0
      %454 = vmatpush1.bf16.msra.mxu0 0
      %455 = vmatprep.mubr.bf16.mxu0 0
      %456 = vmatmul.mubr.bf16.gmra.mrb[0].mxu0 %v343
      %v457 = vpop.f32.mrb[0].mxu0
      %v458 = vadd.f32 %v277, %v457
      %v459 = vpop.f32.mrb[0].mxu0
      %v460 = vpop.f32.mrb[0].mxu0
      %v461 = vadd.f32 %v277, %v460
      %v462 = vpop.f32.mrb[0].mxu0
      %463 = vmatprep.mubr.bf16.mxu0 0
      %464 = vmatmul.mubr.bf16.gmra.mrb[0].mxu0 %v344
      %v465 = vpop.f32.mrb[0].mxu0
      %v466 = vadd.f32 %v277, %v465
      %v467 = vpop.f32.mrb[0].mxu0
      %v468 = vpop.f32.mrb[0].mxu0
      %v469 = vadd.f32 %v277, %v468
      %v470 = vpop.f32.mrb[0].mxu0
      %471 = vmatprep.mubr.bf16.mxu0 0
      %472 = vmatmul.mubr.bf16.gmra.mrb[0].mxu0 %v345
      %v473 = vpop.f32.mrb[0].mxu0
      %v474 = vadd.f32 %v277, %v473
      %v475 = vpop.f32.mrb[0].mxu0
      %v476 = vpop.f32.mrb[0].mxu0
      %v477 = vadd.f32 %v277, %v476
      %v478 = vpop.f32.mrb[0].mxu0
      %479 = vmatprep.mubr.bf16.mxu0 0
      %480 = vmatmul.mubr.bf16.gmra.mrb[0].mxu0 %v346
      %v481 = vpop.f32.mrb[0].mxu0
      %v482 = vadd.f32 %v277, %v481
      %v483 = vpop.f32.mrb[0].mxu0
      %v484 = vpop.f32.mrb[0].mxu0
      %v485 = vadd.f32 %v277, %v484
      %v486 = vpop.f32.mrb[0].mxu0
      %487 = vmatprep.mubr.bf16.mxu0 0
      %488 = vmatmul.mubr.bf16.gmra.mrb[0].mxu0 %v347
      %v489 = vpop.f32.mrb[0].mxu0
      %v490 = vadd.f32 %v277, %v489
      %v491 = vpop.f32.mrb[0].mxu0
      %v492 = vpop.f32.mrb[0].mxu0
      %v493 = vadd.f32 %v277, %v492
      %v494 = vpop.f32.mrb[0].mxu0
      %495 = vmatprep.mubr.bf16.mxu0 0
      %496 = vmatmul.mubr.bf16.gmra.mrb[0].mxu0 %v348
      %v497 = vpop.f32.mrb[0].mxu0
      %v498 = vadd.f32 %v277, %v497
      %v499 = vpop.f32.mrb[0].mxu0
      %v500 = vpop.f32.mrb[0].mxu0
      %v501 = vadd.f32 %v277, %v500
      %v502 = vpop.f32.mrb[0].mxu0
      %503 = vmatprep.mubr.bf16.mxu0 0
      %504 = vmatmul.mubr.bf16.gmra.mrb[0].mxu0 %v349
      %v505 = vpop.f32.mrb[0].mxu0
      %v506 = vadd.f32 %v277, %v505
      %v507 = vpop.f32.mrb[0].mxu0
      %v508 = vpop.f32.mrb[0].mxu0
      %v509 = vadd.f32 %v277, %v508
      %v510 = vpop.f32.mrb[0].mxu0
      %511 = vmatprep.mubr.bf16.mxu0 0
      %512 = vmatmul.mubr.bf16.gmra.mrb[0].mxu0 %v350
      %v513 = vpop.f32.mrb[0].mxu0
      %v514 = vadd.f32 %v277, %v513
      %v515 = vpop.f32.mrb[0].mxu0
      %v516 = vpop.f32.mrb[0].mxu0
      %v517 = vadd.f32 %v277, %v516
      %v518 = vpop.f32.mrb[0].mxu0
      %519 = vmatprep.mubr.bf16.mxu0 0
      %520 = vmatmul.mubr.bf16.gmra.mrb[0].mxu0 %v351
      %v521 = vpop.f32.mrb[0].mxu0
      %v522 = vadd.f32 %v277, %v521
      %v523 = vpop.f32.mrb[0].mxu0
      %v524 = vpop.f32.mrb[0].mxu0
      %v525 = vadd.f32 %v277, %v524
      %v526 = vpop.f32.mrb[0].mxu0
      %527 = vmatprep.mubr.bf16.mxu0 0
      %528 = vmatmul.mubr.bf16.gmra.mrb[0].mxu0 %v352
      %v529 = vpop.f32.mrb[0].mxu0
      %v530 = vadd.f32 %v277, %v529
      %v531 = vpop.f32.mrb[0].mxu0
      %v532 = vpop.f32.mrb[0].mxu0
      %v533 = vadd.f32 %v277, %v532
      %v534 = vpop.f32.mrb[0].mxu0
      %535 = vmatprep.mubr.bf16.mxu0 0
      %536 = vmatmul.mubr.bf16.gmra.mrb[0].mxu0 %v353
      %v537 = vpop.f32.mrb[0].mxu0
      %v538 = vadd.f32 %v277, %v537
      %v539 = vpop.f32.mrb[0].mxu0
      %v540 = vpop.f32.mrb[0].mxu0
      %v541 = vadd.f32 %v277, %v540
      %v542 = vpop.f32.mrb[0].mxu0
      %543 = vmatprep.mubr.bf16.mxu0 0
      %544 = vmatmul.mubr.bf16.gmra.mrb[0].mxu0 %v354
      %v545 = vpop.f32.mrb[0].mxu0
      %v546 = vadd.f32 %v277, %v545
      %v547 = vpop.f32.mrb[0].mxu0
      %v548 = vpop.f32.mrb[0].mxu0
      %v549 = vadd.f32 %v277, %v548
      %v550 = vpop.f32.mrb[0].mxu0
      %551 = vmatprep.mubr.bf16.mxu0 0
      %552 = vmatmul.mubr.bf16.gmra.mrb[0].mxu0 %v355
      %v553 = vpop.f32.mrb[0].mxu0
      %v554 = vadd.f32 %v277, %v553
      %v555 = vpop.f32.mrb[0].mxu0
      %v556 = vpop.f32.mrb[0].mxu0
      %v557 = vadd.f32 %v277, %v556
      %v558 = vpop.f32.mrb[0].mxu0
      %559 = vmatprep.mubr.bf16.mxu0 0
      %560 = vmatmul.mubr.bf16.gmra.mrb[0].mxu0 %v356
      %v561 = vpop.f32.mrb[0].mxu0
      %v562 = vadd.f32 %v277, %v561
      %v563 = vpop.f32.mrb[0].mxu0
      %v564 = vpop.f32.mrb[0].mxu0
      %v565 = vadd.f32 %v277, %v564
      %v566 = vpop.f32.mrb[0].mxu0
      %567 = vmatprep.mubr.bf16.mxu0 0
      %568 = vmatmul.mubr.bf16.gmra.mrb[0].mxu0 %v357
      %v569 = vpop.f32.mrb[0].mxu0
      %v570 = vadd.f32 %v277, %v569
      %v571 = vpop.f32.mrb[0].mxu0
      %v572 = vpop.f32.mrb[0].mxu0
      %v573 = vadd.f32 %v277, %v572
      %v574 = vpop.f32.mrb[0].mxu0
      %575 = vmatprep.mubr.bf16.mxu0 0
      %576 = vmatmul.mubr.bf16.gmra.mrb[0].mxu0 %v358
      %v577 = vpop.f32.mrb[0].mxu0
      %v578 = vadd.f32 %v277, %v577
      %v579 = vpop.f32.mrb[0].mxu0
      %v580 = vpop.f32.mrb[0].mxu0
      %v581 = vadd.f32 %v277, %v580
      %v582 = vpop.f32.mrb[0].mxu0
      %583 = vdwg.mxu0
      %v584 = vld [vmem:[%s215] sm:$0xf]
      %v585 = vld [vmem:[%s215 + $0x4] sm:$0xf]
      %v586 = vld [vmem:[%s215 + $0x8] sm:$0xf]
      %v587 = vld [vmem:[%s215 + $0xc] sm:$0xf]
      %v588 = vld [vmem:[%s215 + $0x10] sm:$0xf]
      %v589 = vld [vmem:[%s215 + $0x14] sm:$0xf]
      %v590 = vld [vmem:[%s215 + $0x18] sm:$0xf]
      %v591 = vld [vmem:[%s215 + $0x1c] sm:$0xf]
      %v592 = vld [vmem:[%s215 + $0x20] sm:$0xf]
      %v593 = vld [vmem:[%s215 + $0x24] sm:$0xf]
      %v594 = vld [vmem:[%s215 + $0x28] sm:$0xf]
      %v595 = vld [vmem:[%s215 + $0x2c] sm:$0xf]
      %v596 = vld [vmem:[%s215 + $0x30] sm:$0xf]
      %v597 = vld [vmem:[%s215 + $0x34] sm:$0xf]
      %v598 = vld [vmem:[%s215 + $0x38] sm:$0xf]
      %v599 = vld [vmem:[%s215 + $0x3c] sm:$0xf]
      %v600 = vld [vmem:[%s215 + $0x40] sm:$0xf]
      %v601 = vld [vmem:[%s215 + $0x44] sm:$0xf]
      %v602 = vld [vmem:[%s215 + $0x48] sm:$0xf]
      %v603 = vld [vmem:[%s215 + $0x4c] sm:$0xf]
      %v604 = vld [vmem:[%s215 + $0x50] sm:$0xf]
      %v605 = vld [vmem:[%s215 + $0x54] sm:$0xf]
      %v606 = vld [vmem:[%s215 + $0x58] sm:$0xf]
      %v607 = vld [vmem:[%s215 + $0x5c] sm:$0xf]
      %v608 = vld [vmem:[%s215 + $0x60] sm:$0xf]
      %v609 = vld [vmem:[%s215 + $0x64] sm:$0xf]
      %v610 = vld [vmem:[%s215 + $0x68] sm:$0xf]
      %v611 = vld [vmem:[%s215 + $0x6c] sm:$0xf]
      %v612 = vld [vmem:[%s215 + $0x70] sm:$0xf]
      %v613 = vld [vmem:[%s215 + $0x74] sm:$0xf]
      %v614 = vld [vmem:[%s215 + $0x78] sm:$0xf]
      %v615 = vld [vmem:[%s215 + $0x7c] sm:$0xf]
      %v616 = vunpack.c.l.bf16 %v584
      %v617 = vunpack.c.l.bf16 %v585
      %v618 = vunpack.c.l.bf16 %v586
      %v619 = vunpack.c.l.bf16 %v587
      %v620 = vunpack.c.l.bf16 %v588
      %v621 = vunpack.c.l.bf16 %v589
      %v622 = vunpack.c.l.bf16 %v590
      %v623 = vunpack.c.l.bf16 %v591
      %v624 = vunpack.c.l.bf16 %v592
      %v625 = vunpack.c.l.bf16 %v593
      %v626 = vunpack.c.l.bf16 %v594
      %v627 = vunpack.c.l.bf16 %v595
      %v628 = vunpack.c.l.bf16 %v596
      %v629 = vunpack.c.l.bf16 %v597
      %v630 = vunpack.c.l.bf16 %v598
      %v631 = vunpack.c.l.bf16 %v599
      %v632 = vunpack.c.l.bf16 %v600
      %v633 = vunpack.c.l.bf16 %v601
      %v634 = vunpack.c.l.bf16 %v602
      %v635 = vunpack.c.l.bf16 %v603
      %v636 = vunpack.c.l.bf16 %v604
      %v637 = vunpack.c.l.bf16 %v605
      %v638 = vunpack.c.l.bf16 %v606
      %v639 = vunpack.c.l.bf16 %v607
      %v640 = vunpack.c.l.bf16 %v608
      %v641 = vunpack.c.l.bf16 %v609
      %v642 = vunpack.c.l.bf16 %v610
      %v643 = vunpack.c.l.bf16 %v611
      %v644 = vunpack.c.l.bf16 %v612
      %v645 = vunpack.c.l.bf16 %v613
      %v646 = vunpack.c.l.bf16 %v614
      %v647 = vunpack.c.l.bf16 %v615
      %v648 = vadd.f32 %v458, %v616
      %v649 = vadd.f32 %v461, %v617
      %v650 = vadd.f32 %v466, %v618
      %v651 = vadd.f32 %v469, %v619
      %v652 = vadd.f32 %v474, %v620
      %v653 = vadd.f32 %v477, %v621
      %v654 = vadd.f32 %v482, %v622
      %v655 = vadd.f32 %v485, %v623
      %v656 = vadd.f32 %v490, %v624
      %v657 = vadd.f32 %v493, %v625
      %v658 = vadd.f32 %v498, %v626
      %v659 = vadd.f32 %v501, %v627
      %v660 = vadd.f32 %v506, %v628
      %v661 = vadd.f32 %v509, %v629
      %v662 = vadd.f32 %v514, %v630
      %v663 = vadd.f32 %v517, %v631
      %v664 = vadd.f32 %v522, %v632
      %v665 = vadd.f32 %v525, %v633
      %v666 = vadd.f32 %v530, %v634
      %v667 = vadd.f32 %v533, %v635
      %v668 = vadd.f32 %v538, %v636
      %v669 = vadd.f32 %v541, %v637
      %v670 = vadd.f32 %v546, %v638
      %v671 = vadd.f32 %v549, %v639
      %v672 = vadd.f32 %v554, %v640
      %v673 = vadd.f32 %v557, %v641
      %v674 = vadd.f32 %v562, %v642
      %v675 = vadd.f32 %v565, %v643
      %v676 = vadd.f32 %v570, %v644
      %v677 = vadd.f32 %v573, %v645
      %v678 = vadd.f32 %v578, %v646
      %v679 = vadd.f32 %v581, %v647
      %v680 = vpack.c.bf16 %v649, %v648
      %v681 = vpack.c.bf16 %v651, %v650
      %v682 = vpack.c.bf16 %v653, %v652
      %v683 = vpack.c.bf16 %v655, %v654
      %v684 = vpack.c.bf16 %v657, %v656
      %v685 = vpack.c.bf16 %v659, %v658
      %v686 = vpack.c.bf16 %v661, %v660
      %v687 = vpack.c.bf16 %v663, %v662
      %v688 = vpack.c.bf16 %v665, %v664
      %v689 = vpack.c.bf16 %v667, %v666
      %v690 = vpack.c.bf16 %v669, %v668
      %v691 = vpack.c.bf16 %v671, %v670
      %v692 = vpack.c.bf16 %v673, %v672
      %v693 = vpack.c.bf16 %v675, %v674
      %v694 = vpack.c.bf16 %v677, %v676
      %v695 = vpack.c.bf16 %v679, %v678
      %v712 = vunpack.c.l.b16 %v680
      %v713 = vunpack.c.h.b16 %v680
      %v714 = vunpack.c.l.b16 %v681
      %v715 = vunpack.c.h.b16 %v681
      %v716 = vunpack.c.l.b16 %v682
      %v717 = vunpack.c.h.b16 %v682
      %v718 = vunpack.c.l.b16 %v683
      %v719 = vunpack.c.h.b16 %v683
      %v720 = vunpack.c.l.b16 %v684
      %v721 = vunpack.c.h.b16 %v684
      %v722 = vunpack.c.l.b16 %v685
      %v723 = vunpack.c.h.b16 %v685
      %v724 = vunpack.c.l.b16 %v686
      %v725 = vunpack.c.h.b16 %v686
      %v726 = vunpack.c.l.b16 %v687
      %v727 = vunpack.c.h.b16 %v687
      %v728 = vunpack.c.l.b16 %v688
      %v729 = vunpack.c.h.b16 %v688
      %v730 = vunpack.c.l.b16 %v689
      %v731 = vunpack.c.h.b16 %v689
      %v732 = vunpack.c.l.b16 %v690
      %v733 = vunpack.c.h.b16 %v690
      %v734 = vunpack.c.l.b16 %v691
      %v735 = vunpack.c.h.b16 %v691
      %v736 = vunpack.c.l.b16 %v692
      %v737 = vunpack.c.h.b16 %v692
      %v738 = vunpack.c.l.b16 %v693
      %v739 = vunpack.c.h.b16 %v693
      %v740 = vunpack.c.l.b16 %v694
      %v741 = vunpack.c.h.b16 %v694
      %v742 = vunpack.c.l.b16 %v695
      %v743 = vunpack.c.h.b16 %v695
      %v744 = vpack.c.b16 %v712, %v712
      %v745 = vpack.c.b16 %v713, %v713
      %v746 = vpack.c.b16 %v714, %v714
      %v747 = vpack.c.b16 %v715, %v715
      %v748 = vpack.c.b16 %v716, %v716
      %v749 = vpack.c.b16 %v717, %v717
      %v750 = vpack.c.b16 %v718, %v718
      %v751 = vpack.c.b16 %v719, %v719
      %v752 = vpack.c.b16 %v720, %v720
      %v753 = vpack.c.b16 %v721, %v721
      %v754 = vpack.c.b16 %v722, %v722
      %v755 = vpack.c.b16 %v723, %v723
      %v756 = vpack.c.b16 %v724, %v724
      %v757 = vpack.c.b16 %v725, %v725
      %v758 = vpack.c.b16 %v726, %v726
      %v759 = vpack.c.b16 %v727, %v727
      %v760 = vpack.c.b16 %v728, %v728
      %v761 = vpack.c.b16 %v729, %v729
      %v762 = vpack.c.b16 %v730, %v730
      %v763 = vpack.c.b16 %v731, %v731
      %v764 = vpack.c.b16 %v732, %v732
      %v765 = vpack.c.b16 %v733, %v733
      %v766 = vpack.c.b16 %v734, %v734
      %v767 = vpack.c.b16 %v735, %v735
      %v768 = vpack.c.b16 %v736, %v736
      %v769 = vpack.c.b16 %v737, %v737
      %v770 = vpack.c.b16 %v738, %v738
      %v771 = vpack.c.b16 %v739, %v739
      %v772 = vpack.c.b16 %v740, %v740
      %v773 = vpack.c.b16 %v741, %v741
      %v774 = vpack.c.b16 %v742, %v742
      %v775 = vpack.c.b16 %v743, %v743
      %808 = vst [vmem:[%s221] sm:$0xf] %v744
      %809 = vst [vmem:[%s221 + $0x4] sm:$0xf] %v745
      %810 = vst [vmem:[%s221 + $0x8] sm:$0xf] %v746
      %811 = vst [vmem:[%s221 + $0xc] sm:$0xf] %v747
      %812 = vst [vmem:[%s221 + $0x10] sm:$0xf] %v748
      %813 = vst [vmem:[%s221 + $0x14] sm:$0xf] %v749
      %814 = vst [vmem:[%s221 + $0x18] sm:$0xf] %v750
      %815 = vst [vmem:[%s221 + $0x1c] sm:$0xf] %v751
      %816 = vst [vmem:[%s221 + $0x20] sm:$0xf] %v752
      %817 = vst [vmem:[%s221 + $0x24] sm:$0xf] %v753
      %818 = vst [vmem:[%s221 + $0x28] sm:$0xf] %v754
      %819 = vst [vmem:[%s221 + $0x2c] sm:$0xf] %v755
      %820 = vst [vmem:[%s221 + $0x30] sm:$0xf] %v756
      %821 = vst [vmem:[%s221 + $0x34] sm:$0xf] %v757
      %822 = vst [vmem:[%s221 + $0x38] sm:$0xf] %v758
      %823 = vst [vmem:[%s221 + $0x3c] sm:$0xf] %v759
      %824 = vst [vmem:[%s221 + $0x40] sm:$0xf] %v760
      %825 = vst [vmem:[%s221 + $0x44] sm:$0xf] %v761
      %826 = vst [vmem:[%s221 + $0x48] sm:$0xf] %v762
      %827 = vst [vmem:[%s221 + $0x4c] sm:$0xf] %v763
      %828 = vst [vmem:[%s221 + $0x50] sm:$0xf] %v764
      %829 = vst [vmem:[%s221 + $0x54] sm:$0xf] %v765
      %830 = vst [vmem:[%s221 + $0x58] sm:$0xf] %v766
      %831 = vst [vmem:[%s221 + $0x5c] sm:$0xf] %v767
      %832 = vst [vmem:[%s221 + $0x60] sm:$0xf] %v768
      %833 = vst [vmem:[%s221 + $0x64] sm:$0xf] %v769
      %834 = vst [vmem:[%s221 + $0x68] sm:$0xf] %v770
      %835 = vst [vmem:[%s221 + $0x6c] sm:$0xf] %v771
      %836 = vst [vmem:[%s221 + $0x70] sm:$0xf] %v772
      %837 = vst [vmem:[%s221 + $0x74] sm:$0xf] %v773
      %838 = vst [vmem:[%s221 + $0x78] sm:$0xf] %v774
      %839 = vst [vmem:[%s221 + $0x7c] sm:$0xf] %v775
      %s840 = smul.u32 32, %s15
      %p841 = scmp.lt.s32.totalorder %s840, 63
      %s842 = scalar_select %p841, %s840, 63
      %s843 = smul.addr %s842, 4
      %s844 = scalar_lea.vmem %s4, %s843
      // Predicated region
      $region37: #{spatial_prior_adaptor3_forward.6} parent=35 // pred_check
        %p845 = pneg %p127
      $region38: #{spatial_prior_adaptor3_forward.6} parent=35 // pred_check_branch
        %847 = sbr.rel (%p845) target = $region40
      $region39: #{spatial_prior_adaptor3_forward.6} parent=35 // pred_region
        %s848 = smul.u32 32, %s15
      $region40: #{spatial_prior_adaptor3_forward.6} parent=35 // pred_fallthru
        _
    $region36: #{spatial_prior_adaptor3_forward.6} parent=5 // pred_fallthru
      _
    %p849 = scmp.le.s32.totalorder 2, %s10
    // Predicated region
    $region41: #{spatial_prior_adaptor3_forward.6} parent=5 // pred_check
      %p850 = pneg %p849
    $region42: #{spatial_prior_adaptor3_forward.6} parent=5 // pred_check_branch
      %852 = sbr.rel (%p850) target = $region44
    $region43: #{spatial_prior_adaptor3_forward.6} parent=5 // pred_region
      %s853 = ssub.s32 %s10, 2
      // Predicated region
      $region45: #{spatial_prior_adaptor3_forward.6} parent=43 // pred_check
        %p854 = pneg %p133
      $region46: #{spatial_prior_adaptor3_forward.6} parent=43 // pred_check_branch
        %856 = sbr.rel (%p854) target = $region48
      $region47: #{spatial_prior_adaptor3_forward.6} parent=43 // pred_region
        %s857 = smul.u32 32, %s16
        %p858 = scmp.lt.s32.totalorder %s857, 63
        %s859 = scalar_select %p858, %s857, 63
        %s860 = smul.addr %s859, 4
        %s861 = scalar_lea.vmem %s4, %s860
      $region48: #{spatial_prior_adaptor3_forward.6} parent=43 // pred_fallthru
        _
    $region44: #{spatial_prior_adaptor3_forward.6} parent=5 // pred_fallthru
      _
  $region6: #{spatial_prior_adaptor3_forward.6} parent=0 // loop_footer
    %s14 = sadd.s32 1, %s10
  $region7: #{spatial_prior_adaptor3_forward.6} parent=0 // loop_footer_branch
    %9 = sbr.rel target = $region3
  $region8: #{spatial_prior_adaptor3_forward.6} parent=0 // loop_exit
    _

// kernel: spatial_prior_adaptor3_forward.5
$region0: #{spatial_prior_adaptor3_forward.5}
  #allocation0 [shape = 'u32[]', space=smem, size = 0x4, offset = 0x4, fixed_abs, tag = 'smem constant byte address 0x4 - core index']
  #allocation1 [shape = 'u32[144,128]{1,0:T(1,128)}', space=vmem, size = 0x12000, scoped, tag = 'internal scratch']
  %s0 = inlined_call_operand.vmem [shape: bf16[2,18,24,128], index: 0, kind: input, shape index: {}]
  %s1 = inlined_call_operand.vmem [shape: f32[9,128], index: 1, kind: input, shape index: {}]
  %s2 = inlined_call_operand.vmem [shape: f32[1,128], index: 2, kind: input, shape index: {}]
  %s3 = inlined_call_operand.vmem [shape: bf16[2,16,16,128], index: 3, kind: output, shape index: {}]
  %s4 = sld [smem:[#allocation0]]
  $region45: #{spatial_prior_adaptor3_forward.5} parent=0
    _
  %s6 = ssub.s32 1, %s4
  %s7 = scalar_select 0, %s6, %s4
  loop: start=0, step=1, limit=4
  $region2: #{spatial_prior_adaptor3_forward.5} parent=0 // loop_pre_header
    _
  $region3: #{spatial_prior_adaptor3_forward.5} parent=0 // loop_header
    %s9 = sphi 0, %s13
    %p10 = scmp.ge.s32.totalorder %s9, 4
    %s16 = sphi 0, %s28
    %s17 = sphi 0, %s24
    %s18 = sphi 0, %s16
    %s19 = sphi 0, %s17
    %s20 = sphi 0, %s18
    %s21 = sphi 0, %s19
    %s33 = sphi 0, %s35
    %s36 = sphi 0, %s33
    %s37 = sphi 0, %s36
    %s53 = sphi 0, %s37
    %s59 = sphi 0, %s61
    %s62 = sphi 0, %s59
    %s63 = sphi 0, %s62
    %s79 = sphi 0, %s63
    %s85 = sphi 0, %s87
    %s88 = sphi 0, %s85
    %s89 = sphi 0, %s88
    %s105 = sphi 0, %s89
    %s113 = sphi 0, %s115
    %s116 = sphi 0, %s113
    %s117 = sphi 0, %s116
    %s133 = sphi 0, %s117
  $region4: #{spatial_prior_adaptor3_forward.5} parent=0 // loop_header_branch
    %12 = sbr.rel (%p10) target = $region8
  $region5: #{spatial_prior_adaptor3_forward.5} parent=0 // loop_body
    %s14 = ssub.s32 %s9, 1
    %s15 = ssub.s32 %s9, 2
    %s22 = sadd.s32 1, %s17
    %p23 = scmp.ge.s32.totalorder %s22, 1
    %s24 = scalar_select %p23, 0, %s22
    %s25 = sadd.s32 1, %s16
    %s26 = scalar_select %p23, %s25, %s16
    %p27 = scmp.ge.s32.totalorder %s26, 2
    %s28 = scalar_select %p27, 0, %s26
    %s29 = ssub.s32 %s16, %s28
    %s30 = ssub.s32 %s17, %s24
    %s31 = sor.u32 %s29, %s30
    %p32 = scmp.eq.s32.totalorder %s31, 0
    %s34 = sadd.s32 %s33, 1
    %s35 = scalar_select %p32, %s33, %s34
    %p38 = pneg %p32
    %p39 = scmp.eq.s32.totalorder %s9, 1
    %p40 = por %p38, %p39
    %p41 = scmp.ne.s32.totalorder %s33, %s36
    %p42 = scmp.eq.s32.totalorder %s9, 0
    %p43 = por %p41, %p42
    %p44 = scmp.ne.s32.totalorder %s33, %s36
    %p45 = scmp.eq.s32.totalorder %s14, 1
    %p46 = por %p44, %p45
    %p47 = scmp.ne.s32.totalorder %s36, %s37
    %p48 = scmp.eq.s32.totalorder %s14, 0
    %p49 = por %p47, %p48
    %p50 = scmp.ne.s32.totalorder %s36, %s37
    %p51 = scmp.eq.s32.totalorder %s15, 1
    %p52 = por %p50, %p51
    %p54 = scmp.ne.s32.totalorder %s37, %s53
    %p55 = scmp.eq.s32.totalorder %s15, 0
    %p56 = por %p54, %p55
    %s57 = ssub.s32 %s17, %s24
    %p58 = scmp.eq.s32.totalorder %s57, 0
    %s60 = sadd.s32 %s59, 1
    %s61 = scalar_select %p58, %s59, %s60
    %p64 = pneg %p58
    %p65 = scmp.eq.s32.totalorder %s9, 1
    %p66 = por %p64, %p65
    %p67 = scmp.ne.s32.totalorder %s59, %s62
    %p68 = scmp.eq.s32.totalorder %s9, 0
    %p69 = por %p67, %p68
    %p70 = scmp.ne.s32.totalorder %s59, %s62
    %p71 = scmp.eq.s32.totalorder %s14, 1
    %p72 = por %p70, %p71
    %p73 = scmp.ne.s32.totalorder %s62, %s63
    %p74 = scmp.eq.s32.totalorder %s14, 0
    %p75 = por %p73, %p74
    %p76 = scmp.ne.s32.totalorder %s62, %s63
    %p77 = scmp.eq.s32.totalorder %s15, 1
    %p78 = por %p76, %p77
    %p80 = scmp.ne.s32.totalorder %s63, %s79
    %p81 = scmp.eq.s32.totalorder %s15, 0
    %p82 = por %p80, %p81
    %s83 = ssub.s32 %s17, %s24
    %p84 = scmp.eq.s32.totalorder %s83, 0
    %s86 = sadd.s32 %s85, 1
    %s87 = scalar_select %p84, %s85, %s86
    %p90 = pneg %p84
    %p91 = scmp.eq.s32.totalorder %s9, 1
    %p92 = por %p90, %p91
    %p93 = scmp.ne.s32.totalorder %s85, %s88
    %p94 = scmp.eq.s32.totalorder %s9, 0
    %p95 = por %p93, %p94
    %p96 = scmp.ne.s32.totalorder %s85, %s88
    %p97 = scmp.eq.s32.totalorder %s14, 1
    %p98 = por %p96, %p97
    %p99 = scmp.ne.s32.totalorder %s88, %s89
    %p100 = scmp.eq.s32.totalorder %s14, 0
    %p101 = por %p99, %p100
    %p102 = scmp.ne.s32.totalorder %s88, %s89
    %p103 = scmp.eq.s32.totalorder %s15, 1
    %p104 = por %p102, %p103
    %p106 = scmp.ne.s32.totalorder %s89, %s105
    %p107 = scmp.eq.s32.totalorder %s15, 0
    %p108 = por %p106, %p107
    %s109 = ssub.s32 %s16, %s28
    %s110 = ssub.s32 %s17, %s24
    %s111 = sor.u32 %s109, %s110
    %p112 = scmp.eq.s32.totalorder %s111, 0
    %s114 = sadd.s32 %s113, 1
    %s115 = scalar_select %p112, %s113, %s114
    %p118 = pneg %p112
    %p119 = scmp.eq.s32.totalorder %s9, 1
    %p120 = por %p118, %p119
    %p121 = scmp.ne.s32.totalorder %s113, %s116
    %p122 = scmp.eq.s32.totalorder %s9, 0
    %p123 = por %p121, %p122
    %p124 = scmp.ne.s32.totalorder %s113, %s116
    %p125 = scmp.eq.s32.totalorder %s14, 1
    %p126 = por %p124, %p125
    %p127 = scmp.ne.s32.totalorder %s116, %s117
    %p128 = scmp.eq.s32.totalorder %s14, 0
    %p129 = por %p127, %p128
    %p130 = scmp.ne.s32.totalorder %s116, %s117
    %p131 = scmp.eq.s32.totalorder %s15, 1
    %p132 = por %p130, %p131
    %p134 = scmp.ne.s32.totalorder %s117, %s133
    %p135 = scmp.eq.s32.totalorder %s15, 0
    %p136 = por %p134, %p135
    %p137 = scmp.le.s32.totalorder 1, %s9
    %p138 = scmp.lt.s32.totalorder %s9, 3
    %p139 = pnand %p137, %p138
    %p140 = pneg %p139
    // Predicated region
    $region9: #{spatial_prior_adaptor3_forward.5} parent=5 // pred_check
      _
    $region10: #{spatial_prior_adaptor3_forward.5} parent=5 // pred_check_branch
      %142 = sbr.rel (%p139) target = $region12
    $region11: #{spatial_prior_adaptor3_forward.5} parent=5 // pred_region
      %s143 = ssub.s32 %s9, 1
      // Predicated region
      $region13: #{spatial_prior_adaptor3_forward.5} parent=11 // pred_check
        %p144 = pneg %p75
      $region14: #{spatial_prior_adaptor3_forward.5} parent=11 // pred_check_branch
        %146 = sbr.rel (%p144) target = $region16
      $region15: #{spatial_prior_adaptor3_forward.5} parent=11 // pred_region
        %p147 = scmp.lt.s32.totalorder %s19, 0
        %s148 = scalar_select %p147, %s19, 0
        %s149 = smul.addr %s148, 8
        %s150 = scalar_lea.vmem %s1, %s149
      $region16: #{spatial_prior_adaptor3_forward.5} parent=11 // pred_fallthru
        _
      // Predicated region
      $region17: #{spatial_prior_adaptor3_forward.5} parent=11 // pred_check
        %p151 = pneg %p101
      $region18: #{spatial_prior_adaptor3_forward.5} parent=11 // pred_check_branch
        %153 = sbr.rel (%p151) target = $region20
      $region19: #{spatial_prior_adaptor3_forward.5} parent=11 // pred_region
        %p154 = scmp.lt.s32.totalorder %s19, 0
        %s155 = scalar_select %p154, %s19, 0
        %s156 = scalar_lea.vmem %s2, %s155
      $region20: #{spatial_prior_adaptor3_forward.5} parent=11 // pred_fallthru
        _
    $region12: #{spatial_prior_adaptor3_forward.5} parent=5 // pred_fallthru
      _
    %p157 = scmp.lt.s32.totalorder %s9, 2
    // Predicated region
    $region21: #{spatial_prior_adaptor3_forward.5} parent=5 // pred_check
      %p158 = pneg %p157
    $region22: #{spatial_prior_adaptor3_forward.5} parent=5 // pred_check_branch
      %160 = sbr.rel (%p158) target = $region24
    $region23: #{spatial_prior_adaptor3_forward.5} parent=5 // pred_region
      // Predicated region
      $region25: #{spatial_prior_adaptor3_forward.5} parent=23 // pred_check
        %p161 = pneg %p43
      $region26: #{spatial_prior_adaptor3_forward.5} parent=23 // pred_check_branch
        %163 = sbr.rel (%p161) target = $region28
      $region27: #{spatial_prior_adaptor3_forward.5} parent=23 // pred_region
        %p164 = scmp.lt.s32.totalorder %s16, 1
        %s165 = scalar_select %p164, %s16, 1
        %p166 = scmp.lt.s32.totalorder %s17, 0
        %s167 = scalar_select %p166, %s17, 0
        %s168 = smul.addr %s165, 54
        %s169 = sadd.s32 %s167, %s168
        %s170 = smul.addr %s169, 4
        %s171 = scalar_lea.vmem %s0, %s170
      $region28: #{spatial_prior_adaptor3_forward.5} parent=23 // pred_fallthru
        _
    $region24: #{spatial_prior_adaptor3_forward.5} parent=5 // pred_fallthru
      _
    %p172 = scmp.le.s32.totalorder 1, %s9
    %p173 = scmp.lt.s32.totalorder %s9, 3
    %p174 = pnand %p172, %p173
    %p175 = pneg %p174
    // Predicated region
    $region29: #{spatial_prior_adaptor3_forward.5} parent=5 // pred_check
      _
    $region30: #{spatial_prior_adaptor3_forward.5} parent=5 // pred_check_branch
      %177 = sbr.rel (%p174) target = $region32
    $region31: #{spatial_prior_adaptor3_forward.5} parent=5 // pred_region
      %s178 = ssub.s32 %s9, 1
      %p179 = scmp.lt.s32.totalorder %s18, 1
      %s180 = scalar_select %p179, %s18, 1
      %p181 = scmp.lt.s32.totalorder %s19, 0
      %s182 = scalar_select %p181, %s19, 0
      %s183 = smul.addr %s180, 54
      %s184 = sadd.s32 %s182, %s183
      %s185 = smul.addr %s184, 4
      %s186 = scalar_lea.vmem %s0, %s185
      %p187 = pneg %p49
      %p188 = pneg %p46
      %p189 = scmp.lt.s32.totalorder %s19, 0
      %s190 = scalar_select %p189, %s19, 0
      %s191 = smul.addr %s190, 8
      %s192 = scalar_lea.vmem %s1, %s191
      %p193 = pneg %p75
      %p194 = pneg %p72
      %p195 = scmp.lt.s32.totalorder %s19, 0
      %s196 = scalar_select %p195, %s19, 0
      %s197 = scalar_lea.vmem %s2, %s196
      %p198 = pneg %p101
      %p199 = pneg %p98
      %p200 = pneg %p129
      %p201 = pneg %p126
      %p202 = scmp.lt.s32.totalorder %s18, 1
      %s203 = scalar_select %p202, %s18, 1
      %p204 = scmp.lt.s32.totalorder %s19, 0
      %s205 = scalar_select %p204, %s19, 0
      %s206 = smul.addr %s203, 32
      %s207 = sadd.s32 %s205, %s206
      %s208 = smul.addr %s207, 4
      %s209 = scalar_lea.vmem %s3, %s208
      %p210 = scmp.lt.s32.totalorder %s18, 1
      %s211 = scalar_select %p210, %s18, 1
      %p212 = scmp.lt.s32.totalorder %s19, 0
      %s213 = scalar_select %p212, %s19, 0
      %s214 = smul.addr %s211, 54
      %s215 = sadd.s32 %s213, %s214
      %s216 = smul.addr %s215, 4
      %s217 = scalar_lea.vmem %s0, %s216
      %p218 = scmp.lt.s32.totalorder %s19, 0
      %s219 = scalar_select %p218, %s19, 0
      %s220 = smul.addr %s219, 8
      %s221 = scalar_lea.vmem %s1, %s220
      %p222 = scmp.lt.s32.totalorder %s19, 0
      %s223 = scalar_select %p222, %s19, 0
      %s224 = scalar_lea.vmem %s2, %s223
      %p225 = scmp.lt.s32.totalorder %s18, 1
      %s226 = scalar_select %p225, %s18, 1
      %p227 = scmp.lt.s32.totalorder %s19, 0
      %s228 = scalar_select %p227, %s19, 0
      %s229 = smul.addr %s226, 32
      %s230 = sadd.s32 %s228, %s229
      %s231 = smul.addr %s230, 4
      %s232 = scalar_lea.vmem %s3, %s231
      %v233 = vld [vmem:[%s217] sm:$0xf]
      %v234 = vld [vmem:[%s217 + $0x4] sm:$0xf]
      %v235 = vld [vmem:[%s217 + $0x8] sm:$0xf]
      %v236 = vld [vmem:[%s217 + $0xc] sm:$0xf]
      %v237 = vld [vmem:[%s217 + $0x10] sm:$0xf]
      %v238 = vld [vmem:[%s217 + $0x14] sm:$0xf]
      %v239 = vld [vmem:[%s217 + $0x18] sm:$0xf]
      %v240 = vld [vmem:[%s217 + $0x1c] sm:$0xf]
      %v241 = vld [vmem:[%s217 + $0x20] sm:$0xf]
      %v242 = vld [vmem:[%s217 + $0x24] sm:$0xf]
      %v243 = vld [vmem:[%s217 + $0x28] sm:$0xf]
      %v244 = vld [vmem:[%s217 + $0x2c] sm:$0xf]
      %v245 = vld [vmem:[%s217 + $0x30] sm:$0xf]
      %v246 = vld [vmem:[%s217 + $0x34] sm:$0xf]
      %v247 = vld [vmem:[%s217 + $0x38] sm:$0xf]
      %v248 = vld [vmem:[%s217 + $0x3c] sm:$0xf]
      %v249 = vld [vmem:[%s217 + $0x40] sm:$0xf]
      %v250 = vld [vmem:[%s217 + $0x44] sm:$0xf]
      %v251 = vld [vmem:[%s217 + $0x48] sm:$0xf]
      %v252 = vld [vmem:[%s217 + $0x4c] sm:$0xf]
      %v253 = vld [vmem:[%s217 + $0x50] sm:$0xf]
      %v254 = vld [vmem:[%s217 + $0x54] sm:$0xf]
      %v255 = vld [vmem:[%s217 + $0x58] sm:$0xf]
      %v256 = vld [vmem:[%s217 + $0x5c] sm:$0xf]
      %v257 = vld [vmem:[%s217 + $0x60] sm:$0xf]
      %v258 = vld [vmem:[%s217 + $0x64] sm:$0xf]
      %v259 = vld [vmem:[%s217 + $0x68] sm:$0xf]
      %v260 = vld [vmem:[%s217 + $0x6c] sm:$0xf]
      %v261 = vld [vmem:[%s217 + $0x70] sm:$0xf]
      %v262 = vld [vmem:[%s217 + $0x74] sm:$0xf]
      %v263 = vld [vmem:[%s217 + $0x78] sm:$0xf]
      %v264 = vld [vmem:[%s217 + $0x7c] sm:$0xf]
      %v265 = vld [vmem:[%s217 + $0x80] sm:$0xf]
      %v266 = vld [vmem:[%s217 + $0x84] sm:$0xf]
      %v267 = vld [vmem:[%s217 + $0x88] sm:$0xf]
      %v268 = vld [vmem:[%s217 + $0x8c] sm:$0xf]
      %v269 = vld [vmem:[%s217 + $0x90] sm:$0xf]
      %v270 = vld [vmem:[%s217 + $0x94] sm:$0xf]
      %v271 = vld [vmem:[%s217 + $0x98] sm:$0xf]
      %v272 = vld [vmem:[%s217 + $0x9c] sm:$0xf]
      %v273 = vld [vmem:[%s217 + $0xa0] sm:$0xf]
      %v274 = vld [vmem:[%s217 + $0xa4] sm:$0xf]
      %v275 = vld [vmem:[%s217 + $0xa8] sm:$0xf]
      %v276 = vld [vmem:[%s217 + $0xac] sm:$0xf]
      %v277 = vld [vmem:[%s217 + $0xb0] sm:$0xf]
      %v278 = vld [vmem:[%s217 + $0xb4] sm:$0xf]
      %v279 = vld [vmem:[%s217 + $0xb8] sm:$0xf]
      %v280 = vld [vmem:[%s217 + $0xbc] sm:$0xf]
      %v281 = vld [vmem:[%s217 + $0xc0] sm:$0xf]
      %v282 = vld [vmem:[%s217 + $0xc4] sm:$0xf]
      %v283 = vld [vmem:[%s217 + $0xc8] sm:$0xf]
      %v284 = vld [vmem:[%s217 + $0xcc] sm:$0xf]
      %v285 = vld [vmem:[%s217 + $0xd0] sm:$0xf]
      %v286 = vld [vmem:[%s217 + $0xd4] sm:$0xf]
      %v287 = vunpack.c.l.bf16 %v233
      %v288 = vunpack.c.l.bf16 %v234
      %v289 = vunpack.c.l.bf16 %v235
      %v290 = vunpack.c.l.bf16 %v236
      %v291 = vunpack.c.l.bf16 %v237
      %v292 = vunpack.c.l.bf16 %v238
      %v293 = vunpack.c.l.bf16 %v239
      %v294 = vunpack.c.l.bf16 %v240
      %v295 = vunpack.c.l.bf16 %v241
      %v296 = vunpack.c.l.bf16 %v242
      %v297 = vunpack.c.l.bf16 %v243
      %v298 = vunpack.c.l.bf16 %v244
      %v299 = vunpack.c.l.bf16 %v245
      %v300 = vunpack.c.l.bf16 %v246
      %v301 = vunpack.c.l.bf16 %v247
      %v302 = vunpack.c.l.bf16 %v248
      %v303 = vunpack.c.l.bf16 %v249
      %v304 = vunpack.c.l.bf16 %v250
      %v305 = vunpack.c.l.bf16 %v251
      %v306 = vunpack.c.l.bf16 %v252
      %v307 = vunpack.c.l.bf16 %v253
      %v308 = vunpack.c.l.bf16 %v254
      %v309 = vunpack.c.l.bf16 %v255
      %v310 = vunpack.c.l.bf16 %v256
      %v311 = vunpack.c.l.bf16 %v257
      %v312 = vunpack.c.l.bf16 %v258
      %v313 = vunpack.c.l.bf16 %v259
      %v314 = vunpack.c.l.bf16 %v260
      %v315 = vunpack.c.l.bf16 %v261
      %v316 = vunpack.c.l.bf16 %v262
      %v317 = vunpack.c.l.bf16 %v263
      %v318 = vunpack.c.l.bf16 %v264
      %v319 = vunpack.c.l.bf16 %v265
      %v320 = vunpack.c.l.bf16 %v266
      %v321 = vunpack.c.l.bf16 %v267
      %v322 = vunpack.c.l.bf16 %v268
      %v323 = vunpack.c.l.bf16 %v269
      %v324 = vunpack.c.l.bf16 %v270
      %v325 = vunpack.c.l.bf16 %v271
      %v326 = vunpack.c.l.bf16 %v272
      %v327 = vunpack.c.l.bf16 %v273
      %v328 = vunpack.c.l.bf16 %v274
      %v329 = vunpack.c.l.bf16 %v275
      %v330 = vunpack.c.l.bf16 %v276
      %v331 = vunpack.c.l.bf16 %v277
      %v332 = vunpack.c.l.bf16 %v278
      %v333 = vunpack.c.l.bf16 %v279
      %v334 = vunpack.c.l.bf16 %v280
      %v335 = vunpack.c.l.bf16 %v281
      %v336 = vunpack.c.l.bf16 %v282
      %v337 = vunpack.c.l.bf16 %v283
      %v338 = vunpack.c.l.bf16 %v284
      %v339 = vunpack.c.l.bf16 %v285
      %v340 = vunpack.c.l.bf16 %v286
      %v341 = vld [vmem:[%s221] sm:$0xff]
      %v342 = vld [vmem:[%s221 + $0x8] sm:$0x1]
      %v343 = vlaneseq
      %v344 = vshrl.u32 %v343, 7
      %v345 = vsub.s32 0, %v344
      %v346 = vrot.slane %v341, %v345
      %v347 = vmul.f32 %v287, %v346
      %v348 = vmul.f32 %v288, %v346
      %v349 = vmul.f32 %v290, %v346
      %v350 = vmul.f32 %v291, %v346
      %v351 = vmul.f32 %v293, %v346
      %v352 = vmul.f32 %v294, %v346
      %v353 = vmul.f32 %v296, %v346
      %v354 = vmul.f32 %v297, %v346
      %v355 = vmul.f32 %v299, %v346
      %v356 = vmul.f32 %v300, %v346
      %v357 = vmul.f32 %v302, %v346
      %v358 = vmul.f32 %v303, %v346
      %v359 = vmul.f32 %v305, %v346
      %v360 = vmul.f32 %v306, %v346
      %v361 = vmul.f32 %v308, %v346
      %v362 = vmul.f32 %v309, %v346
      %v363 = vmul.f32 %v311, %v346
      %v364 = vmul.f32 %v312, %v346
      %v365 = vmul.f32 %v314, %v346
      %v366 = vmul.f32 %v315, %v346
      %v367 = vmul.f32 %v317, %v346
      %v368 = vmul.f32 %v318, %v346
      %v369 = vmul.f32 %v320, %v346
      %v370 = vmul.f32 %v321, %v346
      %v371 = vmul.f32 %v323, %v346
      %v372 = vmul.f32 %v324, %v346
      %v373 = vmul.f32 %v326, %v346
      %v374 = vmul.f32 %v327, %v346
      %v375 = vmul.f32 %v329, %v346
      %v376 = vmul.f32 %v330, %v346
      %v377 = vmul.f32 %v332, %v346
      %v378 = vmul.f32 %v333, %v346
      %v379 = vadd.f32 %v347, 0.0
      %v380 = vadd.f32 %v348, 0.0
      %v381 = vadd.f32 %v349, 0.0
      %v382 = vadd.f32 %v350, 0.0
      %v383 = vadd.f32 %v351, 0.0
      %v384 = vadd.f32 %v352, 0.0
      %v385 = vadd.f32 %v353, 0.0
      %v386 = vadd.f32 %v354, 0.0
      %v387 = vadd.f32 %v355, 0.0
      %v388 = vadd.f32 %v356, 0.0
      %v389 = vadd.f32 %v357, 0.0
      %v390 = vadd.f32 %v358, 0.0
      %v391 = vadd.f32 %v359, 0.0
      %v392 = vadd.f32 %v360, 0.0
      %v393 = vadd.f32 %v361, 0.0
      %v394 = vadd.f32 %v362, 0.0
      %v395 = vadd.f32 %v363, 0.0
      %v396 = vadd.f32 %v364, 0.0
      %v397 = vadd.f32 %v365, 0.0
      %v398 = vadd.f32 %v366, 0.0
      %v399 = vadd.f32 %v367, 0.0
      %v400 = vadd.f32 %v368, 0.0
      %v401 = vadd.f32 %v369, 0.0
      %v402 = vadd.f32 %v370, 0.0
      %v403 = vadd.f32 %v371, 0.0
      %v404 = vadd.f32 %v372, 0.0
      %v405 = vadd.f32 %v373, 0.0
      %v406 = vadd.f32 %v374, 0.0
      %v407 = vadd.f32 %v375, 0.0
      %v408 = vadd.f32 %v376, 0.0
      %v409 = vadd.f32 %v377, 0.0
      %v410 = vadd.f32 %v378, 0.0
      %v411 = vlaneseq
      %v412 = vshrl.u32 %v411, 7
      %v413 = vsub.s32 1, %v412
      %v414 = vrot.slane %v341, %v413
      %v415 = vmul.f32 %v287, %v414
      %v416 = vmul.f32 %v288, %v414
      %v417 = vmul.f32 %v289, %v414
      %v418 = vmul.f32 %v290, %v414
      %v419 = vmul.f32 %v291, %v414
      %v420 = vmul.f32 %v292, %v414
      %v421 = vmul.f32 %v293, %v414
      %v422 = vmul.f32 %v294, %v414
      %v423 = vmul.f32 %v295, %v414
      %v424 = vmul.f32 %v296, %v414
      %v425 = vmul.f32 %v297, %v414
      %v426 = vmul.f32 %v298, %v414
      %v427 = vmul.f32 %v299, %v414
      %v428 = vmul.f32 %v300, %v414
      %v429 = vmul.f32 %v301, %v414
      %v430 = vmul.f32 %v302, %v414
      %v431 = vmul.f32 %v303, %v414
      %v432 = vmul.f32 %v304, %v414
      %v433 = vmul.f32 %v305, %v414
      %v434 = vmul.f32 %v306, %v414
      %v435 = vmul.f32 %v307, %v414
      %v436 = vmul.f32 %v308, %v414
      %v437 = vmul.f32 %v309, %v414
      %v438 = vmul.f32 %v310, %v414
      %v439 = vmul.f32 %v311, %v414
      %v440 = vmul.f32 %v312, %v414
      %v441 = vmul.f32 %v313, %v414
      %v442 = vmul.f32 %v314, %v414
      %v443 = vmul.f32 %v315, %v414
      %v444 = vmul.f32 %v316, %v414
      %v445 = vmul.f32 %v317, %v414
      %v446 = vmul.f32 %v318, %v414
      %v447 = vmul.f32 %v319, %v414
      %v448 = vmul.f32 %v320, %v414
      %v449 = vmul.f32 %v321, %v414
      %v450 = vmul.f32 %v322, %v414
      %v451 = vmul.f32 %v323, %v414
      %v452 = vmul.f32 %v324, %v414
      %v453 = vmul.f32 %v325, %v414
      %v454 = vmul.f32 %v326, %v414
      %v455 = vmul.f32 %v327, %v414
      %v456 = vmul.f32 %v328, %v414
      %v457 = vmul.f32 %v329, %v414
      %v458 = vmul.f32 %v330, %v414
      %v459 = vmul.f32 %v331, %v414
      %v460 = vmul.f32 %v332, %v414
      %v461 = vmul.f32 %v333, %v414
      %v462 = vmul.f32 %v334, %v414
      %vm511 = vcmask 1046528
      %v512 = vrot.slane %v415, 1
      %v513 = vrot.slane %v416, 1
      %v514 = vsel %vm511, %v512, %v513
      %v515 = vrot.slane %v417, 1
      %v516 = vsel %vm511, %v513, %v515
      %v517 = vrot.slane %v418, 1
      %v518 = vrot.slane %v419, 1
      %v519 = vsel %vm511, %v517, %v518
      %v520 = vrot.slane %v420, 1
      %v521 = vsel %vm511, %v518, %v520
      %v522 = vrot.slane %v421, 1
      %v523 = vrot.slane %v422, 1
      %v524 = vsel %vm511, %v522, %v523
      %v525 = vrot.slane %v423, 1
      %v526 = vsel %vm511, %v523, %v525
      %v527 = vrot.slane %v424, 1
      %v528 = vrot.slane %v425, 1
      %v529 = vsel %vm511, %v527, %v528
      %v530 = vrot.slane %v426, 1
      %v531 = vsel %vm511, %v528, %v530
      %v532 = vrot.slane %v427, 1
      %v533 = vrot.slane %v428, 1
      %v534 = vsel %vm511, %v532, %v533
      %v535 = vrot.slane %v429, 1
      %v536 = vsel %vm511, %v533, %v535
      %v537 = vrot.slane %v430, 1
      %v538 = vrot.slane %v431, 1
      %v539 = vsel %vm511, %v537, %v538
      %v540 = vrot.slane %v432, 1
      %v541 = vsel %vm511, %v538, %v540
      %v542 = vrot.slane %v433, 1
      %v543 = vrot.slane %v434, 1
      %v544 = vsel %vm511, %v542, %v543
      %v545 = vrot.slane %v435, 1
      %v546 = vsel %vm511, %v543, %v545
      %v547 = vrot.slane %v436, 1
      %v548 = vrot.slane %v437, 1
      %v549 = vsel %vm511, %v547, %v548
      %v550 = vrot.slane %v438, 1
      %v551 = vsel %vm511, %v548, %v550
      %v552 = vrot.slane %v439, 1
      %v553 = vrot.slane %v440, 1
      %v554 = vsel %vm511, %v552, %v553
      %v555 = vrot.slane %v441, 1
      %v556 = vsel %vm511, %v553, %v555
      %v557 = vrot.slane %v442, 1
      %v558 = vrot.slane %v443, 1
      %v559 = vsel %vm511, %v557, %v558
      %v560 = vrot.slane %v444, 1
      %v561 = vsel %vm511, %v558, %v560
      %v562 = vrot.slane %v445, 1
      %v563 = vrot.slane %v446, 1
      %v564 = vsel %vm511, %v562, %v563
      %v565 = vrot.slane %v447, 1
      %v566 = vsel %vm511, %v563, %v565
      %v567 = vrot.slane %v448, 1
      %v568 = vrot.slane %v449, 1
      %v569 = vsel %vm511, %v567, %v568
      %v570 = vrot.slane %v450, 1
      %v571 = vsel %vm511, %v568, %v570
      %v572 = vrot.slane %v451, 1
      %v573 = vrot.slane %v452, 1
      %v574 = vsel %vm511, %v572, %v573
      %v575 = vrot.slane %v453, 1
      %v576 = vsel %vm511, %v573, %v575
      %v577 = vrot.slane %v454, 1
      %v578 = vrot.slane %v455, 1
      %v579 = vsel %vm511, %v577, %v578
      %v580 = vrot.slane %v456, 1
      %v581 = vsel %vm511, %v578, %v580
      %v582 = vrot.slane %v457, 1
      %v583 = vrot.slane %v458, 1
      %v584 = vsel %vm511, %v582, %v583
      %v585 = vrot.slane %v459, 1
      %v586 = vsel %vm511, %v583, %v585
      %v587 = vrot.slane %v460, 1
      %v588 = vrot.slane %v461, 1
      %v589 = vsel %vm511, %v587, %v588
      %v590 = vrot.slane %v462, 1
      %v591 = vsel %vm511, %v588, %v590
      %v624 = vadd.f32 %v379, %v514
      %v625 = vadd.f32 %v380, %v516
      %v626 = vadd.f32 %v381, %v519
      %v627 = vadd.f32 %v382, %v521
      %v628 = vadd.f32 %v383, %v524
      %v629 = vadd.f32 %v384, %v526
      %v630 = vadd.f32 %v385, %v529
      %v631 = vadd.f32 %v386, %v531
      %v632 = vadd.f32 %v387, %v534
      %v633 = vadd.f32 %v388, %v536
      %v634 = vadd.f32 %v389, %v539
      %v635 = vadd.f32 %v390, %v541
      %v636 = vadd.f32 %v391, %v544
      %v637 = vadd.f32 %v392, %v546
      %v638 = vadd.f32 %v393, %v549
      %v639 = vadd.f32 %v394, %v551
      %v640 = vadd.f32 %v395, %v554
      %v641 = vadd.f32 %v396, %v556
      %v642 = vadd.f32 %v397, %v559
      %v643 = vadd.f32 %v398, %v561
      %v644 = vadd.f32 %v399, %v564
      %v645 = vadd.f32 %v400, %v566
      %v646 = vadd.f32 %v401, %v569
      %v647 = vadd.f32 %v402, %v571
      %v648 = vadd.f32 %v403, %v574
      %v649 = vadd.f32 %v404, %v576
      %v650 = vadd.f32 %v405, %v579
      %v651 = vadd.f32 %v406, %v581
      %v652 = vadd.f32 %v407, %v584
      %v653 = vadd.f32 %v408, %v586
      %v654 = vadd.f32 %v409, %v589
      %v655 = vadd.f32 %v410, %v591
      %v656 = vlaneseq
      %v657 = vshrl.u32 %v656, 7
      %v658 = vsub.s32 2, %v657
      %v659 = vrot.slane %v341, %v658
      %v660 = vmul.f32 %v287, %v659
      %v661 = vmul.f32 %v288, %v659
      %v662 = vmul.f32 %v289, %v659
      %v663 = vmul.f32 %v290, %v659
      %v664 = vmul.f32 %v291, %v659
      %v665 = vmul.f32 %v292, %v659
      %v666 = vmul.f32 %v293, %v659
      %v667 = vmul.f32 %v294, %v659
      %v668 = vmul.f32 %v295, %v659
      %v669 = vmul.f32 %v296, %v659
      %v670 = vmul.f32 %v297, %v659
      %v671 = vmul.f32 %v298, %v659
      %v672 = vmul.f32 %v299, %v659
      %v673 = vmul.f32 %v300, %v659
      %v674 = vmul.f32 %v301, %v659
      %v675 = vmul.f32 %v302, %v659
      %v676 = vmul.f32 %v303, %v659
      %v677 = vmul.f32 %v304, %v659
      %v678 = vmul.f32 %v305, %v659
      %v679 = vmul.f32 %v306, %v659
      %v680 = vmul.f32 %v307, %v659
      %v681 = vmul.f32 %v308, %v659
      %v682 = vmul.f32 %v309, %v659
      %v683 = vmul.f32 %v310, %v659
      %v684 = vmul.f32 %v311, %v659
      %v685 = vmul.f32 %v312, %v659
      %v686 = vmul.f32 %v313, %v659
      %v687 = vmul.f32 %v314, %v659
      %v688 = vmul.f32 %v315, %v659
      %v689 = vmul.f32 %v316, %v659
      %v690 = vmul.f32 %v317, %v659
      %v691 = vmul.f32 %v318, %v659
      %v692 = vmul.f32 %v319, %v659
      %v693 = vmul.f32 %v320, %v659
      %v694 = vmul.f32 %v321, %v659
      %v695 = vmul.f32 %v322, %v659
      %v696 = vmul.f32 %v323, %v659
      %v697 = vmul.f32 %v324, %v659
      %v698 = vmul.f32 %v325, %v659
      %v699 = vmul.f32 %v326, %v659
      %v700 = vmul.f32 %v327, %v659
      %v701 = vmul.f32 %v328, %v659
      %v702 = vmul.f32 %v329, %v659
      %v703 = vmul.f32 %v330, %v659
      %v704 = vmul.f32 %v331, %v659
      %v705 = vmul.f32 %v332, %v659
      %v706 = vmul.f32 %v333, %v659
      %v707 = vmul.f32 %v334, %v659
      %vm756 = vcmask 1045504
      %v757 = vrot.slane %v660, 2
      %v758 = vrot.slane %v661, 2
      %v759 = vsel %vm756, %v757, %v758
      %v760 = vrot.slane %v662, 2
      %v761 = vsel %vm756, %v758, %v760
      %v762 = vrot.slane %v663, 2
      %v763 = vrot.slane %v664, 2
      %v764 = vsel %vm756, %v762, %v763
      %v765 = vrot.slane %v665, 2
      %v766 = vsel %vm756, %v763, %v765
      %v767 = vrot.slane %v666, 2
      %v768 = vrot.slane %v667, 2
      %v769 = vsel %vm756, %v767, %v768
      %v770 = vrot.slane %v668, 2
      %v771 = vsel %vm756, %v768, %v770
      %v772 = vrot.slane %v669, 2
      %v773 = vrot.slane %v670, 2
      %v774 = vsel %vm756, %v772, %v773
      %v775 = vrot.slane %v671, 2
      %v776 = vsel %vm756, %v773, %v775
      %v777 = vrot.slane %v672, 2
      %v778 = vrot.slane %v673, 2
      %v779 = vsel %vm756, %v777, %v778
      %v780 = vrot.slane %v674, 2
      %v781 = vsel %vm756, %v778, %v780
      %v782 = vrot.slane %v675, 2
      %v783 = vrot.slane %v676, 2
      %v784 = vsel %vm756, %v782, %v783
      %v785 = vrot.slane %v677, 2
      %v786 = vsel %vm756, %v783, %v785
      %v787 = vrot.slane %v678, 2
      %v788 = vrot.slane %v679, 2
      %v789 = vsel %vm756, %v787, %v788
      %v790 = vrot.slane %v680, 2
      %v791 = vsel %vm756, %v788, %v790
      %v792 = vrot.slane %v681, 2
      %v793 = vrot.slane %v682, 2
      %v794 = vsel %vm756, %v792, %v793
      %v795 = vrot.slane %v683, 2
      %v796 = vsel %vm756, %v793, %v795
      %v797 = vrot.slane %v684, 2
      %v798 = vrot.slane %v685, 2
      %v799 = vsel %vm756, %v797, %v798
      %v800 = vrot.slane %v686, 2
      %v801 = vsel %vm756, %v798, %v800
      %v802 = vrot.slane %v687, 2
      %v803 = vrot.slane %v688, 2
      %v804 = vsel %vm756, %v802, %v803
      %v805 = vrot.slane %v689, 2
      %v806 = vsel %vm756, %v803, %v805
      %v807 = vrot.slane %v690, 2
      %v808 = vrot.slane %v691, 2
      %v809 = vsel %vm756, %v807, %v808
      %v810 = vrot.slane %v692, 2
      %v811 = vsel %vm756, %v808, %v810
      %v812 = vrot.slane %v693, 2
      %v813 = vrot.slane %v694, 2
      %v814 = vsel %vm756, %v812, %v813
      %v815 = vrot.slane %v695, 2
      %v816 = vsel %vm756, %v813, %v815
      %v817 = vrot.slane %v696, 2
      %v818 = vrot.slane %v697, 2
      %v819 = vsel %vm756, %v817, %v818
      %v820 = vrot.slane %v698, 2
      %v821 = vsel %vm756, %v818, %v820
      %v822 = vrot.slane %v699, 2
      %v823 = vrot.slane %v700, 2
      %v824 = vsel %vm756, %v822, %v823
      %v825 = vrot.slane %v701, 2
      %v826 = vsel %vm756, %v823, %v825
      %v827 = vrot.slane %v702, 2
      %v828 = vrot.slane %v703, 2
      %v829 = vsel %vm756, %v827, %v828
      %v830 = vrot.slane %v704, 2
      %v831 = vsel %vm756, %v828, %v830
      %v832 = vrot.slane %v705, 2
      %v833 = vrot.slane %v706, 2
      %v834 = vsel %vm756, %v832, %v833
      %v835 = vrot.slane %v707, 2
      %v836 = vsel %vm756, %v833, %v835
      %v869 = vadd.f32 %v624, %v759
      %v870 = vadd.f32 %v625, %v761
      %v871 = vadd.f32 %v626, %v764
      %v872 = vadd.f32 %v627, %v766
      %v873 = vadd.f32 %v628, %v769
      %v874 = vadd.f32 %v629, %v771
      %v875 = vadd.f32 %v630, %v774
      %v876 = vadd.f32 %v631, %v776
      %v877 = vadd.f32 %v632, %v779
      %v878 = vadd.f32 %v633, %v781
      %v879 = vadd.f32 %v634, %v784
      %v880 = vadd.f32 %v635, %v786
      %v881 = vadd.f32 %v636, %v789
      %v882 = vadd.f32 %v637, %v791
      %v883 = vadd.f32 %v638, %v794
      %v884 = vadd.f32 %v639, %v796
      %v885 = vadd.f32 %v640, %v799
      %v886 = vadd.f32 %v641, %v801
      %v887 = vadd.f32 %v642, %v804
      %v888 = vadd.f32 %v643, %v806
      %v889 = vadd.f32 %v644, %v809
      %v890 = vadd.f32 %v645, %v811
      %v891 = vadd.f32 %v646, %v814
      %v892 = vadd.f32 %v647, %v816
      %v893 = vadd.f32 %v648, %v819
      %v894 = vadd.f32 %v649, %v821
      %v895 = vadd.f32 %v650, %v824
      %v896 = vadd.f32 %v651, %v826
      %v897 = vadd.f32 %v652, %v829
      %v898 = vadd.f32 %v653, %v831
      %v899 = vadd.f32 %v654, %v834
      %v900 = vadd.f32 %v655, %v836
      %v901 = vlaneseq
      %v902 = vshrl.u32 %v901, 7
      %v903 = vsub.s32 3, %v902
      %v904 = vrot.slane %v341, %v903
      %v905 = vmul.f32 %v290, %v904
      %v906 = vmul.f32 %v291, %v904
      %v907 = vmul.f32 %v293, %v904
      %v908 = vmul.f32 %v294, %v904
      %v909 = vmul.f32 %v296, %v904
      %v910 = vmul.f32 %v297, %v904
      %v911 = vmul.f32 %v299, %v904
      %v912 = vmul.f32 %v300, %v904
      %v913 = vmul.f32 %v302, %v904
      %v914 = vmul.f32 %v303, %v904
      %v915 = vmul.f32 %v305, %v904
      %v916 = vmul.f32 %v306, %v904
      %v917 = vmul.f32 %v308, %v904
      %v918 = vmul.f32 %v309, %v904
      %v919 = vmul.f32 %v311, %v904
      %v920 = vmul.f32 %v312, %v904
      %v921 = vmul.f32 %v314, %v904
      %v922 = vmul.f32 %v315, %v904
      %v923 = vmul.f32 %v317, %v904
      %v924 = vmul.f32 %v318, %v904
      %v925 = vmul.f32 %v320, %v904
      %v926 = vmul.f32 %v321, %v904
      %v927 = vmul.f32 %v323, %v904
      %v928 = vmul.f32 %v324, %v904
      %v929 = vmul.f32 %v326, %v904
      %v930 = vmul.f32 %v327, %v904
      %v931 = vmul.f32 %v329, %v904
      %v932 = vmul.f32 %v330, %v904
      %v933 = vmul.f32 %v332, %v904
      %v934 = vmul.f32 %v333, %v904
      %v935 = vmul.f32 %v335, %v904
      %v936 = vmul.f32 %v336, %v904
      %v937 = vadd.f32 %v869, %v905
      %v938 = vadd.f32 %v870, %v906
      %v939 = vadd.f32 %v871, %v907
      %v940 = vadd.f32 %v872, %v908
      %v941 = vadd.f32 %v873, %v909
      %v942 = vadd.f32 %v874, %v910
      %v943 = vadd.f32 %v875, %v911
      %v944 = vadd.f32 %v876, %v912
      %v945 = vadd.f32 %v877, %v913
      %v946 = vadd.f32 %v878, %v914
      %v947 = vadd.f32 %v879, %v915
      %v948 = vadd.f32 %v880, %v916
      %v949 = vadd.f32 %v881, %v917
      %v950 = vadd.f32 %v882, %v918
      %v951 = vadd.f32 %v883, %v919
      %v952 = vadd.f32 %v884, %v920
      %v953 = vadd.f32 %v885, %v921
      %v954 = vadd.f32 %v886, %v922
      %v955 = vadd.f32 %v887, %v923
      %v956 = vadd.f32 %v888, %v924
      %v957 = vadd.f32 %v889, %v925
      %v958 = vadd.f32 %v890, %v926
      %v959 = vadd.f32 %v891, %v927
      %v960 = vadd.f32 %v892, %v928
      %v961 = vadd.f32 %v893, %v929
      %v962 = vadd.f32 %v894, %v930
      %v963 = vadd.f32 %v895, %v931
      %v964 = vadd.f32 %v896, %v932
      %v965 = vadd.f32 %v897, %v933
      %v966 = vadd.f32 %v898, %v934
      %v967 = vadd.f32 %v899, %v935
      %v968 = vadd.f32 %v900, %v936
      %v969 = vlaneseq
      %v970 = vshrl.u32 %v969, 7
      %v971 = vsub.s32 4, %v970
      %v972 = vrot.slane %v341, %v971
      %v973 = vmul.f32 %v290, %v972
      %v974 = vmul.f32 %v291, %v972
      %v975 = vmul.f32 %v292, %v972
      %v976 = vmul.f32 %v293, %v972
      %v977 = vmul.f32 %v294, %v972
      %v978 = vmul.f32 %v295, %v972
      %v979 = vmul.f32 %v296, %v972
      %v980 = vmul.f32 %v297, %v972
      %v981 = vmul.f32 %v298, %v972
      %v982 = vmul.f32 %v299, %v972
      %v983 = vmul.f32 %v300, %v972
      %v984 = vmul.f32 %v301, %v972
      %v985 = vmul.f32 %v302, %v972
      %v986 = vmul.f32 %v303, %v972
      %v987 = vmul.f32 %v304, %v972
      %v988 = vmul.f32 %v305, %v972
      %v989 = vmul.f32 %v306, %v972
      %v990 = vmul.f32 %v307, %v972
      %v991 = vmul.f32 %v308, %v972
      %v992 = vmul.f32 %v309, %v972
      %v993 = vmul.f32 %v310, %v972
      %v994 = vmul.f32 %v311, %v972
      %v995 = vmul.f32 %v312, %v972
      %v996 = vmul.f32 %v313, %v972
      %v997 = vmul.f32 %v314, %v972
      %v998 = vmul.f32 %v315, %v972
      %v999 = vmul.f32 %v316, %v972
      %v1000 = vmul.f32 %v317, %v972
      %v1001 = vmul.f32 %v318, %v972
      %v1002 = vmul.f32 %v319, %v972
      %v1003 = vmul.f32 %v320, %v972
      %v1004 = vmul.f32 %v321, %v972
      %v1005 = vmul.f32 %v322, %v972
      %v1006 = vmul.f32 %v323, %v972
      %v1007 = vmul.f32 %v324, %v972
      %v1008 = vmul.f32 %v325, %v972
      %v1009 = vmul.f32 %v326, %v972
      %v1010 = vmul.f32 %v327, %v972
      %v1011 = vmul.f32 %v328, %v972
      %v1012 = vmul.f32 %v329, %v972
      %v1013 = vmul.f32 %v330, %v972
      %v1014 = vmul.f32 %v331, %v972
      %v1015 = vmul.f32 %v332, %v972
      %v1016 = vmul.f32 %v333, %v972
      %v1017 = vmul.f32 %v334, %v972
      %v1018 = vmul.f32 %v335, %v972
      %v1019 = vmul.f32 %v336, %v972
      %v1020 = vmul.f32 %v337, %v972
      %v1069 = vrot.slane %v973, 1
      %v1070 = vrot.slane %v974, 1
      %v1071 = vsel %vm511, %v1069, %v1070
      %v1072 = vrot.slane %v975, 1
      %v1073 = vsel %vm511, %v1070, %v1072
      %v1074 = vrot.slane %v976, 1
      %v1075 = vrot.slane %v977, 1
      %v1076 = vsel %vm511, %v1074, %v1075
      %v1077 = vrot.slane %v978, 1
      %v1078 = vsel %vm511, %v1075, %v1077
      %v1079 = vrot.slane %v979, 1
      %v1080 = vrot.slane %v980, 1
      %v1081 = vsel %vm511, %v1079, %v1080
      %v1082 = vrot.slane %v981, 1
      %v1083 = vsel %vm511, %v1080, %v1082
      %v1084 = vrot.slane %v982, 1
      %v1085 = vrot.slane %v983, 1
      %v1086 = vsel %vm511, %v1084, %v1085
      %v1087 = vrot.slane %v984, 1
      %v1088 = vsel %vm511, %v1085, %v1087
      %v1089 = vrot.slane %v985, 1
      %v1090 = vrot.slane %v986, 1
      %v1091 = vsel %vm511, %v1089, %v1090
      %v1092 = vrot.slane %v987, 1
      %v1093 = vsel %vm511, %v1090, %v1092
      %v1094 = vrot.slane %v988, 1
      %v1095 = vrot.slane %v989, 1
      %v1096 = vsel %vm511, %v1094, %v1095
      %v1097 = vrot.slane %v990, 1
      %v1098 = vsel %vm511, %v1095, %v1097
      %v1099 = vrot.slane %v991, 1
      %v1100 = vrot.slane %v992, 1
      %v1101 = vsel %vm511, %v1099, %v1100
      %v1102 = vrot.slane %v993, 1
      %v1103 = vsel %vm511, %v1100, %v1102
      %v1104 = vrot.slane %v994, 1
      %v1105 = vrot.slane %v995, 1
      %v1106 = vsel %vm511, %v1104, %v1105
      %v1107 = vrot.slane %v996, 1
      %v1108 = vsel %vm511, %v1105, %v1107
      %v1109 = vrot.slane %v997, 1
      %v1110 = vrot.slane %v998, 1
      %v1111 = vsel %vm511, %v1109, %v1110
      %v1112 = vrot.slane %v999, 1
      %v1113 = vsel %vm511, %v1110, %v1112
      %v1114 = vrot.slane %v1000, 1
      %v1115 = vrot.slane %v1001, 1
      %v1116 = vsel %vm511, %v1114, %v1115
      %v1117 = vrot.slane %v1002, 1
      %v1118 = vsel %vm511, %v1115, %v1117
      %v1119 = vrot.slane %v1003, 1
      %v1120 = vrot.slane %v1004, 1
      %v1121 = vsel %vm511, %v1119, %v1120
      %v1122 = vrot.slane %v1005, 1
      %v1123 = vsel %vm511, %v1120, %v1122
      %v1124 = vrot.slane %v1006, 1
      %v1125 = vrot.slane %v1007, 1
      %v1126 = vsel %vm511, %v1124, %v1125
      %v1127 = vrot.slane %v1008, 1
      %v1128 = vsel %vm511, %v1125, %v1127
      %v1129 = vrot.slane %v1009, 1
      %v1130 = vrot.slane %v1010, 1
      %v1131 = vsel %vm511, %v1129, %v1130
      %v1132 = vrot.slane %v1011, 1
      %v1133 = vsel %vm511, %v1130, %v1132
      %v1134 = vrot.slane %v1012, 1
      %v1135 = vrot.slane %v1013, 1
      %v1136 = vsel %vm511, %v1134, %v1135
      %v1137 = vrot.slane %v1014, 1
      %v1138 = vsel %vm511, %v1135, %v1137
      %v1139 = vrot.slane %v1015, 1
      %v1140 = vrot.slane %v1016, 1
      %v1141 = vsel %vm511, %v1139, %v1140
      %v1142 = vrot.slane %v1017, 1
      %v1143 = vsel %vm511, %v1140, %v1142
      %v1144 = vrot.slane %v1018, 1
      %v1145 = vrot.slane %v1019, 1
      %v1146 = vsel %vm511, %v1144, %v1145
      %v1147 = vrot.slane %v1020, 1
      %v1148 = vsel %vm511, %v1145, %v1147
      %v1181 = vadd.f32 %v937, %v1071
      %v1182 = vadd.f32 %v938, %v1073
      %v1183 = vadd.f32 %v939, %v1076
      %v1184 = vadd.f32 %v940, %v1078
      %v1185 = vadd.f32 %v941, %v1081
      %v1186 = vadd.f32 %v942, %v1083
      %v1187 = vadd.f32 %v943, %v1086
      %v1188 = vadd.f32 %v944, %v1088
      %v1189 = vadd.f32 %v945, %v1091
      %v1190 = vadd.f32 %v946, %v1093
      %v1191 = vadd.f32 %v947, %v1096
      %v1192 = vadd.f32 %v948, %v1098
      %v1193 = vadd.f32 %v949, %v1101
      %v1194 = vadd.f32 %v950, %v1103
      %v1195 = vadd.f32 %v951, %v1106
      %v1196 = vadd.f32 %v952, %v1108
      %v1197 = vadd.f32 %v953, %v1111
      %v1198 = vadd.f32 %v954, %v1113
      %v1199 = vadd.f32 %v955, %v1116
      %v1200 = vadd.f32 %v956, %v1118
      %v1201 = vadd.f32 %v957, %v1121
      %v1202 = vadd.f32 %v958, %v1123
      %v1203 = vadd.f32 %v959, %v1126
      %v1204 = vadd.f32 %v960, %v1128
      %v1205 = vadd.f32 %v961, %v1131
      %v1206 = vadd.f32 %v962, %v1133
      %v1207 = vadd.f32 %v963, %v1136
      %v1208 = vadd.f32 %v964, %v1138
      %v1209 = vadd.f32 %v965, %v1141
      %v1210 = vadd.f32 %v966, %v1143
      %v1211 = vadd.f32 %v967, %v1146
      %v1212 = vadd.f32 %v968, %v1148
      %v1213 = vlaneseq
      %v1214 = vshrl.u32 %v1213, 7
      %v1215 = vsub.s32 5, %v1214
      %v1216 = vrot.slane %v341, %v1215
      %v1217 = vmul.f32 %v290, %v1216
      %v1218 = vmul.f32 %v291, %v1216
      %v1219 = vmul.f32 %v292, %v1216
      %v1220 = vmul.f32 %v293, %v1216
      %v1221 = vmul.f32 %v294, %v1216
      %v1222 = vmul.f32 %v295, %v1216
      %v1223 = vmul.f32 %v296, %v1216
      %v1224 = vmul.f32 %v297, %v1216
      %v1225 = vmul.f32 %v298, %v1216
      %v1226 = vmul.f32 %v299, %v1216
      %v1227 = vmul.f32 %v300, %v1216
      %v1228 = vmul.f32 %v301, %v1216
      %v1229 = vmul.f32 %v302, %v1216
      %v1230 = vmul.f32 %v303, %v1216
      %v1231 = vmul.f32 %v304, %v1216
      %v1232 = vmul.f32 %v305, %v1216
      %v1233 = vmul.f32 %v306, %v1216
      %v1234 = vmul.f32 %v307, %v1216
      %v1235 = vmul.f32 %v308, %v1216
      %v1236 = vmul.f32 %v309, %v1216
      %v1237 = vmul.f32 %v310, %v1216
      %v1238 = vmul.f32 %v311, %v1216
      %v1239 = vmul.f32 %v312, %v1216
      %v1240 = vmul.f32 %v313, %v1216
      %v1241 = vmul.f32 %v314, %v1216
      %v1242 = vmul.f32 %v315, %v1216
      %v1243 = vmul.f32 %v316, %v1216
      %v1244 = vmul.f32 %v317, %v1216
      %v1245 = vmul.f32 %v318, %v1216
      %v1246 = vmul.f32 %v319, %v1216
      %v1247 = vmul.f32 %v320, %v1216
      %v1248 = vmul.f32 %v321, %v1216
      %v1249 = vmul.f32 %v322, %v1216
      %v1250 = vmul.f32 %v323, %v1216
      %v1251 = vmul.f32 %v324, %v1216
      %v1252 = vmul.f32 %v325, %v1216
      %v1253 = vmul.f32 %v326, %v1216
      %v1254 = vmul.f32 %v327, %v1216
      %v1255 = vmul.f32 %v328, %v1216
      %v1256 = vmul.f32 %v329, %v1216
      %v1257 = vmul.f32 %v330, %v1216
      %v1258 = vmul.f32 %v331, %v1216
      %v1259 = vmul.f32 %v332, %v1216
      %v1260 = vmul.f32 %v333, %v1216
      %v1261 = vmul.f32 %v334, %v1216
      %v1262 = vmul.f32 %v335, %v1216
      %v1263 = vmul.f32 %v336, %v1216
      %v1264 = vmul.f32 %v337, %v1216
      %v1313 = vrot.slane %v1217, 2
      %v1314 = vrot.slane %v1218, 2
      %v1315 = vsel %vm756, %v1313, %v1314
      %v1316 = vrot.slane %v1219, 2
      %v1317 = vsel %vm756, %v1314, %v1316
      %v1318 = vrot.slane %v1220, 2
      %v1319 = vrot.slane %v1221, 2
      %v1320 = vsel %vm756, %v1318, %v1319
      %v1321 = vrot.slane %v1222, 2
      %v1322 = vsel %vm756, %v1319, %v1321
      %v1323 = vrot.slane %v1223, 2
      %v1324 = vrot.slane %v1224, 2
      %v1325 = vsel %vm756, %v1323, %v1324
      %v1326 = vrot.slane %v1225, 2
      %v1327 = vsel %vm756, %v1324, %v1326
      %v1328 = vrot.slane %v1226, 2
      %v1329 = vrot.slane %v1227, 2
      %v1330 = vsel %vm756, %v1328, %v1329
      %v1331 = vrot.slane %v1228, 2
      %v1332 = vsel %vm756, %v1329, %v1331
      %v1333 = vrot.slane %v1229, 2
      %v1334 = vrot.slane %v1230, 2
      %v1335 = vsel %vm756, %v1333, %v1334
      %v1336 = vrot.slane %v1231, 2
      %v1337 = vsel %vm756, %v1334, %v1336
      %v1338 = vrot.slane %v1232, 2
      %v1339 = vrot.slane %v1233, 2
      %v1340 = vsel %vm756, %v1338, %v1339
      %v1341 = vrot.slane %v1234, 2
      %v1342 = vsel %vm756, %v1339, %v1341
      %v1343 = vrot.slane %v1235, 2
      %v1344 = vrot.slane %v1236, 2
      %v1345 = vsel %vm756, %v1343, %v1344
      %v1346 = vrot.slane %v1237, 2
      %v1347 = vsel %vm756, %v1344, %v1346
      %v1348 = vrot.slane %v1238, 2
      %v1349 = vrot.slane %v1239, 2
      %v1350 = vsel %vm756, %v1348, %v1349
      %v1351 = vrot.slane %v1240, 2
      %v1352 = vsel %vm756, %v1349, %v1351
      %v1353 = vrot.slane %v1241, 2
      %v1354 = vrot.slane %v1242, 2
      %v1355 = vsel %vm756, %v1353, %v1354
      %v1356 = vrot.slane %v1243, 2
      %v1357 = vsel %vm756, %v1354, %v1356
      %v1358 = vrot.slane %v1244, 2
      %v1359 = vrot.slane %v1245, 2
      %v1360 = vsel %vm756, %v1358, %v1359
      %v1361 = vrot.slane %v1246, 2
      %v1362 = vsel %vm756, %v1359, %v1361
      %v1363 = vrot.slane %v1247, 2
      %v1364 = vrot.slane %v1248, 2
      %v1365 = vsel %vm756, %v1363, %v1364
      %v1366 = vrot.slane %v1249, 2
      %v1367 = vsel %vm756, %v1364, %v1366
      %v1368 = vrot.slane %v1250, 2
      %v1369 = vrot.slane %v1251, 2
      %v1370 = vsel %vm756, %v1368, %v1369
      %v1371 = vrot.slane %v1252, 2
      %v1372 = vsel %vm756, %v1369, %v1371
      %v1373 = vrot.slane %v1253, 2
      %v1374 = vrot.slane %v1254, 2
      %v1375 = vsel %vm756, %v1373, %v1374
      %v1376 = vrot.slane %v1255, 2
      %v1377 = vsel %vm756, %v1374, %v1376
      %v1378 = vrot.slane %v1256, 2
      %v1379 = vrot.slane %v1257, 2
      %v1380 = vsel %vm756, %v1378, %v1379
      %v1381 = vrot.slane %v1258, 2
      %v1382 = vsel %vm756, %v1379, %v1381
      %v1383 = vrot.slane %v1259, 2
      %v1384 = vrot.slane %v1260, 2
      %v1385 = vsel %vm756, %v1383, %v1384
      %v1386 = vrot.slane %v1261, 2
      %v1387 = vsel %vm756, %v1384, %v1386
      %v1388 = vrot.slane %v1262, 2
      %v1389 = vrot.slane %v1263, 2
      %v1390 = vsel %vm756, %v1388, %v1389
      %v1391 = vrot.slane %v1264, 2
      %v1392 = vsel %vm756, %v1389, %v1391
      %v1425 = vadd.f32 %v1181, %v1315
      %v1426 = vadd.f32 %v1182, %v1317
      %v1427 = vadd.f32 %v1183, %v1320
      %v1428 = vadd.f32 %v1184, %v1322
      %v1429 = vadd.f32 %v1185, %v1325
      %v1430 = vadd.f32 %v1186, %v1327
      %v1431 = vadd.f32 %v1187, %v1330
      %v1432 = vadd.f32 %v1188, %v1332
      %v1433 = vadd.f32 %v1189, %v1335
      %v1434 = vadd.f32 %v1190, %v1337
      %v1435 = vadd.f32 %v1191, %v1340
      %v1436 = vadd.f32 %v1192, %v1342
      %v1437 = vadd.f32 %v1193, %v1345
      %v1438 = vadd.f32 %v1194, %v1347
      %v1439 = vadd.f32 %v1195, %v1350
      %v1440 = vadd.f32 %v1196, %v1352
      %v1441 = vadd.f32 %v1197, %v1355
      %v1442 = vadd.f32 %v1198, %v1357
      %v1443 = vadd.f32 %v1199, %v1360
      %v1444 = vadd.f32 %v1200, %v1362
      %v1445 = vadd.f32 %v1201, %v1365
      %v1446 = vadd.f32 %v1202, %v1367
      %v1447 = vadd.f32 %v1203, %v1370
      %v1448 = vadd.f32 %v1204, %v1372
      %v1449 = vadd.f32 %v1205, %v1375
      %v1450 = vadd.f32 %v1206, %v1377
      %v1451 = vadd.f32 %v1207, %v1380
      %v1452 = vadd.f32 %v1208, %v1382
      %v1453 = vadd.f32 %v1209, %v1385
      %v1454 = vadd.f32 %v1210, %v1387
      %v1455 = vadd.f32 %v1211, %v1390
      %v1456 = vadd.f32 %v1212, %v1392
      %v1457 = vlaneseq
      %v1458 = vshrl.u32 %v1457, 7
      %v1459 = vsub.s32 6, %v1458
      %v1460 = vrot.slane %v341, %v1459
      %v1461 = vmul.f32 %v293, %v1460
      %v1462 = vmul.f32 %v294, %v1460
      %v1463 = vmul.f32 %v296, %v1460
      %v1464 = vmul.f32 %v297, %v1460
      %v1465 = vmul.f32 %v299, %v1460
      %v1466 = vmul.f32 %v300, %v1460
      %v1467 = vmul.f32 %v302, %v1460
      %v1468 = vmul.f32 %v303, %v1460
      %v1469 = vmul.f32 %v305, %v1460
      %v1470 = vmul.f32 %v306, %v1460
      %v1471 = vmul.f32 %v308, %v1460
      %v1472 = vmul.f32 %v309, %v1460
      %v1473 = vmul.f32 %v311, %v1460
      %v1474 = vmul.f32 %v312, %v1460
      %v1475 = vmul.f32 %v314, %v1460
      %v1476 = vmul.f32 %v315, %v1460
      %v1477 = vmul.f32 %v317, %v1460
      %v1478 = vmul.f32 %v318, %v1460
      %v1479 = vmul.f32 %v320, %v1460
      %v1480 = vmul.f32 %v321, %v1460
      %v1481 = vmul.f32 %v323, %v1460
      %v1482 = vmul.f32 %v324, %v1460
      %v1483 = vmul.f32 %v326, %v1460
      %v1484 = vmul.f32 %v327, %v1460
      %v1485 = vmul.f32 %v329, %v1460
      %v1486 = vmul.f32 %v330, %v1460
      %v1487 = vmul.f32 %v332, %v1460
      %v1488 = vmul.f32 %v333, %v1460
      %v1489 = vmul.f32 %v335, %v1460
      %v1490 = vmul.f32 %v336, %v1460
      %v1491 = vmul.f32 %v338, %v1460
      %v1492 = vmul.f32 %v339, %v1460
      %v1493 = vadd.f32 %v1425, %v1461
      %v1494 = vadd.f32 %v1426, %v1462
      %v1495 = vadd.f32 %v1427, %v1463
      %v1496 = vadd.f32 %v1428, %v1464
      %v1497 = vadd.f32 %v1429, %v1465
      %v1498 = vadd.f32 %v1430, %v1466
      %v1499 = vadd.f32 %v1431, %v1467
      %v1500 = vadd.f32 %v1432, %v1468
      %v1501 = vadd.f32 %v1433, %v1469
      %v1502 = vadd.f32 %v1434, %v1470
      %v1503 = vadd.f32 %v1435, %v1471
      %v1504 = vadd.f32 %v1436, %v1472
      %v1505 = vadd.f32 %v1437, %v1473
      %v1506 = vadd.f32 %v1438, %v1474
      %v1507 = vadd.f32 %v1439, %v1475
      %v1508 = vadd.f32 %v1440, %v1476
      %v1509 = vadd.f32 %v1441, %v1477
      %v1510 = vadd.f32 %v1442, %v1478
      %v1511 = vadd.f32 %v1443, %v1479
      %v1512 = vadd.f32 %v1444, %v1480
      %v1513 = vadd.f32 %v1445, %v1481
      %v1514 = vadd.f32 %v1446, %v1482
      %v1515 = vadd.f32 %v1447, %v1483
      %v1516 = vadd.f32 %v1448, %v1484
      %v1517 = vadd.f32 %v1449, %v1485
      %v1518 = vadd.f32 %v1450, %v1486
      %v1519 = vadd.f32 %v1451, %v1487
      %v1520 = vadd.f32 %v1452, %v1488
      %v1521 = vadd.f32 %v1453, %v1489
      %v1522 = vadd.f32 %v1454, %v1490
      %v1523 = vadd.f32 %v1455, %v1491
      %v1524 = vadd.f32 %v1456, %v1492
      %v1525 = vlaneseq
      %v1526 = vshrl.u32 %v1525, 7
      %v1527 = vsub.s32 7, %v1526
      %v1528 = vrot.slane %v341, %v1527
      %v1529 = vmul.f32 %v293, %v1528
      %v1530 = vmul.f32 %v294, %v1528
      %v1531 = vmul.f32 %v295, %v1528
      %v1532 = vmul.f32 %v296, %v1528
      %v1533 = vmul.f32 %v297, %v1528
      %v1534 = vmul.f32 %v298, %v1528
      %v1535 = vmul.f32 %v299, %v1528
      %v1536 = vmul.f32 %v300, %v1528
      %v1537 = vmul.f32 %v301, %v1528
      %v1538 = vmul.f32 %v302, %v1528
      %v1539 = vmul.f32 %v303, %v1528
      %v1540 = vmul.f32 %v304, %v1528
      %v1541 = vmul.f32 %v305, %v1528
      %v1542 = vmul.f32 %v306, %v1528
      %v1543 = vmul.f32 %v307, %v1528
      %v1544 = vmul.f32 %v308, %v1528
      %v1545 = vmul.f32 %v309, %v1528
      %v1546 = vmul.f32 %v310, %v1528
      %v1547 = vmul.f32 %v311, %v1528
      %v1548 = vmul.f32 %v312, %v1528
      %v1549 = vmul.f32 %v313, %v1528
      %v1550 = vmul.f32 %v314, %v1528
      %v1551 = vmul.f32 %v315, %v1528
      %v1552 = vmul.f32 %v316, %v1528
      %v1553 = vmul.f32 %v317, %v1528
      %v1554 = vmul.f32 %v318, %v1528
      %v1555 = vmul.f32 %v319, %v1528
      %v1556 = vmul.f32 %v320, %v1528
      %v1557 = vmul.f32 %v321, %v1528
      %v1558 = vmul.f32 %v322, %v1528
      %v1559 = vmul.f32 %v323, %v1528
      %v1560 = vmul.f32 %v324, %v1528
      %v1561 = vmul.f32 %v325, %v1528
      %v1562 = vmul.f32 %v326, %v1528
      %v1563 = vmul.f32 %v327, %v1528
      %v1564 = vmul.f32 %v328, %v1528
      %v1565 = vmul.f32 %v329, %v1528
      %v1566 = vmul.f32 %v330, %v1528
      %v1567 = vmul.f32 %v331, %v1528
      %v1568 = vmul.f32 %v332, %v1528
      %v1569 = vmul.f32 %v333, %v1528
      %v1570 = vmul.f32 %v334, %v1528
      %v1571 = vmul.f32 %v335, %v1528
      %v1572 = vmul.f32 %v336, %v1528
      %v1573 = vmul.f32 %v337, %v1528
      %v1574 = vmul.f32 %v338, %v1528
      %v1575 = vmul.f32 %v339, %v1528
      %v1576 = vmul.f32 %v340, %v1528
      %v1625 = vrot.slane %v1529, 1
      %v1626 = vrot.slane %v1530, 1
      %v1627 = vsel %vm511, %v1625, %v1626
      %v1628 = vrot.slane %v1531, 1
      %v1629 = vsel %vm511, %v1626, %v1628
      %v1630 = vrot.slane %v1532, 1
      %v1631 = vrot.slane %v1533, 1
      %v1632 = vsel %vm511, %v1630, %v1631
      %v1633 = vrot.slane %v1534, 1
      %v1634 = vsel %vm511, %v1631, %v1633
      %v1635 = vrot.slane %v1535, 1
      %v1636 = vrot.slane %v1536, 1
      %v1637 = vsel %vm511, %v1635, %v1636
      %v1638 = vrot.slane %v1537, 1
      %v1639 = vsel %vm511, %v1636, %v1638
      %v1640 = vrot.slane %v1538, 1
      %v1641 = vrot.slane %v1539, 1
      %v1642 = vsel %vm511, %v1640, %v1641
      %v1643 = vrot.slane %v1540, 1
      %v1644 = vsel %vm511, %v1641, %v1643
      %v1645 = vrot.slane %v1541, 1
      %v1646 = vrot.slane %v1542, 1
      %v1647 = vsel %vm511, %v1645, %v1646
      %v1648 = vrot.slane %v1543, 1
      %v1649 = vsel %vm511, %v1646, %v1648
      %v1650 = vrot.slane %v1544, 1
      %v1651 = vrot.slane %v1545, 1
      %v1652 = vsel %vm511, %v1650, %v1651
      %v1653 = vrot.slane %v1546, 1
      %v1654 = vsel %vm511, %v1651, %v1653
      %v1655 = vrot.slane %v1547, 1
      %v1656 = vrot.slane %v1548, 1
      %v1657 = vsel %vm511, %v1655, %v1656
      %v1658 = vrot.slane %v1549, 1
      %v1659 = vsel %vm511, %v1656, %v1658
      %v1660 = vrot.slane %v1550, 1
      %v1661 = vrot.slane %v1551, 1
      %v1662 = vsel %vm511, %v1660, %v1661
      %v1663 = vrot.slane %v1552, 1
      %v1664 = vsel %vm511, %v1661, %v1663
      %v1665 = vrot.slane %v1553, 1
      %v1666 = vrot.slane %v1554, 1
      %v1667 = vsel %vm511, %v1665, %v1666
      %v1668 = vrot.slane %v1555, 1
      %v1669 = vsel %vm511, %v1666, %v1668
      %v1670 = vrot.slane %v1556, 1
      %v1671 = vrot.slane %v1557, 1
      %v1672 = vsel %vm511, %v1670, %v1671
      %v1673 = vrot.slane %v1558, 1
      %v1674 = vsel %vm511, %v1671, %v1673
      %v1675 = vrot.slane %v1559, 1
      %v1676 = vrot.slane %v1560, 1
      %v1677 = vsel %vm511, %v1675, %v1676
      %v1678 = vrot.slane %v1561, 1
      %v1679 = vsel %vm511, %v1676, %v1678
      %v1680 = vrot.slane %v1562, 1
      %v1681 = vrot.slane %v1563, 1
      %v1682 = vsel %vm511, %v1680, %v1681
      %v1683 = vrot.slane %v1564, 1
      %v1684 = vsel %vm511, %v1681, %v1683
      %v1685 = vrot.slane %v1565, 1
      %v1686 = vrot.slane %v1566, 1
      %v1687 = vsel %vm511, %v1685, %v1686
      %v1688 = vrot.slane %v1567, 1
      %v1689 = vsel %vm511, %v1686, %v1688
      %v1690 = vrot.slane %v1568, 1
      %v1691 = vrot.slane %v1569, 1
      %v1692 = vsel %vm511, %v1690, %v1691
      %v1693 = vrot.slane %v1570, 1
      %v1694 = vsel %vm511, %v1691, %v1693
      %v1695 = vrot.slane %v1571, 1
      %v1696 = vrot.slane %v1572, 1
      %v1697 = vsel %vm511, %v1695, %v1696
      %v1698 = vrot.slane %v1573, 1
      %v1699 = vsel %vm511, %v1696, %v1698
      %v1700 = vrot.slane %v1574, 1
      %v1701 = vrot.slane %v1575, 1
      %v1702 = vsel %vm511, %v1700, %v1701
      %v1703 = vrot.slane %v1576, 1
      %v1704 = vsel %vm511, %v1701, %v1703
      %v1737 = vadd.f32 %v1493, %v1627
      %v1738 = vadd.f32 %v1494, %v1629
      %v1739 = vadd.f32 %v1495, %v1632
      %v1740 = vadd.f32 %v1496, %v1634
      %v1741 = vadd.f32 %v1497, %v1637
      %v1742 = vadd.f32 %v1498, %v1639
      %v1743 = vadd.f32 %v1499, %v1642
      %v1744 = vadd.f32 %v1500, %v1644
      %v1745 = vadd.f32 %v1501, %v1647
      %v1746 = vadd.f32 %v1502, %v1649
      %v1747 = vadd.f32 %v1503, %v1652
      %v1748 = vadd.f32 %v1504, %v1654
      %v1749 = vadd.f32 %v1505, %v1657
      %v1750 = vadd.f32 %v1506, %v1659
      %v1751 = vadd.f32 %v1507, %v1662
      %v1752 = vadd.f32 %v1508, %v1664
      %v1753 = vadd.f32 %v1509, %v1667
      %v1754 = vadd.f32 %v1510, %v1669
      %v1755 = vadd.f32 %v1511, %v1672
      %v1756 = vadd.f32 %v1512, %v1674
      %v1757 = vadd.f32 %v1513, %v1677
      %v1758 = vadd.f32 %v1514, %v1679
      %v1759 = vadd.f32 %v1515, %v1682
      %v1760 = vadd.f32 %v1516, %v1684
      %v1761 = vadd.f32 %v1517, %v1687
      %v1762 = vadd.f32 %v1518, %v1689
      %v1763 = vadd.f32 %v1519, %v1692
      %v1764 = vadd.f32 %v1520, %v1694
      %v1765 = vadd.f32 %v1521, %v1697
      %v1766 = vadd.f32 %v1522, %v1699
      %v1767 = vadd.f32 %v1523, %v1702
      %v1768 = vadd.f32 %v1524, %v1704
      %v1769 = vlaneseq
      %v1770 = vshrl.u32 %v1769, 7
      %v1771 = vsub.s32 0, %v1770
      %v1772 = vrot.slane %v342, %v1771
      %v1773 = vmul.f32 %v293, %v1772
      %v1774 = vmul.f32 %v294, %v1772
      %v1775 = vmul.f32 %v295, %v1772
      %v1776 = vmul.f32 %v296, %v1772
      %v1777 = vmul.f32 %v297, %v1772
      %v1778 = vmul.f32 %v298, %v1772
      %v1779 = vmul.f32 %v299, %v1772
      %v1780 = vmul.f32 %v300, %v1772
      %v1781 = vmul.f32 %v301, %v1772
      %v1782 = vmul.f32 %v302, %v1772
      %v1783 = vmul.f32 %v303, %v1772
      %v1784 = vmul.f32 %v304, %v1772
      %v1785 = vmul.f32 %v305, %v1772
      %v1786 = vmul.f32 %v306, %v1772
      %v1787 = vmul.f32 %v307, %v1772
      %v1788 = vmul.f32 %v308, %v1772
      %v1789 = vmul.f32 %v309, %v1772
      %v1790 = vmul.f32 %v310, %v1772
      %v1791 = vmul.f32 %v311, %v1772
      %v1792 = vmul.f32 %v312, %v1772
      %v1793 = vmul.f32 %v313, %v1772
      %v1794 = vmul.f32 %v314, %v1772
      %v1795 = vmul.f32 %v315, %v1772
      %v1796 = vmul.f32 %v316, %v1772
      %v1797 = vmul.f32 %v317, %v1772
      %v1798 = vmul.f32 %v318, %v1772
      %v1799 = vmul.f32 %v319, %v1772
      %v1800 = vmul.f32 %v320, %v1772
      %v1801 = vmul.f32 %v321, %v1772
      %v1802 = vmul.f32 %v322, %v1772
      %v1803 = vmul.f32 %v323, %v1772
      %v1804 = vmul.f32 %v324, %v1772
      %v1805 = vmul.f32 %v325, %v1772
      %v1806 = vmul.f32 %v326, %v1772
      %v1807 = vmul.f32 %v327, %v1772
      %v1808 = vmul.f32 %v328, %v1772
      %v1809 = vmul.f32 %v329, %v1772
      %v1810 = vmul.f32 %v330, %v1772
      %v1811 = vmul.f32 %v331, %v1772
      %v1812 = vmul.f32 %v332, %v1772
      %v1813 = vmul.f32 %v333, %v1772
      %v1814 = vmul.f32 %v334, %v1772
      %v1815 = vmul.f32 %v335, %v1772
      %v1816 = vmul.f32 %v336, %v1772
      %v1817 = vmul.f32 %v337, %v1772
      %v1818 = vmul.f32 %v338, %v1772
      %v1819 = vmul.f32 %v339, %v1772
      %v1820 = vmul.f32 %v340, %v1772
      %v1869 = vrot.slane %v1773, 2
      %v1870 = vrot.slane %v1774, 2
      %v1871 = vsel %vm756, %v1869, %v1870
      %v1872 = vrot.slane %v1775, 2
      %v1873 = vsel %vm756, %v1870, %v1872
      %v1874 = vrot.slane %v1776, 2
      %v1875 = vrot.slane %v1777, 2
      %v1876 = vsel %vm756, %v1874, %v1875
      %v1877 = vrot.slane %v1778, 2
      %v1878 = vsel %vm756, %v1875, %v1877
      %v1879 = vrot.slane %v1779, 2
      %v1880 = vrot.slane %v1780, 2
      %v1881 = vsel %vm756, %v1879, %v1880
      %v1882 = vrot.slane %v1781, 2
      %v1883 = vsel %vm756, %v1880, %v1882
      %v1884 = vrot.slane %v1782, 2
      %v1885 = vrot.slane %v1783, 2
      %v1886 = vsel %vm756, %v1884, %v1885
      %v1887 = vrot.slane %v1784, 2
      %v1888 = vsel %vm756, %v1885, %v1887
      %v1889 = vrot.slane %v1785, 2
      %v1890 = vrot.slane %v1786, 2
      %v1891 = vsel %vm756, %v1889, %v1890
      %v1892 = vrot.slane %v1787, 2
      %v1893 = vsel %vm756, %v1890, %v1892
      %v1894 = vrot.slane %v1788, 2
      %v1895 = vrot.slane %v1789, 2
      %v1896 = vsel %vm756, %v1894, %v1895
      %v1897 = vrot.slane %v1790, 2
      %v1898 = vsel %vm756, %v1895, %v1897
      %v1899 = vrot.slane %v1791, 2
      %v1900 = vrot.slane %v1792, 2
      %v1901 = vsel %vm756, %v1899, %v1900
      %v1902 = vrot.slane %v1793, 2
      %v1903 = vsel %vm756, %v1900, %v1902
      %v1904 = vrot.slane %v1794, 2
      %v1905 = vrot.slane %v1795, 2
      %v1906 = vsel %vm756, %v1904, %v1905
      %v1907 = vrot.slane %v1796, 2
      %v1908 = vsel %vm756, %v1905, %v1907
      %v1909 = vrot.slane %v1797, 2
      %v1910 = vrot.slane %v1798, 2
      %v1911 = vsel %vm756, %v1909, %v1910
      %v1912 = vrot.slane %v1799, 2
      %v1913 = vsel %vm756, %v1910, %v1912
      %v1914 = vrot.slane %v1800, 2
      %v1915 = vrot.slane %v1801, 2
      %v1916 = vsel %vm756, %v1914, %v1915
      %v1917 = vrot.slane %v1802, 2
      %v1918 = vsel %vm756, %v1915, %v1917
      %v1919 = vrot.slane %v1803, 2
      %v1920 = vrot.slane %v1804, 2
      %v1921 = vsel %vm756, %v1919, %v1920
      %v1922 = vrot.slane %v1805, 2
      %v1923 = vsel %vm756, %v1920, %v1922
      %v1924 = vrot.slane %v1806, 2
      %v1925 = vrot.slane %v1807, 2
      %v1926 = vsel %vm756, %v1924, %v1925
      %v1927 = vrot.slane %v1808, 2
      %v1928 = vsel %vm756, %v1925, %v1927
      %v1929 = vrot.slane %v1809, 2
      %v1930 = vrot.slane %v1810, 2
      %v1931 = vsel %vm756, %v1929, %v1930
      %v1932 = vrot.slane %v1811, 2
      %v1933 = vsel %vm756, %v1930, %v1932
      %v1934 = vrot.slane %v1812, 2
      %v1935 = vrot.slane %v1813, 2
      %v1936 = vsel %vm756, %v1934, %v1935
      %v1937 = vrot.slane %v1814, 2
      %v1938 = vsel %vm756, %v1935, %v1937
      %v1939 = vrot.slane %v1815, 2
      %v1940 = vrot.slane %v1816, 2
      %v1941 = vsel %vm756, %v1939, %v1940
      %v1942 = vrot.slane %v1817, 2
      %v1943 = vsel %vm756, %v1940, %v1942
      %v1944 = vrot.slane %v1818, 2
      %v1945 = vrot.slane %v1819, 2
      %v1946 = vsel %vm756, %v1944, %v1945
      %v1947 = vrot.slane %v1820, 2
      %v1948 = vsel %vm756, %v1945, %v1947
      %v1981 = vadd.f32 %v1737, %v1871
      %v1982 = vadd.f32 %v1738, %v1873
      %v1983 = vadd.f32 %v1739, %v1876
      %v1984 = vadd.f32 %v1740, %v1878
      %v1985 = vadd.f32 %v1741, %v1881
      %v1986 = vadd.f32 %v1742, %v1883
      %v1987 = vadd.f32 %v1743, %v1886
      %v1988 = vadd.f32 %v1744, %v1888
      %v1989 = vadd.f32 %v1745, %v1891
      %v1990 = vadd.f32 %v1746, %v1893
      %v1991 = vadd.f32 %v1747, %v1896
      %v1992 = vadd.f32 %v1748, %v1898
      %v1993 = vadd.f32 %v1749, %v1901
      %v1994 = vadd.f32 %v1750, %v1903
      %v1995 = vadd.f32 %v1751, %v1906
      %v1996 = vadd.f32 %v1752, %v1908
      %v1997 = vadd.f32 %v1753, %v1911
      %v1998 = vadd.f32 %v1754, %v1913
      %v1999 = vadd.f32 %v1755, %v1916
      %v2000 = vadd.f32 %v1756, %v1918
      %v2001 = vadd.f32 %v1757, %v1921
      %v2002 = vadd.f32 %v1758, %v1923
      %v2003 = vadd.f32 %v1759, %v1926
      %v2004 = vadd.f32 %v1760, %v1928
      %v2005 = vadd.f32 %v1761, %v1931
      %v2006 = vadd.f32 %v1762, %v1933
      %v2007 = vadd.f32 %v1763, %v1936
      %v2008 = vadd.f32 %v1764, %v1938
      %v2009 = vadd.f32 %v1765, %v1941
      %v2010 = vadd.f32 %v1766, %v1943
      %v2011 = vadd.f32 %v1767, %v1946
      %v2012 = vadd.f32 %v1768, %v1948
      %v2013 = vld [vmem:[%s224] sm:$0x1]
      %v2015 = vlaneseq
      %v2016 = vshrl.u32 %v2015, 7
      %v2017 = vsub.s32 0, %v2016
      %v2018 = vrot.slane %v2013, %v2017
      %v2020 = vadd.f32 %v1981, %v2018
      %v2021 = vadd.f32 %v1982, %v2018
      %v2022 = vadd.f32 %v1983, %v2018
      %v2023 = vadd.f32 %v1984, %v2018
      %v2024 = vadd.f32 %v1985, %v2018
      %v2025 = vadd.f32 %v1986, %v2018
      %v2026 = vadd.f32 %v1987, %v2018
      %v2027 = vadd.f32 %v1988, %v2018
      %v2028 = vadd.f32 %v1989, %v2018
      %v2029 = vadd.f32 %v1990, %v2018
      %v2030 = vadd.f32 %v1991, %v2018
      %v2031 = vadd.f32 %v1992, %v2018
      %v2032 = vadd.f32 %v1993, %v2018
      %v2033 = vadd.f32 %v1994, %v2018
      %v2034 = vadd.f32 %v1995, %v2018
      %v2035 = vadd.f32 %v1996, %v2018
      %v2036 = vadd.f32 %v1997, %v2018
      %v2037 = vadd.f32 %v1998, %v2018
      %v2038 = vadd.f32 %v1999, %v2018
      %v2039 = vadd.f32 %v2000, %v2018
      %v2040 = vadd.f32 %v2001, %v2018
      %v2041 = vadd.f32 %v2002, %v2018
      %v2042 = vadd.f32 %v2003, %v2018
      %v2043 = vadd.f32 %v2004, %v2018
      %v2044 = vadd.f32 %v2005, %v2018
      %v2045 = vadd.f32 %v2006, %v2018
      %v2046 = vadd.f32 %v2007, %v2018
      %v2047 = vadd.f32 %v2008, %v2018
      %v2048 = vadd.f32 %v2009, %v2018
      %v2049 = vadd.f32 %v2010, %v2018
      %v2050 = vadd.f32 %v2011, %v2018
      %v2051 = vadd.f32 %v2012, %v2018
      %v2052 = vpack.c.bf16 %v2021, %v2020
      %v2053 = vpack.c.bf16 %v2023, %v2022
      %v2054 = vpack.c.bf16 %v2025, %v2024
      %v2055 = vpack.c.bf16 %v2027, %v2026
      %v2056 = vpack.c.bf16 %v2029, %v2028
      %v2057 = vpack.c.bf16 %v2031, %v2030
      %v2058 = vpack.c.bf16 %v2033, %v2032
      %v2059 = vpack.c.bf16 %v2035, %v2034
      %v2060 = vpack.c.bf16 %v2037, %v2036
      %v2061 = vpack.c.bf16 %v2039, %v2038
      %v2062 = vpack.c.bf16 %v2041, %v2040
      %v2063 = vpack.c.bf16 %v2043, %v2042
      %v2064 = vpack.c.bf16 %v2045, %v2044
      %v2065 = vpack.c.bf16 %v2047, %v2046
      %v2066 = vpack.c.bf16 %v2049, %v2048
      %v2067 = vpack.c.bf16 %v2051, %v2050
      %v2084 = vunpack.c.l.b16 %v2052
      %v2085 = vunpack.c.h.b16 %v2052
      %v2086 = vunpack.c.l.b16 %v2053
      %v2087 = vunpack.c.h.b16 %v2053
      %v2088 = vunpack.c.l.b16 %v2054
      %v2089 = vunpack.c.h.b16 %v2054
      %v2090 = vunpack.c.l.b16 %v2055
      %v2091 = vunpack.c.h.b16 %v2055
      %v2092 = vunpack.c.l.b16 %v2056
      %v2093 = vunpack.c.h.b16 %v2056
      %v2094 = vunpack.c.l.b16 %v2057
      %v2095 = vunpack.c.h.b16 %v2057
      %v2096 = vunpack.c.l.b16 %v2058
      %v2097 = vunpack.c.h.b16 %v2058
      %v2098 = vunpack.c.l.b16 %v2059
      %v2099 = vunpack.c.h.b16 %v2059
      %v2100 = vunpack.c.l.b16 %v2060
      %v2101 = vunpack.c.h.b16 %v2060
      %v2102 = vunpack.c.l.b16 %v2061
      %v2103 = vunpack.c.h.b16 %v2061
      %v2104 = vunpack.c.l.b16 %v2062
      %v2105 = vunpack.c.h.b16 %v2062
      %v2106 = vunpack.c.l.b16 %v2063
      %v2107 = vunpack.c.h.b16 %v2063
      %v2108 = vunpack.c.l.b16 %v2064
      %v2109 = vunpack.c.h.b16 %v2064
      %v2110 = vunpack.c.l.b16 %v2065
      %v2111 = vunpack.c.h.b16 %v2065
      %v2112 = vunpack.c.l.b16 %v2066
      %v2113 = vunpack.c.h.b16 %v2066
      %v2114 = vunpack.c.l.b16 %v2067
      %v2115 = vunpack.c.h.b16 %v2067
      %v2116 = vpack.c.b16 %v2084, %v2084
      %v2117 = vpack.c.b16 %v2085, %v2085
      %v2118 = vpack.c.b16 %v2086, %v2086
      %v2119 = vpack.c.b16 %v2087, %v2087
      %v2120 = vpack.c.b16 %v2088, %v2088
      %v2121 = vpack.c.b16 %v2089, %v2089
      %v2122 = vpack.c.b16 %v2090, %v2090
      %v2123 = vpack.c.b16 %v2091, %v2091
      %v2124 = vpack.c.b16 %v2092, %v2092
      %v2125 = vpack.c.b16 %v2093, %v2093
      %v2126 = vpack.c.b16 %v2094, %v2094
      %v2127 = vpack.c.b16 %v2095, %v2095
      %v2128 = vpack.c.b16 %v2096, %v2096
      %v2129 = vpack.c.b16 %v2097, %v2097
      %v2130 = vpack.c.b16 %v2098, %v2098
      %v2131 = vpack.c.b16 %v2099, %v2099
      %v2132 = vpack.c.b16 %v2100, %v2100
      %v2133 = vpack.c.b16 %v2101, %v2101
      %v2134 = vpack.c.b16 %v2102, %v2102
      %v2135 = vpack.c.b16 %v2103, %v2103
      %v2136 = vpack.c.b16 %v2104, %v2104
      %v2137 = vpack.c.b16 %v2105, %v2105
      %v2138 = vpack.c.b16 %v2106, %v2106
      %v2139 = vpack.c.b16 %v2107, %v2107
      %v2140 = vpack.c.b16 %v2108, %v2108
      %v2141 = vpack.c.b16 %v2109, %v2109
      %v2142 = vpack.c.b16 %v2110, %v2110
      %v2143 = vpack.c.b16 %v2111, %v2111
      %v2144 = vpack.c.b16 %v2112, %v2112
      %v2145 = vpack.c.b16 %v2113, %v2113
      %v2146 = vpack.c.b16 %v2114, %v2114
      %v2147 = vpack.c.b16 %v2115, %v2115
      %2180 = vst [vmem:[%s232] sm:$0xf] %v2116
      %2181 = vst [vmem:[%s232 + $0x4] sm:$0xf] %v2117
      %2182 = vst [vmem:[%s232 + $0x8] sm:$0xf] %v2118
      %2183 = vst [vmem:[%s232 + $0xc] sm:$0xf] %v2119
      %2184 = vst [vmem:[%s232 + $0x10] sm:$0xf] %v2120
      %2185 = vst [vmem:[%s232 + $0x14] sm:$0xf] %v2121
      %2186 = vst [vmem:[%s232 + $0x18] sm:$0xf] %v2122
      %2187 = vst [vmem:[%s232 + $0x1c] sm:$0xf] %v2123
      %2188 = vst [vmem:[%s232 + $0x20] sm:$0xf] %v2124
      %2189 = vst [vmem:[%s232 + $0x24] sm:$0xf] %v2125
      %2190 = vst [vmem:[%s232 + $0x28] sm:$0xf] %v2126
      %2191 = vst [vmem:[%s232 + $0x2c] sm:$0xf] %v2127
      %2192 = vst [vmem:[%s232 + $0x30] sm:$0xf] %v2128
      %2193 = vst [vmem:[%s232 + $0x34] sm:$0xf] %v2129
      %2194 = vst [vmem:[%s232 + $0x38] sm:$0xf] %v2130
      %2195 = vst [vmem:[%s232 + $0x3c] sm:$0xf] %v2131
      %2196 = vst [vmem:[%s232 + $0x40] sm:$0xf] %v2132
      %2197 = vst [vmem:[%s232 + $0x44] sm:$0xf] %v2133
      %2198 = vst [vmem:[%s232 + $0x48] sm:$0xf] %v2134
      %2199 = vst [vmem:[%s232 + $0x4c] sm:$0xf] %v2135
      %2200 = vst [vmem:[%s232 + $0x50] sm:$0xf] %v2136
      %2201 = vst [vmem:[%s232 + $0x54] sm:$0xf] %v2137
      %2202 = vst [vmem:[%s232 + $0x58] sm:$0xf] %v2138
      %2203 = vst [vmem:[%s232 + $0x5c] sm:$0xf] %v2139
      %2204 = vst [vmem:[%s232 + $0x60] sm:$0xf] %v2140
      %2205 = vst [vmem:[%s232 + $0x64] sm:$0xf] %v2141
      %2206 = vst [vmem:[%s232 + $0x68] sm:$0xf] %v2142
      %2207 = vst [vmem:[%s232 + $0x6c] sm:$0xf] %v2143
      %2208 = vst [vmem:[%s232 + $0x70] sm:$0xf] %v2144
      %2209 = vst [vmem:[%s232 + $0x74] sm:$0xf] %v2145
      %2210 = vst [vmem:[%s232 + $0x78] sm:$0xf] %v2146
      %2211 = vst [vmem:[%s232 + $0x7c] sm:$0xf] %v2147
      %p2212 = scmp.lt.s32.totalorder %s18, 1
      %s2213 = scalar_select %p2212, %s18, 1
      %p2214 = scmp.lt.s32.totalorder %s19, 0
      %s2215 = scalar_select %p2214, %s19, 0
      %s2216 = smul.addr %s2213, 32
      %s2217 = sadd.s32 %s2215, %s2216
      %s2218 = smul.addr %s2217, 4
      %s2219 = scalar_lea.vmem %s3, %s2218
      // Predicated region
      $region33: #{spatial_prior_adaptor3_forward.5} parent=31 // pred_check
        %p2220 = pneg %p126
      $region34: #{spatial_prior_adaptor3_forward.5} parent=31 // pred_check_branch
        %2222 = sbr.rel (%p2220) target = $region36
      $region35: #{spatial_prior_adaptor3_forward.5} parent=31 // pred_region
        _
      $region36: #{spatial_prior_adaptor3_forward.5} parent=31 // pred_fallthru
        _
    $region32: #{spatial_prior_adaptor3_forward.5} parent=5 // pred_fallthru
      _
    %p2223 = scmp.le.s32.totalorder 2, %s9
    // Predicated region
    $region37: #{spatial_prior_adaptor3_forward.5} parent=5 // pred_check
      %p2224 = pneg %p2223
    $region38: #{spatial_prior_adaptor3_forward.5} parent=5 // pred_check_branch
      %2226 = sbr.rel (%p2224) target = $region40
    $region39: #{spatial_prior_adaptor3_forward.5} parent=5 // pred_region
      %s2227 = ssub.s32 %s9, 2
      // Predicated region
      $region41: #{spatial_prior_adaptor3_forward.5} parent=39 // pred_check
        %p2228 = pneg %p132
      $region42: #{spatial_prior_adaptor3_forward.5} parent=39 // pred_check_branch
        %2230 = sbr.rel (%p2228) target = $region44
      $region43: #{spatial_prior_adaptor3_forward.5} parent=39 // pred_region
        %p2231 = scmp.lt.s32.totalorder %s20, 1
        %s2232 = scalar_select %p2231, %s20, 1
        %p2233 = scmp.lt.s32.totalorder %s21, 0
        %s2234 = scalar_select %p2233, %s21, 0
        %s2235 = smul.addr %s2232, 32
        %s2236 = sadd.s32 %s2234, %s2235
        %s2237 = smul.addr %s2236, 4
        %s2238 = scalar_lea.vmem %s3, %s2237
      $region44: #{spatial_prior_adaptor3_forward.5} parent=39 // pred_fallthru
        _
    $region40: #{spatial_prior_adaptor3_forward.5} parent=5 // pred_fallthru
      _
  $region6: #{spatial_prior_adaptor3_forward.5} parent=0 // loop_footer
    %s13 = sadd.s32 1, %s9
  $region7: #{spatial_prior_adaptor3_forward.5} parent=0 // loop_footer_branch
    %8 = sbr.rel target = $region3
  $region8: #{spatial_prior_adaptor3_forward.5} parent=0 // loop_exit
    _

// kernel: spatial_prior_adaptor3_forward.7
$region0: #{spatial_prior_adaptor3_forward.7}
  #allocation0 [shape = 'u32[]', space=smem, size = 0x4, offset = 0x4, fixed_abs, tag = 'smem constant byte address 0x4 - core index']
  #allocation1 [shape = 'u32[144,128]{1,0:T(1,128)}', space=vmem, size = 0x12000, scoped, tag = 'internal scratch']
  %s0 = inlined_call_operand.vmem [shape: bf16[512,128], index: 0, kind: input, shape index: {}]
  %s1 = inlined_call_operand.vmem [shape: bf16[128,512], index: 1, kind: input, shape index: {}]
  %s2 = inlined_call_operand.vmem [shape: f32[1,512], index: 2, kind: input, shape index: {}]
  %s3 = inlined_call_operand.vmem [shape: bf16[256,128], index: 3, kind: input, shape index: {}]
  %s4 = inlined_call_operand.vmem [shape: f32[1,128], index: 4, kind: input, shape index: {}]
  %s5 = inlined_call_operand.hbm [shape: f32[512,128], index: 5, kind: output, shape index: {}]
  %s6 = sld [smem:[#allocation0]]
  $region53: #{spatial_prior_adaptor3_forward.7} parent=0
    _
  %s8 = ssub.s32 1, %s6
  %s9 = scalar_select 0, %s8, %s6
  $region1: #{spatial_prior_adaptor3_forward.7} parent=0
    #allocation2 [shape = 'u8[262144]{0}', space=vmem, size = 0x40000, scoped, tag = 'output window, operand 0']
    #allocation3 [shape = 's32[2]{0}', space=sflag, size = 0x8, scoped, tag = 'scoped memory for spatial_prior_adaptor3_forward.7']
    %10 = vsyncpa [#allocation3], 0
    %s11 = scalar_lea.sflag [#allocation3], 1
    %12 = vsyncpa %s11, 0
    loop: start=0, step=1, limit=4
    $region2: #{spatial_prior_adaptor3_forward.7} parent=1 // loop_pre_header
      _
    $region3: #{spatial_prior_adaptor3_forward.7} parent=1 // loop_header
      %s14 = sphi 0, %s18
      %p15 = scmp.ge.s32.totalorder %s14, 4
      %s24 = sphi 0, %s26
      %s27 = sphi 0, %s24
      %s28 = sphi 0, %s27
      %s44 = sphi 0, %s28
      %s48 = sphi 0, %s48
      %s50 = sphi 0, %s48
      %s51 = sphi 0, %s50
      %s65 = sphi 0, %s51
      %s69 = sphi 0, %s69
      %s71 = sphi 0, %s69
      %s72 = sphi 0, %s71
      %s86 = sphi 0, %s72
      %s90 = sphi 0, %s90
      %s92 = sphi 0, %s90
      %s93 = sphi 0, %s92
      %s107 = sphi 0, %s93
      %s111 = sphi 0, %s111
      %s113 = sphi 0, %s111
      %s114 = sphi 0, %s113
      %s128 = sphi 0, %s114
      %s134 = sphi 0, %s136
      %s137 = sphi 0, %s134
      %s138 = sphi 0, %s137
      %s154 = sphi 0, %s138
    $region4: #{spatial_prior_adaptor3_forward.7} parent=1 // loop_header_branch
      %17 = sbr.rel (%p15) target = $region8
    $region5: #{spatial_prior_adaptor3_forward.7} parent=1 // loop_body
      %s19 = ssub.s32 %s14, 1
      %s20 = ssub.s32 %s14, 2
      %s21 = sadd.s32 %s14, 1
      %s22 = ssub.s32 %s14, %s21
      %p23 = scmp.eq.s32.totalorder %s22, 0
      %s25 = sadd.s32 %s24, 1
      %s26 = scalar_select %p23, %s24, %s25
      %p29 = pneg %p23
      %p30 = scmp.eq.s32.totalorder %s14, 1
      %p31 = por %p29, %p30
      %p32 = scmp.ne.s32.totalorder %s24, %s27
      %p33 = scmp.eq.s32.totalorder %s14, 0
      %p34 = por %p32, %p33
      %p35 = scmp.ne.s32.totalorder %s24, %s27
      %p36 = scmp.eq.s32.totalorder %s19, 1
      %p37 = por %p35, %p36
      %p38 = scmp.ne.s32.totalorder %s27, %s28
      %p39 = scmp.eq.s32.totalorder %s19, 0
      %p40 = por %p38, %p39
      %p41 = scmp.ne.s32.totalorder %s27, %s28
      %p42 = scmp.eq.s32.totalorder %s20, 1
      %p43 = por %p41, %p42
      %p45 = scmp.ne.s32.totalorder %s28, %s44
      %p46 = scmp.eq.s32.totalorder %s20, 0
      %p47 = por %p45, %p46
      %s49 = sadd.s32 %s48, 1
      %p52 = scmp.eq.s32.totalorder %s14, 1
      %p53 = scmp.ne.s32.totalorder %s48, %s50
      %p54 = scmp.eq.s32.totalorder %s14, 0
      %p55 = por %p53, %p54
      %p56 = scmp.ne.s32.totalorder %s48, %s50
      %p57 = scmp.eq.s32.totalorder %s19, 1
      %p58 = por %p56, %p57
      %p59 = scmp.ne.s32.totalorder %s50, %s51
      %p60 = scmp.eq.s32.totalorder %s19, 0
      %p61 = por %p59, %p60
      %p62 = scmp.ne.s32.totalorder %s50, %s51
      %p63 = scmp.eq.s32.totalorder %s20, 1
      %p64 = por %p62, %p63
      %p66 = scmp.ne.s32.totalorder %s51, %s65
      %p67 = scmp.eq.s32.totalorder %s20, 0
      %p68 = por %p66, %p67
      %s70 = sadd.s32 %s69, 1
      %p73 = scmp.eq.s32.totalorder %s14, 1
      %p74 = scmp.ne.s32.totalorder %s69, %s71
      %p75 = scmp.eq.s32.totalorder %s14, 0
      %p76 = por %p74, %p75
      %p77 = scmp.ne.s32.totalorder %s69, %s71
      %p78 = scmp.eq.s32.totalorder %s19, 1
      %p79 = por %p77, %p78
      %p80 = scmp.ne.s32.totalorder %s71, %s72
      %p81 = scmp.eq.s32.totalorder %s19, 0
      %p82 = por %p80, %p81
      %p83 = scmp.ne.s32.totalorder %s71, %s72
      %p84 = scmp.eq.s32.totalorder %s20, 1
      %p85 = por %p83, %p84
      %p87 = scmp.ne.s32.totalorder %s72, %s86
      %p88 = scmp.eq.s32.totalorder %s20, 0
      %p89 = por %p87, %p88
      %s91 = sadd.s32 %s90, 1
      %p94 = scmp.eq.s32.totalorder %s14, 1
      %p95 = scmp.ne.s32.totalorder %s90, %s92
      %p96 = scmp.eq.s32.totalorder %s14, 0
      %p97 = por %p95, %p96
      %p98 = scmp.ne.s32.totalorder %s90, %s92
      %p99 = scmp.eq.s32.totalorder %s19, 1
      %p100 = por %p98, %p99
      %p101 = scmp.ne.s32.totalorder %s92, %s93
      %p102 = scmp.eq.s32.totalorder %s19, 0
      %p103 = por %p101, %p102
      %p104 = scmp.ne.s32.totalorder %s92, %s93
      %p105 = scmp.eq.s32.totalorder %s20, 1
      %p106 = por %p104, %p105
      %p108 = scmp.ne.s32.totalorder %s93, %s107
      %p109 = scmp.eq.s32.totalorder %s20, 0
      %p110 = por %p108, %p109
      %s112 = sadd.s32 %s111, 1
      %p115 = scmp.eq.s32.totalorder %s14, 1
      %p116 = scmp.ne.s32.totalorder %s111, %s113
      %p117 = scmp.eq.s32.totalorder %s14, 0
      %p118 = por %p116, %p117
      %p119 = scmp.ne.s32.totalorder %s111, %s113
      %p120 = scmp.eq.s32.totalorder %s19, 1
      %p121 = por %p119, %p120
      %p122 = scmp.ne.s32.totalorder %s113, %s114
      %p123 = scmp.eq.s32.totalorder %s19, 0
      %p124 = por %p122, %p123
      %p125 = scmp.ne.s32.totalorder %s113, %s114
      %p126 = scmp.eq.s32.totalorder %s20, 1
      %p127 = por %p125, %p126
      %p129 = scmp.ne.s32.totalorder %s114, %s128
      %p130 = scmp.eq.s32.totalorder %s20, 0
      %p131 = por %p129, %p130
      %s132 = ssub.s32 %s14, %s21
      %p133 = scmp.eq.s32.totalorder %s132, 0
      %s135 = sadd.s32 %s134, 1
      %s136 = scalar_select %p133, %s134, %s135
      %p139 = pneg %p133
      %p140 = scmp.eq.s32.totalorder %s14, 1
      %p141 = por %p139, %p140
      %p142 = scmp.ne.s32.totalorder %s134, %s137
      %p143 = scmp.eq.s32.totalorder %s14, 0
      %p144 = por %p142, %p143
      %p145 = scmp.ne.s32.totalorder %s134, %s137
      %p146 = scmp.eq.s32.totalorder %s19, 1
      %p147 = por %p145, %p146
      %p148 = scmp.ne.s32.totalorder %s137, %s138
      %p149 = scmp.eq.s32.totalorder %s19, 0
      %p150 = por %p148, %p149
      %p151 = scmp.ne.s32.totalorder %s137, %s138
      %p152 = scmp.eq.s32.totalorder %s20, 1
      %p153 = por %p151, %p152
      %p155 = scmp.ne.s32.totalorder %s138, %s154
      %p156 = scmp.eq.s32.totalorder %s20, 0
      %p157 = por %p155, %p156
      %p158 = scmp.le.s32.totalorder 1, %s14
      %p159 = scmp.lt.s32.totalorder %s14, 3
      %p160 = pnand %p158, %p159
      %p161 = pneg %p160
      // Predicated region
      $region9: #{spatial_prior_adaptor3_forward.7} parent=5 // pred_check
        _
      $region10: #{spatial_prior_adaptor3_forward.7} parent=5 // pred_check_branch
        %163 = sbr.rel (%p160) target = $region12
      $region11: #{spatial_prior_adaptor3_forward.7} parent=5 // pred_region
        %s164 = ssub.s32 %s14, 1
        // Predicated region
        $region13: #{spatial_prior_adaptor3_forward.7} parent=11 // pred_check
          %p165 = pneg %p61
        $region14: #{spatial_prior_adaptor3_forward.7} parent=11 // pred_check_branch
          %167 = sbr.rel (%p165) target = $region16
        $region15: #{spatial_prior_adaptor3_forward.7} parent=11 // pred_region
          _
        $region16: #{spatial_prior_adaptor3_forward.7} parent=11 // pred_fallthru
          _
        // Predicated region
        $region17: #{spatial_prior_adaptor3_forward.7} parent=11 // pred_check
          %p168 = pneg %p82
        $region18: #{spatial_prior_adaptor3_forward.7} parent=11 // pred_check_branch
          %170 = sbr.rel (%p168) target = $region20
        $region19: #{spatial_prior_adaptor3_forward.7} parent=11 // pred_region
          _
        $region20: #{spatial_prior_adaptor3_forward.7} parent=11 // pred_fallthru
          _
        // Predicated region
        $region21: #{spatial_prior_adaptor3_forward.7} parent=11 // pred_check
          %p171 = pneg %p103
        $region22: #{spatial_prior_adaptor3_forward.7} parent=11 // pred_check_branch
          %173 = sbr.rel (%p171) target = $region24
        $region23: #{spatial_prior_adaptor3_forward.7} parent=11 // pred_region
          _
        $region24: #{spatial_prior_adaptor3_forward.7} parent=11 // pred_fallthru
          _
        // Predicated region
        $region25: #{spatial_prior_adaptor3_forward.7} parent=11 // pred_check
          %p174 = pneg %p124
        $region26: #{spatial_prior_adaptor3_forward.7} parent=11 // pred_check_branch
          %176 = sbr.rel (%p174) target = $region28
        $region27: #{spatial_prior_adaptor3_forward.7} parent=11 // pred_region
          _
        $region28: #{spatial_prior_adaptor3_forward.7} parent=11 // pred_fallthru
          _
      $region12: #{spatial_prior_adaptor3_forward.7} parent=5 // pred_fallthru
        _
      %p177 = scmp.lt.s32.totalorder %s14, 2
      // Predicated region
      $region29: #{spatial_prior_adaptor3_forward.7} parent=5 // pred_check
        %p178 = pneg %p177
      $region30: #{spatial_prior_adaptor3_forward.7} parent=5 // pred_check_branch
        %180 = sbr.rel (%p178) target = $region32
      $region31: #{spatial_prior_adaptor3_forward.7} parent=5 // pred_region
        // Predicated region
        $region33: #{spatial_prior_adaptor3_forward.7} parent=31 // pred_check
          %p181 = pneg %p34
        $region34: #{spatial_prior_adaptor3_forward.7} parent=31 // pred_check_branch
          %183 = sbr.rel (%p181) target = $region36
        $region35: #{spatial_prior_adaptor3_forward.7} parent=31 // pred_region
          %s184 = smul.u32 32, %s14
          %p185 = scmp.lt.s32.totalorder %s184, 63
          %s186 = scalar_select %p185, %s184, 63
          %s187 = smul.addr %s186, 4
          %s188 = scalar_lea.vmem %s0, %s187
          %s189 = smul.u32 32, %s14
        $region36: #{spatial_prior_adaptor3_forward.7} parent=31 // pred_fallthru
          _
      $region32: #{spatial_prior_adaptor3_forward.7} parent=5 // pred_fallthru
        _
      %p190 = scmp.le.s32.totalorder 1, %s14
      %p191 = scmp.lt.s32.totalorder %s14, 3
      %p192 = pnand %p190, %p191
      %p193 = pneg %p192
      // Predicated region
      $region37: #{spatial_prior_adaptor3_forward.7} parent=5 // pred_check
        _
      $region38: #{spatial_prior_adaptor3_forward.7} parent=5 // pred_check_branch
        %195 = sbr.rel (%p192) target = $region40
      $region39: #{spatial_prior_adaptor3_forward.7} parent=5 // pred_region
        %s196 = ssub.s32 %s14, 1
        %s197 = smul.u32 32, %s19
        %p198 = scmp.lt.s32.totalorder %s197, 63
        %s199 = scalar_select %p198, %s197, 63
        %s200 = smul.addr %s199, 4
        %s201 = scalar_lea.vmem %s0, %s200
        %p202 = pneg %p40
        %p203 = pneg %p37
        %p204 = pneg %p61
        %p205 = pneg %p58
        %p206 = pneg %p82
        %p207 = pneg %p79
        %p208 = pneg %p103
        %p209 = pneg %p100
        %p210 = pneg %p124
        %p211 = pneg %p121
        %p212 = pneg %p150
        %p213 = pneg %p147
        %s214 = sand.u32 %s137, 1
        %s215 = scalar_lea.sflag [#allocation3], %s214
        %s216 = sand.u32 %s137, 1
        %s217 = smul.addr %s216, 256
        %s218 = scalar_lea.vmem [#allocation2], %s217
        %s219 = smul.u32 32, %s19
        %p220 = scmp.lt.s32.totalorder %s219, 63
        %s221 = scalar_select %p220, %s219, 63
        %s222 = smul.addr %s221, 4
        %s223 = scalar_lea.vmem %s0, %s222
        %s224 = smul.u32 32, %s19
        %s225 = smul.u32 32, %s19
        %v227 = vld [vmem:[%s223] sm:$0xf]
        %v228 = vld [vmem:[%s223 + $0x4] sm:$0xf]
        %v229 = vld [vmem:[%s223 + $0x8] sm:$0xf]
        %v230 = vld [vmem:[%s223 + $0xc] sm:$0xf]
        %v231 = vld [vmem:[%s223 + $0x10] sm:$0xf]
        %v232 = vld [vmem:[%s223 + $0x14] sm:$0xf]
        %v233 = vld [vmem:[%s223 + $0x18] sm:$0xf]
        %v234 = vld [vmem:[%s223 + $0x1c] sm:$0xf]
        %v235 = vld [vmem:[%s223 + $0x20] sm:$0xf]
        %v236 = vld [vmem:[%s223 + $0x24] sm:$0xf]
        %v237 = vld [vmem:[%s223 + $0x28] sm:$0xf]
        %v238 = vld [vmem:[%s223 + $0x2c] sm:$0xf]
        %v239 = vld [vmem:[%s223 + $0x30] sm:$0xf]
        %v240 = vld [vmem:[%s223 + $0x34] sm:$0xf]
        %v241 = vld [vmem:[%s223 + $0x38] sm:$0xf]
        %v242 = vld [vmem:[%s223 + $0x3c] sm:$0xf]
        %v243 = vld [vmem:[%s223 + $0x40] sm:$0xf]
        %v244 = vld [vmem:[%s223 + $0x44] sm:$0xf]
        %v245 = vld [vmem:[%s223 + $0x48] sm:$0xf]
        %v246 = vld [vmem:[%s223 + $0x4c] sm:$0xf]
        %v247 = vld [vmem:[%s223 + $0x50] sm:$0xf]
        %v248 = vld [vmem:[%s223 + $0x54] sm:$0xf]
        %v249 = vld [vmem:[%s223 + $0x58] sm:$0xf]
        %v250 = vld [vmem:[%s223 + $0x5c] sm:$0xf]
        %v251 = vld [vmem:[%s223 + $0x60] sm:$0xf]
        %v252 = vld [vmem:[%s223 + $0x64] sm:$0xf]
        %v253 = vld [vmem:[%s223 + $0x68] sm:$0xf]
        %v254 = vld [vmem:[%s223 + $0x6c] sm:$0xf]
        %v255 = vld [vmem:[%s223 + $0x70] sm:$0xf]
        %v256 = vld [vmem:[%s223 + $0x74] sm:$0xf]
        %v257 = vld [vmem:[%s223 + $0x78] sm:$0xf]
        %v258 = vld [vmem:[%s223 + $0x7c] sm:$0xf]
        %v259 = vld [vmem:[%s1] sm:$0xff]
        %v260 = vld [vmem:[%s1 + $0x8] sm:$0xff]
        %v261 = vld [vmem:[%s1 + $0x10] sm:$0xff]
        %v262 = vld [vmem:[%s1 + $0x18] sm:$0xff]
        %v263 = vld [vmem:[%s1 + $0x20] sm:$0xff]
        %v264 = vld [vmem:[%s1 + $0x28] sm:$0xff]
        %v265 = vld [vmem:[%s1 + $0x30] sm:$0xff]
        %v266 = vld [vmem:[%s1 + $0x38] sm:$0xff]
        %v267 = vld [vmem:[%s1 + $0x40] sm:$0xff]
        %v268 = vld [vmem:[%s1 + $0x48] sm:$0xff]
        %v269 = vld [vmem:[%s1 + $0x50] sm:$0xff]
        %v270 = vld [vmem:[%s1 + $0x58] sm:$0xff]
        %v271 = vld [vmem:[%s1 + $0x60] sm:$0xff]
        %v272 = vld [vmem:[%s1 + $0x68] sm:$0xff]
        %v273 = vld [vmem:[%s1 + $0x70] sm:$0xff]
        %v274 = vld [vmem:[%s1 + $0x78] sm:$0xff]
        %v275 = vld [vmem:[%s1 + $0x80] sm:$0xff]
        %v276 = vld [vmem:[%s1 + $0x88] sm:$0xff]
        %v277 = vld [vmem:[%s1 + $0x90] sm:$0xff]
        %v278 = vld [vmem:[%s1 + $0x98] sm:$0xff]
        %v279 = vld [vmem:[%s1 + $0xa0] sm:$0xff]
        %v280 = vld [vmem:[%s1 + $0xa8] sm:$0xff]
        %v281 = vld [vmem:[%s1 + $0xb0] sm:$0xff]
        %v282 = vld [vmem:[%s1 + $0xb8] sm:$0xff]
        %v283 = vld [vmem:[%s1 + $0xc0] sm:$0xff]
        %v284 = vld [vmem:[%s1 + $0xc8] sm:$0xff]
        %v285 = vld [vmem:[%s1 + $0xd0] sm:$0xff]
        %v286 = vld [vmem:[%s1 + $0xd8] sm:$0xff]
        %v287 = vld [vmem:[%s1 + $0xe0] sm:$0xff]
        %v288 = vld [vmem:[%s1 + $0xe8] sm:$0xff]
        %v289 = vld [vmem:[%s1 + $0xf0] sm:$0xff]
        %v290 = vld [vmem:[%s1 + $0xf8] sm:$0xff]
        %v291 = vld [vmem:[%s2] sm:$0xf]
        %v293 = vlaneseq
        %v294 = vshrl.u32 %v293, 7
        %v295 = vsub.s32 0, %v294
        %v296 = vrot.slane %v291, %v295
        %v297 = vlaneseq
        %v298 = vshrl.u32 %v297, 7
        %v299 = vsub.s32 1, %v298
        %v300 = vrot.slane %v291, %v299
        %v301 = vlaneseq
        %v302 = vshrl.u32 %v301, 7
        %v303 = vsub.s32 2, %v302
        %v304 = vrot.slane %v291, %v303
        %v305 = vlaneseq
        %v306 = vshrl.u32 %v305, 7
        %v307 = vsub.s32 3, %v306
        %v308 = vrot.slane %v291, %v307
        %v345 = vunpack.c.l.b16 %v227
        %v346 = vunpack.c.l.b16 %v228
        %v347 = vunpack.c.l.b16 %v229
        %v348 = vunpack.c.l.b16 %v230
        %v349 = vunpack.c.l.b16 %v231
        %v350 = vunpack.c.l.b16 %v232
        %v351 = vunpack.c.l.b16 %v233
        %v352 = vunpack.c.l.b16 %v234
        %v353 = vunpack.c.l.b16 %v235
        %v354 = vunpack.c.l.b16 %v236
        %v355 = vunpack.c.l.b16 %v237
        %v356 = vunpack.c.l.b16 %v238
        %v357 = vunpack.c.l.b16 %v239
        %v358 = vunpack.c.l.b16 %v240
        %v359 = vunpack.c.l.b16 %v241
        %v360 = vunpack.c.l.b16 %v242
        %v361 = vunpack.c.l.b16 %v243
        %v362 = vunpack.c.l.b16 %v244
        %v363 = vunpack.c.l.b16 %v245
        %v364 = vunpack.c.l.b16 %v246
        %v365 = vunpack.c.l.b16 %v247
        %v366 = vunpack.c.l.b16 %v248
        %v367 = vunpack.c.l.b16 %v249
        %v368 = vunpack.c.l.b16 %v250
        %v369 = vunpack.c.l.b16 %v251
        %v370 = vunpack.c.l.b16 %v252
        %v371 = vunpack.c.l.b16 %v253
        %v372 = vunpack.c.l.b16 %v254
        %v373 = vunpack.c.l.b16 %v255
        %v374 = vunpack.c.l.b16 %v256
        %v375 = vunpack.c.l.b16 %v257
        %v376 = vunpack.c.l.b16 %v258
        %v377 = vpack.c.b16 %v346, %v345
        %v378 = vpack.c.b16 %v348, %v347
        %v379 = vpack.c.b16 %v350, %v349
        %v380 = vpack.c.b16 %v352, %v351
        %v381 = vpack.c.b16 %v354, %v353
        %v382 = vpack.c.b16 %v356, %v355
        %v383 = vpack.c.b16 %v358, %v357
        %v384 = vpack.c.b16 %v360, %v359
        %v385 = vpack.c.b16 %v362, %v361
        %v386 = vpack.c.b16 %v364, %v363
        %v387 = vpack.c.b16 %v366, %v365
        %v388 = vpack.c.b16 %v368, %v367
        %v389 = vpack.c.b16 %v370, %v369
        %v390 = vpack.c.b16 %v372, %v371
        %v391 = vpack.c.b16 %v374, %v373
        %v392 = vpack.c.b16 %v376, %v375
        %v441 = vunpack.c.l.b16 %v259
        %v442 = vunpack.c.h.b16 %v259
        %v443 = vunpack.c.l.b16 %v260
        %v444 = vunpack.c.h.b16 %v260
        %v445 = vunpack.c.l.b16 %v261
        %v446 = vunpack.c.h.b16 %v261
        %v447 = vunpack.c.l.b16 %v262
        %v448 = vunpack.c.h.b16 %v262
        %v449 = vunpack.c.l.b16 %v263
        %v450 = vunpack.c.h.b16 %v263
        %v451 = vunpack.c.l.b16 %v264
        %v452 = vunpack.c.h.b16 %v264
        %v453 = vunpack.c.l.b16 %v265
        %v454 = vunpack.c.h.b16 %v265
        %v455 = vunpack.c.l.b16 %v266
        %v456 = vunpack.c.h.b16 %v266
        %v457 = vunpack.c.l.b16 %v267
        %v458 = vunpack.c.h.b16 %v267
        %v459 = vunpack.c.l.b16 %v268
        %v460 = vunpack.c.h.b16 %v268
        %v461 = vunpack.c.l.b16 %v269
        %v462 = vunpack.c.h.b16 %v269
        %v463 = vunpack.c.l.b16 %v270
        %v464 = vunpack.c.h.b16 %v270
        %v465 = vunpack.c.l.b16 %v271
        %v466 = vunpack.c.h.b16 %v271
        %v467 = vunpack.c.l.b16 %v272
        %v468 = vunpack.c.h.b16 %v272
        %v469 = vunpack.c.l.b16 %v273
        %v470 = vunpack.c.h.b16 %v273
        %v471 = vunpack.c.l.b16 %v274
        %v472 = vunpack.c.h.b16 %v274
        %v473 = vunpack.c.l.b16 %v275
        %v474 = vunpack.c.h.b16 %v275
        %v475 = vunpack.c.l.b16 %v276
        %v476 = vunpack.c.h.b16 %v276
        %v477 = vunpack.c.l.b16 %v277
        %v478 = vunpack.c.h.b16 %v277
        %v479 = vunpack.c.l.b16 %v278
        %v480 = vunpack.c.h.b16 %v278
        %v481 = vunpack.c.l.b16 %v279
        %v482 = vunpack.c.h.b16 %v279
        %v483 = vunpack.c.l.b16 %v280
        %v484 = vunpack.c.h.b16 %v280
        %v485 = vunpack.c.l.b16 %v281
        %v486 = vunpack.c.h.b16 %v281
        %v487 = vunpack.c.l.b16 %v282
        %v488 = vunpack.c.h.b16 %v282
        %v489 = vunpack.c.l.b16 %v283
        %v490 = vunpack.c.h.b16 %v283
        %v491 = vunpack.c.l.b16 %v284
        %v492 = vunpack.c.h.b16 %v284
        %v493 = vunpack.c.l.b16 %v285
        %v494 = vunpack.c.h.b16 %v285
        %v495 = vunpack.c.l.b16 %v286
        %v496 = vunpack.c.h.b16 %v286
        %v497 = vunpack.c.l.b16 %v287
        %v498 = vunpack.c.h.b16 %v287
        %v499 = vunpack.c.l.b16 %v288
        %v500 = vunpack.c.h.b16 %v288
        %v501 = vunpack.c.l.b16 %v289
        %v502 = vunpack.c.h.b16 %v289
        %v503 = vunpack.c.l.b16 %v290
        %v504 = vunpack.c.h.b16 %v290
        %v505 = vpack.c.b16 %v445, %v441
        %v506 = vpack.c.b16 %v446, %v442
        %v507 = vpack.c.b16 %v447, %v443
        %v508 = vpack.c.b16 %v448, %v444
        %v509 = vpack.c.b16 %v453, %v449
        %v510 = vpack.c.b16 %v454, %v450
        %v511 = vpack.c.b16 %v455, %v451
        %v512 = vpack.c.b16 %v456, %v452
        %v513 = vpack.c.b16 %v461, %v457
        %v514 = vpack.c.b16 %v462, %v458
        %v515 = vpack.c.b16 %v463, %v459
        %v516 = vpack.c.b16 %v464, %v460
        %v517 = vpack.c.b16 %v469, %v465
        %v518 = vpack.c.b16 %v470, %v466
        %v519 = vpack.c.b16 %v471, %v467
        %v520 = vpack.c.b16 %v472, %v468
        %v521 = vpack.c.b16 %v477, %v473
        %v522 = vpack.c.b16 %v478, %v474
        %v523 = vpack.c.b16 %v479, %v475
        %v524 = vpack.c.b16 %v480, %v476
        %v525 = vpack.c.b16 %v485, %v481
        %v526 = vpack.c.b16 %v486, %v482
        %v527 = vpack.c.b16 %v487, %v483
        %v528 = vpack.c.b16 %v488, %v484
        %v529 = vpack.c.b16 %v493, %v489
        %v530 = vpack.c.b16 %v494, %v490
        %v531 = vpack.c.b16 %v495, %v491
        %v532 = vpack.c.b16 %v496, %v492
        %v533 = vpack.c.b16 %v501, %v497
        %v534 = vpack.c.b16 %v502, %v498
        %v535 = vpack.c.b16 %v503, %v499
        %v536 = vpack.c.b16 %v504, %v500
        %569 = vmatprep.subr.bf16.mxu0 %v506
        %570 = vmatpush1.bf16.msra.mxu0 %v505
        %571 = vmatprep.subr.bf16.mxu0 %v510
        %572 = vmatpush1.bf16.msra.mxu0 %v509
        %573 = vmatprep.subr.bf16.mxu0 %v514
        %574 = vmatpush1.bf16.msra.mxu0 %v513
        %575 = vmatprep.subr.bf16.mxu0 %v518
        %576 = vmatpush1.bf16.msra.mxu0 %v517
        %577 = vmatprep.subr.bf16.mxu0 %v522
        %578 = vmatpush1.bf16.msra.mxu0 %v521
        %579 = vmatprep.subr.bf16.mxu0 %v526
        %580 = vmatpush1.bf16.msra.mxu0 %v525
        %581 = vmatprep.subr.bf16.mxu0 %v530
        %582 = vmatpush1.bf16.msra.mxu0 %v529
        %583 = vmatprep.subr.bf16.mxu0 %v534
        %584 = vmatpush1.bf16.msra.mxu0 %v533
        %585 = vmatprep.subr.bf16.mxu0 0
        %586 = vmatpush1.bf16.msra.mxu0 0
        %587 = vmatprep.subr.bf16.mxu0 0
        %588 = vmatpush1.bf16.msra.mxu0 0
        %589 = vmatprep.subr.bf16.mxu0 0
        %590 = vmatpush1.bf16.msra.mxu0 0
        %591 = vmatprep.subr.bf16.mxu0 0
        %592 = vmatpush1.bf16.msra.mxu0 0
        %593 = vmatprep.subr.bf16.mxu0 0
        %594 = vmatpush1.bf16.msra.mxu0 0
        %595 = vmatprep.subr.bf16.mxu0 0
        %596 = vmatpush1.bf16.msra.mxu0 0
        %597 = vmatprep.subr.bf16.mxu0 0
        %598 = vmatpush1.bf16.msra.mxu0 0
        %599 = vmatprep.subr.bf16.mxu0 0
        %600 = vmatpush1.bf16.msra.mxu0 0
        %601 = vmatprep.mubr.bf16.mxu0 0
        %602 = vmatmul.mubr.bf16.gmra.mrb[0].mxu0 %v377
        %v603 = vpop.f32.mrb[0].mxu0
        %v604 = vadd.f32 %v296, %v603
        %v605 = vpop.f32.mrb[0].mxu0
        %v606 = vadd.f32 %v300, %v605
        %v607 = vpop.f32.mrb[0].mxu0
        %v608 = vadd.f32 %v296, %v607
        %v609 = vpop.f32.mrb[0].mxu0
        %v610 = vadd.f32 %v300, %v609
        %611 = vmatprep.mubr.bf16.mxu0 0
        %612 = vmatmul.mubr.bf16.gmra.mrb[0].mxu0 %v378
        %v613 = vpop.f32.mrb[0].mxu0
        %v614 = vadd.f32 %v296, %v613
        %v615 = vpop.f32.mrb[0].mxu0
        %v616 = vadd.f32 %v300, %v615
        %v617 = vpop.f32.mrb[0].mxu0
        %v618 = vadd.f32 %v296, %v617
        %v619 = vpop.f32.mrb[0].mxu0
        %v620 = vadd.f32 %v300, %v619
        %621 = vmatprep.mubr.bf16.mxu0 0
        %622 = vmatmul.mubr.bf16.gmra.mrb[0].mxu0 %v379
        %v623 = vpop.f32.mrb[0].mxu0
        %v624 = vadd.f32 %v296, %v623
        %v625 = vpop.f32.mrb[0].mxu0
        %v626 = vadd.f32 %v300, %v625
        %v627 = vpop.f32.mrb[0].mxu0
        %v628 = vadd.f32 %v296, %v627
        %v629 = vpop.f32.mrb[0].mxu0
        %v630 = vadd.f32 %v300, %v629
        %631 = vmatprep.mubr.bf16.mxu0 0
        %632 = vmatmul.mubr.bf16.gmra.mrb[0].mxu0 %v380
        %v633 = vpop.f32.mrb[0].mxu0
        %v634 = vadd.f32 %v296, %v633
        %v635 = vpop.f32.mrb[0].mxu0
        %v636 = vadd.f32 %v300, %v635
        %v637 = vpop.f32.mrb[0].mxu0
        %v638 = vadd.f32 %v296, %v637
        %v639 = vpop.f32.mrb[0].mxu0
        %v640 = vadd.f32 %v300, %v639
        %641 = vmatprep.mubr.bf16.mxu0 0
        %642 = vmatmul.mubr.bf16.gmra.mrb[0].mxu0 %v381
        %v643 = vpop.f32.mrb[0].mxu0
        %v644 = vadd.f32 %v296, %v643
        %v645 = vpop.f32.mrb[0].mxu0
        %v646 = vadd.f32 %v300, %v645
        %v647 = vpop.f32.mrb[0].mxu0
        %v648 = vadd.f32 %v296, %v647
        %v649 = vpop.f32.mrb[0].mxu0
        %v650 = vadd.f32 %v300, %v649
        %651 = vmatprep.mubr.bf16.mxu0 0
        %652 = vmatmul.mubr.bf16.gmra.mrb[0].mxu0 %v382
        %v653 = vpop.f32.mrb[0].mxu0
        %v654 = vadd.f32 %v296, %v653
        %v655 = vpop.f32.mrb[0].mxu0
        %v656 = vadd.f32 %v300, %v655
        %v657 = vpop.f32.mrb[0].mxu0
        %v658 = vadd.f32 %v296, %v657
        %v659 = vpop.f32.mrb[0].mxu0
        %v660 = vadd.f32 %v300, %v659
        %661 = vmatprep.mubr.bf16.mxu0 0
        %662 = vmatmul.mubr.bf16.gmra.mrb[0].mxu0 %v383
        %v663 = vpop.f32.mrb[0].mxu0
        %v664 = vadd.f32 %v296, %v663
        %v665 = vpop.f32.mrb[0].mxu0
        %v666 = vadd.f32 %v300, %v665
        %v667 = vpop.f32.mrb[0].mxu0
        %v668 = vadd.f32 %v296, %v667
        %v669 = vpop.f32.mrb[0].mxu0
        %v670 = vadd.f32 %v300, %v669
        %671 = vmatprep.mubr.bf16.mxu0 0
        %672 = vmatmul.mubr.bf16.gmra.mrb[0].mxu0 %v384
        %v673 = vpop.f32.mrb[0].mxu0
        %v674 = vadd.f32 %v296, %v673
        %v675 = vpop.f32.mrb[0].mxu0
        %v676 = vadd.f32 %v300, %v675
        %v677 = vpop.f32.mrb[0].mxu0
        %v678 = vadd.f32 %v296, %v677
        %v679 = vpop.f32.mrb[0].mxu0
        %v680 = vadd.f32 %v300, %v679
        %681 = vmatprep.mubr.bf16.mxu0 0
        %682 = vmatmul.mubr.bf16.gmra.mrb[0].mxu0 %v385
        %v683 = vpop.f32.mrb[0].mxu0
        %v684 = vadd.f32 %v296, %v683
        %v685 = vpop.f32.mrb[0].mxu0
        %v686 = vadd.f32 %v300, %v685
        %v687 = vpop.f32.mrb[0].mxu0
        %v688 = vadd.f32 %v296, %v687
        %v689 = vpop.f32.mrb[0].mxu0
        %v690 = vadd.f32 %v300, %v689
        %691 = vmatprep.mubr.bf16.mxu0 0
        %692 = vmatmul.mubr.bf16.gmra.mrb[0].mxu0 %v386
        %v693 = vpop.f32.mrb[0].mxu0
        %v694 = vadd.f32 %v296, %v693
        %v695 = vpop.f32.mrb[0].mxu0
        %v696 = vadd.f32 %v300, %v695
        %v697 = vpop.f32.mrb[0].mxu0
        %v698 = vadd.f32 %v296, %v697
        %v699 = vpop.f32.mrb[0].mxu0
        %v700 = vadd.f32 %v300, %v699
        %701 = vmatprep.mubr.bf16.mxu0 0
        %702 = vmatmul.mubr.bf16.gmra.mrb[0].mxu0 %v387
        %v703 = vpop.f32.mrb[0].mxu0
        %v704 = vadd.f32 %v296, %v703
        %v705 = vpop.f32.mrb[0].mxu0
        %v706 = vadd.f32 %v300, %v705
        %v707 = vpop.f32.mrb[0].mxu0
        %v708 = vadd.f32 %v296, %v707
        %v709 = vpop.f32.mrb[0].mxu0
        %v710 = vadd.f32 %v300, %v709
        %711 = vmatprep.mubr.bf16.mxu0 0
        %712 = vmatmul.mubr.bf16.gmra.mrb[0].mxu0 %v388
        %v713 = vpop.f32.mrb[0].mxu0
        %v714 = vadd.f32 %v296, %v713
        %v715 = vpop.f32.mrb[0].mxu0
        %v716 = vadd.f32 %v300, %v715
        %v717 = vpop.f32.mrb[0].mxu0
        %v718 = vadd.f32 %v296, %v717
        %v719 = vpop.f32.mrb[0].mxu0
        %v720 = vadd.f32 %v300, %v719
        %721 = vmatprep.mubr.bf16.mxu0 0
        %722 = vmatmul.mubr.bf16.gmra.mrb[0].mxu0 %v389
        %v723 = vpop.f32.mrb[0].mxu0
        %v724 = vadd.f32 %v296, %v723
        %v725 = vpop.f32.mrb[0].mxu0
        %v726 = vadd.f32 %v300, %v725
        %v727 = vpop.f32.mrb[0].mxu0
        %v728 = vadd.f32 %v296, %v727
        %v729 = vpop.f32.mrb[0].mxu0
        %v730 = vadd.f32 %v300, %v729
        %731 = vmatprep.mubr.bf16.mxu0 0
        %732 = vmatmul.mubr.bf16.gmra.mrb[0].mxu0 %v390
        %v733 = vpop.f32.mrb[0].mxu0
        %v734 = vadd.f32 %v296, %v733
        %v735 = vpop.f32.mrb[0].mxu0
        %v736 = vadd.f32 %v300, %v735
        %v737 = vpop.f32.mrb[0].mxu0
        %v738 = vadd.f32 %v296, %v737
        %v739 = vpop.f32.mrb[0].mxu0
        %v740 = vadd.f32 %v300, %v739
        %741 = vmatprep.mubr.bf16.mxu0 0
        %742 = vmatmul.mubr.bf16.gmra.mrb[0].mxu0 %v391
        %v743 = vpop.f32.mrb[0].mxu0
        %v744 = vadd.f32 %v296, %v743
        %v745 = vpop.f32.mrb[0].mxu0
        %v746 = vadd.f32 %v300, %v745
        %v747 = vpop.f32.mrb[0].mxu0
        %v748 = vadd.f32 %v296, %v747
        %v749 = vpop.f32.mrb[0].mxu0
        %v750 = vadd.f32 %v300, %v749
        %751 = vmatprep.mubr.bf16.mxu0 0
        %752 = vmatmul.mubr.bf16.gmra.mrb[0].mxu0 %v392
        %v753 = vpop.f32.mrb[0].mxu0
        %v754 = vadd.f32 %v296, %v753
        %v755 = vpop.f32.mrb[0].mxu0
        %v756 = vadd.f32 %v300, %v755
        %v757 = vpop.f32.mrb[0].mxu0
        %v758 = vadd.f32 %v296, %v757
        %v759 = vpop.f32.mrb[0].mxu0
        %v760 = vadd.f32 %v300, %v759
        %761 = vdwg.mxu0
        %762 = vmatprep.subr.bf16.mxu0 %v508
        %763 = vmatpush1.bf16.msra.mxu0 %v507
        %764 = vmatprep.subr.bf16.mxu0 %v512
        %765 = vmatpush1.bf16.msra.mxu0 %v511
        %766 = vmatprep.subr.bf16.mxu0 %v516
        %767 = vmatpush1.bf16.msra.mxu0 %v515
        %768 = vmatprep.subr.bf16.mxu0 %v520
        %769 = vmatpush1.bf16.msra.mxu0 %v519
        %770 = vmatprep.subr.bf16.mxu0 %v524
        %771 = vmatpush1.bf16.msra.mxu0 %v523
        %772 = vmatprep.subr.bf16.mxu0 %v528
        %773 = vmatpush1.bf16.msra.mxu0 %v527
        %774 = vmatprep.subr.bf16.mxu0 %v532
        %775 = vmatpush1.bf16.msra.mxu0 %v531
        %776 = vmatprep.subr.bf16.mxu0 %v536
        %777 = vmatpush1.bf16.msra.mxu0 %v535
        %778 = vmatprep.subr.bf16.mxu0 0
        %779 = vmatpush1.bf16.msra.mxu0 0
        %780 = vmatprep.subr.bf16.mxu0 0
        %781 = vmatpush1.bf16.msra.mxu0 0
        %782 = vmatprep.subr.bf16.mxu0 0
        %783 = vmatpush1.bf16.msra.mxu0 0
        %784 = vmatprep.subr.bf16.mxu0 0
        %785 = vmatpush1.bf16.msra.mxu0 0
        %786 = vmatprep.subr.bf16.mxu0 0
        %787 = vmatpush1.bf16.msra.mxu0 0
        %788 = vmatprep.subr.bf16.mxu0 0
        %789 = vmatpush1.bf16.msra.mxu0 0
        %790 = vmatprep.subr.bf16.mxu0 0
        %791 = vmatpush1.bf16.msra.mxu0 0
        %792 = vmatprep.subr.bf16.mxu0 0
        %793 = vmatpush1.bf16.msra.mxu0 0
        %794 = vmatprep.mubr.bf16.mxu0 0
        %795 = vmatmul.mubr.bf16.gmra.mrb[0].mxu0 %v377
        %v796 = vpop.f32.mrb[0].mxu0
        %v797 = vadd.f32 %v304, %v796
        %v798 = vpop.f32.mrb[0].mxu0
        %v799 = vadd.f32 %v308, %v798
        %v800 = vpop.f32.mrb[0].mxu0
        %v801 = vadd.f32 %v304, %v800
        %v802 = vpop.f32.mrb[0].mxu0
        %v803 = vadd.f32 %v308, %v802
        %804 = vmatprep.mubr.bf16.mxu0 0
        %805 = vmatmul.mubr.bf16.gmra.mrb[0].mxu0 %v378
        %v806 = vpop.f32.mrb[0].mxu0
        %v807 = vadd.f32 %v304, %v806
        %v808 = vpop.f32.mrb[0].mxu0
        %v809 = vadd.f32 %v308, %v808
        %v810 = vpop.f32.mrb[0].mxu0
        %v811 = vadd.f32 %v304, %v810
        %v812 = vpop.f32.mrb[0].mxu0
        %v813 = vadd.f32 %v308, %v812
        %814 = vmatprep.mubr.bf16.mxu0 0
        %815 = vmatmul.mubr.bf16.gmra.mrb[0].mxu0 %v379
        %v816 = vpop.f32.mrb[0].mxu0
        %v817 = vadd.f32 %v304, %v816
        %v818 = vpop.f32.mrb[0].mxu0
        %v819 = vadd.f32 %v308, %v818
        %v820 = vpop.f32.mrb[0].mxu0
        %v821 = vadd.f32 %v304, %v820
        %v822 = vpop.f32.mrb[0].mxu0
        %v823 = vadd.f32 %v308, %v822
        %824 = vmatprep.mubr.bf16.mxu0 0
        %825 = vmatmul.mubr.bf16.gmra.mrb[0].mxu0 %v380
        %v826 = vpop.f32.mrb[0].mxu0
        %v827 = vadd.f32 %v304, %v826
        %v828 = vpop.f32.mrb[0].mxu0
        %v829 = vadd.f32 %v308, %v828
        %v830 = vpop.f32.mrb[0].mxu0
        %v831 = vadd.f32 %v304, %v830
        %v832 = vpop.f32.mrb[0].mxu0
        %v833 = vadd.f32 %v308, %v832
        %834 = vmatprep.mubr.bf16.mxu0 0
        %835 = vmatmul.mubr.bf16.gmra.mrb[0].mxu0 %v381
        %v836 = vpop.f32.mrb[0].mxu0
        %v837 = vadd.f32 %v304, %v836
        %v838 = vpop.f32.mrb[0].mxu0
        %v839 = vadd.f32 %v308, %v838
        %v840 = vpop.f32.mrb[0].mxu0
        %v841 = vadd.f32 %v304, %v840
        %v842 = vpop.f32.mrb[0].mxu0
        %v843 = vadd.f32 %v308, %v842
        %844 = vmatprep.mubr.bf16.mxu0 0
        %845 = vmatmul.mubr.bf16.gmra.mrb[0].mxu0 %v382
        %v846 = vpop.f32.mrb[0].mxu0
        %v847 = vadd.f32 %v304, %v846
        %v848 = vpop.f32.mrb[0].mxu0
        %v849 = vadd.f32 %v308, %v848
        %v850 = vpop.f32.mrb[0].mxu0
        %v851 = vadd.f32 %v304, %v850
        %v852 = vpop.f32.mrb[0].mxu0
        %v853 = vadd.f32 %v308, %v852
        %854 = vmatprep.mubr.bf16.mxu0 0
        %855 = vmatmul.mubr.bf16.gmra.mrb[0].mxu0 %v383
        %v856 = vpop.f32.mrb[0].mxu0
        %v857 = vadd.f32 %v304, %v856
        %v858 = vpop.f32.mrb[0].mxu0
        %v859 = vadd.f32 %v308, %v858
        %v860 = vpop.f32.mrb[0].mxu0
        %v861 = vadd.f32 %v304, %v860
        %v862 = vpop.f32.mrb[0].mxu0
        %v863 = vadd.f32 %v308, %v862
        %864 = vmatprep.mubr.bf16.mxu0 0
        %865 = vmatmul.mubr.bf16.gmra.mrb[0].mxu0 %v384
        %v866 = vpop.f32.mrb[0].mxu0
        %v867 = vadd.f32 %v304, %v866
        %v868 = vpop.f32.mrb[0].mxu0
        %v869 = vadd.f32 %v308, %v868
        %v870 = vpop.f32.mrb[0].mxu0
        %v871 = vadd.f32 %v304, %v870
        %v872 = vpop.f32.mrb[0].mxu0
        %v873 = vadd.f32 %v308, %v872
        %874 = vmatprep.mubr.bf16.mxu0 0
        %875 = vmatmul.mubr.bf16.gmra.mrb[0].mxu0 %v385
        %v876 = vpop.f32.mrb[0].mxu0
        %v877 = vadd.f32 %v304, %v876
        %v878 = vpop.f32.mrb[0].mxu0
        %v879 = vadd.f32 %v308, %v878
        %v880 = vpop.f32.mrb[0].mxu0
        %v881 = vadd.f32 %v304, %v880
        %v882 = vpop.f32.mrb[0].mxu0
        %v883 = vadd.f32 %v308, %v882
        %884 = vmatprep.mubr.bf16.mxu0 0
        %885 = vmatmul.mubr.bf16.gmra.mrb[0].mxu0 %v386
        %v886 = vpop.f32.mrb[0].mxu0
        %v887 = vadd.f32 %v304, %v886
        %v888 = vpop.f32.mrb[0].mxu0
        %v889 = vadd.f32 %v308, %v888
        %v890 = vpop.f32.mrb[0].mxu0
        %v891 = vadd.f32 %v304, %v890
        %v892 = vpop.f32.mrb[0].mxu0
        %v893 = vadd.f32 %v308, %v892
        %894 = vmatprep.mubr.bf16.mxu0 0
        %895 = vmatmul.mubr.bf16.gmra.mrb[0].mxu0 %v387
        %v896 = vpop.f32.mrb[0].mxu0
        %v897 = vadd.f32 %v304, %v896
        %v898 = vpop.f32.mrb[0].mxu0
        %v899 = vadd.f32 %v308, %v898
        %v900 = vpop.f32.mrb[0].mxu0
        %v901 = vadd.f32 %v304, %v900
        %v902 = vpop.f32.mrb[0].mxu0
        %v903 = vadd.f32 %v308, %v902
        %904 = vmatprep.mubr.bf16.mxu0 0
        %905 = vmatmul.mubr.bf16.gmra.mrb[0].mxu0 %v388
        %v906 = vpop.f32.mrb[0].mxu0
        %v907 = vadd.f32 %v304, %v906
        %v908 = vpop.f32.mrb[0].mxu0
        %v909 = vadd.f32 %v308, %v908
        %v910 = vpop.f32.mrb[0].mxu0
        %v911 = vadd.f32 %v304, %v910
        %v912 = vpop.f32.mrb[0].mxu0
        %v913 = vadd.f32 %v308, %v912
        %914 = vmatprep.mubr.bf16.mxu0 0
        %915 = vmatmul.mubr.bf16.gmra.mrb[0].mxu0 %v389
        %v916 = vpop.f32.mrb[0].mxu0
        %v917 = vadd.f32 %v304, %v916
        %v918 = vpop.f32.mrb[0].mxu0
        %v919 = vadd.f32 %v308, %v918
        %v920 = vpop.f32.mrb[0].mxu0
        %v921 = vadd.f32 %v304, %v920
        %v922 = vpop.f32.mrb[0].mxu0
        %v923 = vadd.f32 %v308, %v922
        %924 = vmatprep.mubr.bf16.mxu0 0
        %925 = vmatmul.mubr.bf16.gmra.mrb[0].mxu0 %v390
        %v926 = vpop.f32.mrb[0].mxu0
        %v927 = vadd.f32 %v304, %v926
        %v928 = vpop.f32.mrb[0].mxu0
        %v929 = vadd.f32 %v308, %v928
        %v930 = vpop.f32.mrb[0].mxu0
        %v931 = vadd.f32 %v304, %v930
        %v932 = vpop.f32.mrb[0].mxu0
        %v933 = vadd.f32 %v308, %v932
        %934 = vmatprep.mubr.bf16.mxu0 0
        %935 = vmatmul.mubr.bf16.gmra.mrb[0].mxu0 %v391
        %v936 = vpop.f32.mrb[0].mxu0
        %v937 = vadd.f32 %v304, %v936
        %v938 = vpop.f32.mrb[0].mxu0
        %v939 = vadd.f32 %v308, %v938
        %v940 = vpop.f32.mrb[0].mxu0
        %v941 = vadd.f32 %v304, %v940
        %v942 = vpop.f32.mrb[0].mxu0
        %v943 = vadd.f32 %v308, %v942
        %944 = vmatprep.mubr.bf16.mxu0 0
        %945 = vmatmul.mubr.bf16.gmra.mrb[0].mxu0 %v392
        %v946 = vpop.f32.mrb[0].mxu0
        %v947 = vadd.f32 %v304, %v946
        %v948 = vpop.f32.mrb[0].mxu0
        %v949 = vadd.f32 %v308, %v948
        %v950 = vpop.f32.mrb[0].mxu0
        %v951 = vadd.f32 %v304, %v950
        %v952 = vpop.f32.mrb[0].mxu0
        %v953 = vadd.f32 %v308, %v952
        %954 = vdwg.mxu0
        %v955 = vmax.f32 %v797, 0.0
        %v956 = vmax.f32 %v799, 0.0
        %v957 = vmax.f32 %v801, 0.0
        %v958 = vmax.f32 %v803, 0.0
        %v959 = vmax.f32 %v807, 0.0
        %v960 = vmax.f32 %v809, 0.0
        %v961 = vmax.f32 %v811, 0.0
        %v962 = vmax.f32 %v813, 0.0
        %v963 = vmax.f32 %v817, 0.0
        %v964 = vmax.f32 %v819, 0.0
        %v965 = vmax.f32 %v821, 0.0
        %v966 = vmax.f32 %v823, 0.0
        %v967 = vmax.f32 %v827, 0.0
        %v968 = vmax.f32 %v829, 0.0
        %v969 = vmax.f32 %v831, 0.0
        %v970 = vmax.f32 %v833, 0.0
        %v971 = vmax.f32 %v837, 0.0
        %v972 = vmax.f32 %v839, 0.0
        %v973 = vmax.f32 %v841, 0.0
        %v974 = vmax.f32 %v843, 0.0
        %v975 = vmax.f32 %v847, 0.0
        %v976 = vmax.f32 %v849, 0.0
        %v977 = vmax.f32 %v851, 0.0
        %v978 = vmax.f32 %v853, 0.0
        %v979 = vmax.f32 %v857, 0.0
        %v980 = vmax.f32 %v859, 0.0
        %v981 = vmax.f32 %v861, 0.0
        %v982 = vmax.f32 %v863, 0.0
        %v983 = vmax.f32 %v867, 0.0
        %v984 = vmax.f32 %v869, 0.0
        %v985 = vmax.f32 %v871, 0.0
        %v986 = vmax.f32 %v873, 0.0
        %v987 = vmax.f32 %v877, 0.0
        %v988 = vmax.f32 %v879, 0.0
        %v989 = vmax.f32 %v881, 0.0
        %v990 = vmax.f32 %v883, 0.0
        %v991 = vmax.f32 %v887, 0.0
        %v992 = vmax.f32 %v889, 0.0
        %v993 = vmax.f32 %v891, 0.0
        %v994 = vmax.f32 %v893, 0.0
        %v995 = vmax.f32 %v897, 0.0
        %v996 = vmax.f32 %v899, 0.0
        %v997 = vmax.f32 %v901, 0.0
        %v998 = vmax.f32 %v903, 0.0
        %v999 = vmax.f32 %v907, 0.0
        %v1000 = vmax.f32 %v909, 0.0
        %v1001 = vmax.f32 %v911, 0.0
        %v1002 = vmax.f32 %v913, 0.0
        %v1003 = vmax.f32 %v917, 0.0
        %v1004 = vmax.f32 %v919, 0.0
        %v1005 = vmax.f32 %v921, 0.0
        %v1006 = vmax.f32 %v923, 0.0
        %v1007 = vmax.f32 %v927, 0.0
        %v1008 = vmax.f32 %v929, 0.0
        %v1009 = vmax.f32 %v931, 0.0
        %v1010 = vmax.f32 %v933, 0.0
        %v1011 = vmax.f32 %v937, 0.0
        %v1012 = vmax.f32 %v939, 0.0
        %v1013 = vmax.f32 %v941, 0.0
        %v1014 = vmax.f32 %v943, 0.0
        %v1015 = vmax.f32 %v947, 0.0
        %v1016 = vmax.f32 %v949, 0.0
        %v1017 = vmax.f32 %v951, 0.0
        %v1018 = vmax.f32 %v953, 0.0
        %v1019 = vmul.f32 %v604, %v955
        %v1020 = vmul.f32 %v606, %v956
        %v1021 = vmul.f32 %v608, %v957
        %v1022 = vmul.f32 %v610, %v958
        %v1023 = vmul.f32 %v614, %v959
        %v1024 = vmul.f32 %v616, %v960
        %v1025 = vmul.f32 %v618, %v961
        %v1026 = vmul.f32 %v620, %v962
        %v1027 = vmul.f32 %v624, %v963
        %v1028 = vmul.f32 %v626, %v964
        %v1029 = vmul.f32 %v628, %v965
        %v1030 = vmul.f32 %v630, %v966
        %v1031 = vmul.f32 %v634, %v967
        %v1032 = vmul.f32 %v636, %v968
        %v1033 = vmul.f32 %v638, %v969
        %v1034 = vmul.f32 %v640, %v970
        %v1035 = vmul.f32 %v644, %v971
        %v1036 = vmul.f32 %v646, %v972
        %v1037 = vmul.f32 %v648, %v973
        %v1038 = vmul.f32 %v650, %v974
        %v1039 = vmul.f32 %v654, %v975
        %v1040 = vmul.f32 %v656, %v976
        %v1041 = vmul.f32 %v658, %v977
        %v1042 = vmul.f32 %v660, %v978
        %v1043 = vmul.f32 %v664, %v979
        %v1044 = vmul.f32 %v666, %v980
        %v1045 = vmul.f32 %v668, %v981
        %v1046 = vmul.f32 %v670, %v982
        %v1047 = vmul.f32 %v674, %v983
        %v1048 = vmul.f32 %v676, %v984
        %v1049 = vmul.f32 %v678, %v985
        %v1050 = vmul.f32 %v680, %v986
        %v1051 = vmul.f32 %v684, %v987
        %v1052 = vmul.f32 %v686, %v988
        %v1053 = vmul.f32 %v688, %v989
        %v1054 = vmul.f32 %v690, %v990
        %v1055 = vmul.f32 %v694, %v991
        %v1056 = vmul.f32 %v696, %v992
        %v1057 = vmul.f32 %v698, %v993
        %v1058 = vmul.f32 %v700, %v994
        %v1059 = vmul.f32 %v704, %v995
        %v1060 = vmul.f32 %v706, %v996
        %v1061 = vmul.f32 %v708, %v997
        %v1062 = vmul.f32 %v710, %v998
        %v1063 = vmul.f32 %v714, %v999
        %v1064 = vmul.f32 %v716, %v1000
        %v1065 = vmul.f32 %v718, %v1001
        %v1066 = vmul.f32 %v720, %v1002
        %v1067 = vmul.f32 %v724, %v1003
        %v1068 = vmul.f32 %v726, %v1004
        %v1069 = vmul.f32 %v728, %v1005
        %v1070 = vmul.f32 %v730, %v1006
        %v1071 = vmul.f32 %v734, %v1007
        %v1072 = vmul.f32 %v736, %v1008
        %v1073 = vmul.f32 %v738, %v1009
        %v1074 = vmul.f32 %v740, %v1010
        %v1075 = vmul.f32 %v744, %v1011
        %v1076 = vmul.f32 %v746, %v1012
        %v1077 = vmul.f32 %v748, %v1013
        %v1078 = vmul.f32 %v750, %v1014
        %v1079 = vmul.f32 %v754, %v1015
        %v1080 = vmul.f32 %v756, %v1016
        %v1081 = vmul.f32 %v758, %v1017
        %v1082 = vmul.f32 %v760, %v1018
        %v1083 = vpack.c.bf16 %v1021, %v1019
        %v1084 = vpack.c.bf16 %v1022, %v1020
        %v1085 = vpack.c.bf16 %v1025, %v1023
        %v1086 = vpack.c.bf16 %v1026, %v1024
        %v1087 = vpack.c.bf16 %v1029, %v1027
        %v1088 = vpack.c.bf16 %v1030, %v1028
        %v1089 = vpack.c.bf16 %v1033, %v1031
        %v1090 = vpack.c.bf16 %v1034, %v1032
        %v1091 = vpack.c.bf16 %v1037, %v1035
        %v1092 = vpack.c.bf16 %v1038, %v1036
        %v1093 = vpack.c.bf16 %v1041, %v1039
        %v1094 = vpack.c.bf16 %v1042, %v1040
        %v1095 = vpack.c.bf16 %v1045, %v1043
        %v1096 = vpack.c.bf16 %v1046, %v1044
        %v1097 = vpack.c.bf16 %v1049, %v1047
        %v1098 = vpack.c.bf16 %v1050, %v1048
        %v1099 = vpack.c.bf16 %v1053, %v1051
        %v1100 = vpack.c.bf16 %v1054, %v1052
        %v1101 = vpack.c.bf16 %v1057, %v1055
        %v1102 = vpack.c.bf16 %v1058, %v1056
        %v1103 = vpack.c.bf16 %v1061, %v1059
        %v1104 = vpack.c.bf16 %v1062, %v1060
        %v1105 = vpack.c.bf16 %v1065, %v1063
        %v1106 = vpack.c.bf16 %v1066, %v1064
        %v1107 = vpack.c.bf16 %v1069, %v1067
        %v1108 = vpack.c.bf16 %v1070, %v1068
        %v1109 = vpack.c.bf16 %v1073, %v1071
        %v1110 = vpack.c.bf16 %v1074, %v1072
        %v1111 = vpack.c.bf16 %v1077, %v1075
        %v1112 = vpack.c.bf16 %v1078, %v1076
        %v1113 = vpack.c.bf16 %v1081, %v1079
        %v1114 = vpack.c.bf16 %v1082, %v1080
        %v1115 = vld [vmem:[%s3] sm:$0xf]
        %v1116 = vld [vmem:[%s3 + $0x4] sm:$0xf]
        %v1117 = vld [vmem:[%s3 + $0x8] sm:$0xf]
        %v1118 = vld [vmem:[%s3 + $0xc] sm:$0xf]
        %v1119 = vld [vmem:[%s3 + $0x10] sm:$0xf]
        %v1120 = vld [vmem:[%s3 + $0x14] sm:$0xf]
        %v1121 = vld [vmem:[%s3 + $0x18] sm:$0xf]
        %v1122 = vld [vmem:[%s3 + $0x1c] sm:$0xf]
        %v1123 = vld [vmem:[%s3 + $0x20] sm:$0xf]
        %v1124 = vld [vmem:[%s3 + $0x24] sm:$0xf]
        %v1125 = vld [vmem:[%s3 + $0x28] sm:$0xf]
        %v1126 = vld [vmem:[%s3 + $0x2c] sm:$0xf]
        %v1127 = vld [vmem:[%s3 + $0x30] sm:$0xf]
        %v1128 = vld [vmem:[%s3 + $0x34] sm:$0xf]
        %v1129 = vld [vmem:[%s3 + $0x38] sm:$0xf]
        %v1130 = vld [vmem:[%s3 + $0x3c] sm:$0xf]
        %v1131 = vld [vmem:[%s3 + $0x40] sm:$0xf]
        %v1132 = vld [vmem:[%s3 + $0x44] sm:$0xf]
        %v1133 = vld [vmem:[%s3 + $0x48] sm:$0xf]
        %v1134 = vld [vmem:[%s3 + $0x4c] sm:$0xf]
        %v1135 = vld [vmem:[%s3 + $0x50] sm:$0xf]
        %v1136 = vld [vmem:[%s3 + $0x54] sm:$0xf]
        %v1137 = vld [vmem:[%s3 + $0x58] sm:$0xf]
        %v1138 = vld [vmem:[%s3 + $0x5c] sm:$0xf]
        %v1139 = vld [vmem:[%s3 + $0x60] sm:$0xf]
        %v1140 = vld [vmem:[%s3 + $0x64] sm:$0xf]
        %v1141 = vld [vmem:[%s3 + $0x68] sm:$0xf]
        %v1142 = vld [vmem:[%s3 + $0x6c] sm:$0xf]
        %v1143 = vld [vmem:[%s3 + $0x70] sm:$0xf]
        %v1144 = vld [vmem:[%s3 + $0x74] sm:$0xf]
        %v1145 = vld [vmem:[%s3 + $0x78] sm:$0xf]
        %v1146 = vld [vmem:[%s3 + $0x7c] sm:$0xf]
        %v1147 = vld [vmem:[%s4] sm:$0x1]
        %v1149 = vlaneseq
        %v1150 = vshrl.u32 %v1149, 7
        %v1151 = vsub.s32 0, %v1150
        %v1152 = vrot.slane %v1147, %v1151
        %v1186 = vunpack.c.l.b16 %v1115
        %v1187 = vunpack.c.l.b16 %v1116
        %v1188 = vunpack.c.l.b16 %v1117
        %v1189 = vunpack.c.l.b16 %v1118
        %v1190 = vunpack.c.l.b16 %v1119
        %v1191 = vunpack.c.l.b16 %v1120
        %v1192 = vunpack.c.l.b16 %v1121
        %v1193 = vunpack.c.l.b16 %v1122
        %v1194 = vunpack.c.l.b16 %v1123
        %v1195 = vunpack.c.l.b16 %v1124
        %v1196 = vunpack.c.l.b16 %v1125
        %v1197 = vunpack.c.l.b16 %v1126
        %v1198 = vunpack.c.l.b16 %v1127
        %v1199 = vunpack.c.l.b16 %v1128
        %v1200 = vunpack.c.l.b16 %v1129
        %v1201 = vunpack.c.l.b16 %v1130
        %v1202 = vunpack.c.l.b16 %v1131
        %v1203 = vunpack.c.l.b16 %v1132
        %v1204 = vunpack.c.l.b16 %v1133
        %v1205 = vunpack.c.l.b16 %v1134
        %v1206 = vunpack.c.l.b16 %v1135
        %v1207 = vunpack.c.l.b16 %v1136
        %v1208 = vunpack.c.l.b16 %v1137
        %v1209 = vunpack.c.l.b16 %v1138
        %v1210 = vunpack.c.l.b16 %v1139
        %v1211 = vunpack.c.l.b16 %v1140
        %v1212 = vunpack.c.l.b16 %v1141
        %v1213 = vunpack.c.l.b16 %v1142
        %v1214 = vunpack.c.l.b16 %v1143
        %v1215 = vunpack.c.l.b16 %v1144
        %v1216 = vunpack.c.l.b16 %v1145
        %v1217 = vunpack.c.l.b16 %v1146
        %v1218 = vpack.c.b16 %v1187, %v1186
        %v1219 = vpack.c.b16 %v1189, %v1188
        %v1220 = vpack.c.b16 %v1191, %v1190
        %v1221 = vpack.c.b16 %v1193, %v1192
        %v1222 = vpack.c.b16 %v1195, %v1194
        %v1223 = vpack.c.b16 %v1197, %v1196
        %v1224 = vpack.c.b16 %v1199, %v1198
        %v1225 = vpack.c.b16 %v1201, %v1200
        %v1226 = vpack.c.b16 %v1203, %v1202
        %v1227 = vpack.c.b16 %v1205, %v1204
        %v1228 = vpack.c.b16 %v1207, %v1206
        %v1229 = vpack.c.b16 %v1209, %v1208
        %v1230 = vpack.c.b16 %v1211, %v1210
        %v1231 = vpack.c.b16 %v1213, %v1212
        %v1232 = vpack.c.b16 %v1215, %v1214
        %v1233 = vpack.c.b16 %v1217, %v1216
        %1250 = vmatprep.subr.bf16.mxu0 0
        %1251 = vmatpush1.bf16.msra.mxu0 %v1218
        %1252 = vmatprep.subr.bf16.mxu0 0
        %1253 = vmatpush1.bf16.msra.mxu0 %v1219
        %1254 = vmatprep.subr.bf16.mxu0 0
        %1255 = vmatpush1.bf16.msra.mxu0 %v1220
        %1256 = vmatprep.subr.bf16.mxu0 0
        %1257 = vmatpush1.bf16.msra.mxu0 %v1221
        %1258 = vmatprep.subr.bf16.mxu0 0
        %1259 = vmatpush1.bf16.msra.mxu0 %v1222
        %1260 = vmatprep.subr.bf16.mxu0 0
        %1261 = vmatpush1.bf16.msra.mxu0 %v1223
        %1262 = vmatprep.subr.bf16.mxu0 0
        %1263 = vmatpush1.bf16.msra.mxu0 %v1224
        %1264 = vmatprep.subr.bf16.mxu0 0
        %1265 = vmatpush1.bf16.msra.mxu0 %v1225
        %1266 = vmatprep.subr.bf16.mxu0 0
        %1267 = vmatpush1.bf16.msra.mxu0 %v1226
        %1268 = vmatprep.subr.bf16.mxu0 0
        %1269 = vmatpush1.bf16.msra.mxu0 %v1227
        %1270 = vmatprep.subr.bf16.mxu0 0
        %1271 = vmatpush1.bf16.msra.mxu0 %v1228
        %1272 = vmatprep.subr.bf16.mxu0 0
        %1273 = vmatpush1.bf16.msra.mxu0 %v1229
        %1274 = vmatprep.subr.bf16.mxu0 0
        %1275 = vmatpush1.bf16.msra.mxu0 %v1230
        %1276 = vmatprep.subr.bf16.mxu0 0
        %1277 = vmatpush1.bf16.msra.mxu0 %v1231
        %1278 = vmatprep.subr.bf16.mxu0 0
        %1279 = vmatpush1.bf16.msra.mxu0 %v1232
        %1280 = vmatprep.subr.bf16.mxu0 0
        %1281 = vmatpush1.bf16.msra.mxu0 %v1233
        %1282 = vmatprep.mubr.bf16.mxu0 %v1084
        %1283 = vmatmul.mubr.bf16.gmra.mrb[0].mxu0 %v1083
        %v1284 = vpop.f32.mrb[0].mxu0
        %v1285 = vadd.f32 %v1152, %v1284
        %v1286 = vpop.f32.mrb[0].mxu0
        %v1287 = vpop.f32.mrb[0].mxu0
        %v1288 = vadd.f32 %v1152, %v1287
        %v1289 = vpop.f32.mrb[0].mxu0
        %1290 = vmatprep.mubr.bf16.mxu0 %v1086
        %1291 = vmatmul.mubr.bf16.gmra.mrb[0].mxu0 %v1085
        %v1292 = vpop.f32.mrb[0].mxu0
        %v1293 = vadd.f32 %v1152, %v1292
        %v1294 = vpop.f32.mrb[0].mxu0
        %v1295 = vpop.f32.mrb[0].mxu0
        %v1296 = vadd.f32 %v1152, %v1295
        %v1297 = vpop.f32.mrb[0].mxu0
        %1298 = vmatprep.mubr.bf16.mxu0 %v1088
        %1299 = vmatmul.mubr.bf16.gmra.mrb[0].mxu0 %v1087
        %v1300 = vpop.f32.mrb[0].mxu0
        %v1301 = vadd.f32 %v1152, %v1300
        %v1302 = vpop.f32.mrb[0].mxu0
        %v1303 = vpop.f32.mrb[0].mxu0
        %v1304 = vadd.f32 %v1152, %v1303
        %v1305 = vpop.f32.mrb[0].mxu0
        %1306 = vmatprep.mubr.bf16.mxu0 %v1090
        %1307 = vmatmul.mubr.bf16.gmra.mrb[0].mxu0 %v1089
        %v1308 = vpop.f32.mrb[0].mxu0
        %v1309 = vadd.f32 %v1152, %v1308
        %v1310 = vpop.f32.mrb[0].mxu0
        %v1311 = vpop.f32.mrb[0].mxu0
        %v1312 = vadd.f32 %v1152, %v1311
        %v1313 = vpop.f32.mrb[0].mxu0
        %1314 = vmatprep.mubr.bf16.mxu0 %v1092
        %1315 = vmatmul.mubr.bf16.gmra.mrb[0].mxu0 %v1091
        %v1316 = vpop.f32.mrb[0].mxu0
        %v1317 = vadd.f32 %v1152, %v1316
        %v1318 = vpop.f32.mrb[0].mxu0
        %v1319 = vpop.f32.mrb[0].mxu0
        %v1320 = vadd.f32 %v1152, %v1319
        %v1321 = vpop.f32.mrb[0].mxu0
        %1322 = vmatprep.mubr.bf16.mxu0 %v1094
        %1323 = vmatmul.mubr.bf16.gmra.mrb[0].mxu0 %v1093
        %v1324 = vpop.f32.mrb[0].mxu0
        %v1325 = vadd.f32 %v1152, %v1324
        %v1326 = vpop.f32.mrb[0].mxu0
        %v1327 = vpop.f32.mrb[0].mxu0
        %v1328 = vadd.f32 %v1152, %v1327
        %v1329 = vpop.f32.mrb[0].mxu0
        %1330 = vmatprep.mubr.bf16.mxu0 %v1096
        %1331 = vmatmul.mubr.bf16.gmra.mrb[0].mxu0 %v1095
        %v1332 = vpop.f32.mrb[0].mxu0
        %v1333 = vadd.f32 %v1152, %v1332
        %v1334 = vpop.f32.mrb[0].mxu0
        %v1335 = vpop.f32.mrb[0].mxu0
        %v1336 = vadd.f32 %v1152, %v1335
        %v1337 = vpop.f32.mrb[0].mxu0
        %1338 = vmatprep.mubr.bf16.mxu0 %v1098
        %1339 = vmatmul.mubr.bf16.gmra.mrb[0].mxu0 %v1097
        %v1340 = vpop.f32.mrb[0].mxu0
        %v1341 = vadd.f32 %v1152, %v1340
        %v1342 = vpop.f32.mrb[0].mxu0
        %v1343 = vpop.f32.mrb[0].mxu0
        %v1344 = vadd.f32 %v1152, %v1343
        %v1345 = vpop.f32.mrb[0].mxu0
        %1346 = vmatprep.mubr.bf16.mxu0 %v1100
        %1347 = vmatmul.mubr.bf16.gmra.mrb[0].mxu0 %v1099
        %v1348 = vpop.f32.mrb[0].mxu0
        %v1349 = vadd.f32 %v1152, %v1348
        %v1350 = vpop.f32.mrb[0].mxu0
        %v1351 = vpop.f32.mrb[0].mxu0
        %v1352 = vadd.f32 %v1152, %v1351
        %v1353 = vpop.f32.mrb[0].mxu0
        %1354 = vmatprep.mubr.bf16.mxu0 %v1102
        %1355 = vmatmul.mubr.bf16.gmra.mrb[0].mxu0 %v1101
        %v1356 = vpop.f32.mrb[0].mxu0
        %v1357 = vadd.f32 %v1152, %v1356
        %v1358 = vpop.f32.mrb[0].mxu0
        %v1359 = vpop.f32.mrb[0].mxu0
        %v1360 = vadd.f32 %v1152, %v1359
        %v1361 = vpop.f32.mrb[0].mxu0
        %1362 = vmatprep.mubr.bf16.mxu0 %v1104
        %1363 = vmatmul.mubr.bf16.gmra.mrb[0].mxu0 %v1103
        %v1364 = vpop.f32.mrb[0].mxu0
        %v1365 = vadd.f32 %v1152, %v1364
        %v1366 = vpop.f32.mrb[0].mxu0
        %v1367 = vpop.f32.mrb[0].mxu0
        %v1368 = vadd.f32 %v1152, %v1367
        %v1369 = vpop.f32.mrb[0].mxu0
        %1370 = vmatprep.mubr.bf16.mxu0 %v1106
        %1371 = vmatmul.mubr.bf16.gmra.mrb[0].mxu0 %v1105
        %v1372 = vpop.f32.mrb[0].mxu0
        %v1373 = vadd.f32 %v1152, %v1372
        %v1374 = vpop.f32.mrb[0].mxu0
        %v1375 = vpop.f32.mrb[0].mxu0
        %v1376 = vadd.f32 %v1152, %v1375
        %v1377 = vpop.f32.mrb[0].mxu0
        %1378 = vmatprep.mubr.bf16.mxu0 %v1108
        %1379 = vmatmul.mubr.bf16.gmra.mrb[0].mxu0 %v1107
        %v1380 = vpop.f32.mrb[0].mxu0
        %v1381 = vadd.f32 %v1152, %v1380
        %v1382 = vpop.f32.mrb[0].mxu0
        %v1383 = vpop.f32.mrb[0].mxu0
        %v1384 = vadd.f32 %v1152, %v1383
        %v1385 = vpop.f32.mrb[0].mxu0
        %1386 = vmatprep.mubr.bf16.mxu0 %v1110
        %1387 = vmatmul.mubr.bf16.gmra.mrb[0].mxu0 %v1109
        %v1388 = vpop.f32.mrb[0].mxu0
        %v1389 = vadd.f32 %v1152, %v1388
        %v1390 = vpop.f32.mrb[0].mxu0
        %v1391 = vpop.f32.mrb[0].mxu0
        %v1392 = vadd.f32 %v1152, %v1391
        %v1393 = vpop.f32.mrb[0].mxu0
        %1394 = vmatprep.mubr.bf16.mxu0 %v1112
        %1395 = vmatmul.mubr.bf16.gmra.mrb[0].mxu0 %v1111
        %v1396 = vpop.f32.mrb[0].mxu0
        %v1397 = vadd.f32 %v1152, %v1396
        %v1398 = vpop.f32.mrb[0].mxu0
        %v1399 = vpop.f32.mrb[0].mxu0
        %v1400 = vadd.f32 %v1152, %v1399
        %v1401 = vpop.f32.mrb[0].mxu0
        %1402 = vmatprep.mubr.bf16.mxu0 %v1114
        %1403 = vmatmul.mubr.bf16.gmra.mrb[0].mxu0 %v1113
        %v1404 = vpop.f32.mrb[0].mxu0
        %v1405 = vadd.f32 %v1152, %v1404
        %v1406 = vpop.f32.mrb[0].mxu0
        %v1407 = vpop.f32.mrb[0].mxu0
        %v1408 = vadd.f32 %v1152, %v1407
        %v1409 = vpop.f32.mrb[0].mxu0
        %1410 = vdwg.mxu0
        %v1411 = vunpack.c.l.bf16 %v227
        %v1412 = vunpack.c.l.bf16 %v228
        %v1413 = vunpack.c.l.bf16 %v229
        %v1414 = vunpack.c.l.bf16 %v230
        %v1415 = vunpack.c.l.bf16 %v231
        %v1416 = vunpack.c.l.bf16 %v232
        %v1417 = vunpack.c.l.bf16 %v233
        %v1418 = vunpack.c.l.bf16 %v234
        %v1419 = vunpack.c.l.bf16 %v235
        %v1420 = vunpack.c.l.bf16 %v236
        %v1421 = vunpack.c.l.bf16 %v237
        %v1422 = vunpack.c.l.bf16 %v238
        %v1423 = vunpack.c.l.bf16 %v239
        %v1424 = vunpack.c.l.bf16 %v240
        %v1425 = vunpack.c.l.bf16 %v241
        %v1426 = vunpack.c.l.bf16 %v242
        %v1427 = vunpack.c.l.bf16 %v243
        %v1428 = vunpack.c.l.bf16 %v244
        %v1429 = vunpack.c.l.bf16 %v245
        %v1430 = vunpack.c.l.bf16 %v246
        %v1431 = vunpack.c.l.bf16 %v247
        %v1432 = vunpack.c.l.bf16 %v248
        %v1433 = vunpack.c.l.bf16 %v249
        %v1434 = vunpack.c.l.bf16 %v250
        %v1435 = vunpack.c.l.bf16 %v251
        %v1436 = vunpack.c.l.bf16 %v252
        %v1437 = vunpack.c.l.bf16 %v253
        %v1438 = vunpack.c.l.bf16 %v254
        %v1439 = vunpack.c.l.bf16 %v255
        %v1440 = vunpack.c.l.bf16 %v256
        %v1441 = vunpack.c.l.bf16 %v257
        %v1442 = vunpack.c.l.bf16 %v258
        %v1443 = vadd.f32 %v1285, %v1411
        %v1444 = vadd.f32 %v1288, %v1412
        %v1445 = vadd.f32 %v1293, %v1413
        %v1446 = vadd.f32 %v1296, %v1414
        %v1447 = vadd.f32 %v1301, %v1415
        %v1448 = vadd.f32 %v1304, %v1416
        %v1449 = vadd.f32 %v1309, %v1417
        %v1450 = vadd.f32 %v1312, %v1418
        %v1451 = vadd.f32 %v1317, %v1419
        %v1452 = vadd.f32 %v1320, %v1420
        %v1453 = vadd.f32 %v1325, %v1421
        %v1454 = vadd.f32 %v1328, %v1422
        %v1455 = vadd.f32 %v1333, %v1423
        %v1456 = vadd.f32 %v1336, %v1424
        %v1457 = vadd.f32 %v1341, %v1425
        %v1458 = vadd.f32 %v1344, %v1426
        %v1459 = vadd.f32 %v1349, %v1427
        %v1460 = vadd.f32 %v1352, %v1428
        %v1461 = vadd.f32 %v1357, %v1429
        %v1462 = vadd.f32 %v1360, %v1430
        %v1463 = vadd.f32 %v1365, %v1431
        %v1464 = vadd.f32 %v1368, %v1432
        %v1465 = vadd.f32 %v1373, %v1433
        %v1466 = vadd.f32 %v1376, %v1434
        %v1467 = vadd.f32 %v1381, %v1435
        %v1468 = vadd.f32 %v1384, %v1436
        %v1469 = vadd.f32 %v1389, %v1437
        %v1470 = vadd.f32 %v1392, %v1438
        %v1471 = vadd.f32 %v1397, %v1439
        %v1472 = vadd.f32 %v1400, %v1440
        %v1473 = vadd.f32 %v1405, %v1441
        %v1474 = vadd.f32 %v1408, %v1442
        %1475 = vst [vmem:[%s218] sm:$0xff] %v1443
        %1476 = vst [vmem:[%s218 + $0x8] sm:$0xff] %v1444
        %1477 = vst [vmem:[%s218 + $0x10] sm:$0xff] %v1445
        %1478 = vst [vmem:[%s218 + $0x18] sm:$0xff] %v1446
        %1479 = vst [vmem:[%s218 + $0x20] sm:$0xff] %v1447
        %1480 = vst [vmem:[%s218 + $0x28] sm:$0xff] %v1448
        %1481 = vst [vmem:[%s218 + $0x30] sm:$0xff] %v1449
        %1482 = vst [vmem:[%s218 + $0x38] sm:$0xff] %v1450
        %1483 = vst [vmem:[%s218 + $0x40] sm:$0xff] %v1451
        %1484 = vst [vmem:[%s218 + $0x48] sm:$0xff] %v1452
        %1485 = vst [vmem:[%s218 + $0x50] sm:$0xff] %v1453
        %1486 = vst [vmem:[%s218 + $0x58] sm:$0xff] %v1454
        %1487 = vst [vmem:[%s218 + $0x60] sm:$0xff] %v1455
        %1488 = vst [vmem:[%s218 + $0x68] sm:$0xff] %v1456
        %1489 = vst [vmem:[%s218 + $0x70] sm:$0xff] %v1457
        %1490 = vst [vmem:[%s218 + $0x78] sm:$0xff] %v1458
        %1491 = vst [vmem:[%s218 + $0x80] sm:$0xff] %v1459
        %1492 = vst [vmem:[%s218 + $0x88] sm:$0xff] %v1460
        %1493 = vst [vmem:[%s218 + $0x90] sm:$0xff] %v1461
        %1494 = vst [vmem:[%s218 + $0x98] sm:$0xff] %v1462
        %1495 = vst [vmem:[%s218 + $0xa0] sm:$0xff] %v1463
        %1496 = vst [vmem:[%s218 + $0xa8] sm:$0xff] %v1464
        %1497 = vst [vmem:[%s218 + $0xb0] sm:$0xff] %v1465
        %1498 = vst [vmem:[%s218 + $0xb8] sm:$0xff] %v1466
        %1499 = vst [vmem:[%s218 + $0xc0] sm:$0xff] %v1467
        %1500 = vst [vmem:[%s218 + $0xc8] sm:$0xff] %v1468
        %1501 = vst [vmem:[%s218 + $0xd0] sm:$0xff] %v1469
        %1502 = vst [vmem:[%s218 + $0xd8] sm:$0xff] %v1470
        %1503 = vst [vmem:[%s218 + $0xe0] sm:$0xff] %v1471
        %1504 = vst [vmem:[%s218 + $0xe8] sm:$0xff] %v1472
        %1505 = vst [vmem:[%s218 + $0xf0] sm:$0xff] %v1473
        %1506 = vst [vmem:[%s218 + $0xf8] sm:$0xff] %v1474
        %s1507 = sand.u32 %s137, 1
        %s1508 = scalar_lea.sflag [#allocation3], %s1507
        %s1509 = sand.u32 %s137, 1
        %s1510 = smul.addr %s1509, 256
        %s1511 = scalar_lea.vmem [#allocation2], %s1510
        // Predicated region
        $region41: #{spatial_prior_adaptor3_forward.7} parent=39 // pred_check
          %p1512 = pneg %p147
        $region42: #{spatial_prior_adaptor3_forward.7} parent=39 // pred_check_branch
          %1514 = sbr.rel (%p1512) target = $region44
        $region43: #{spatial_prior_adaptor3_forward.7} parent=39 // pred_region
          %s1515 = smul.u32 32, %s19
          %s1517 = ssub.s32 4096, 4096
          %1518 = vsyncadd %s1508, %s1517
          %s1519 = smul.addr %s1515, 128
          %s1520 = scalar_lea.hbm %s5, %s1519
          %s1521 = sshll.u32 %s1511, 4
          %s1522 = int_to_ptr.vmem [resolvable:$true] %s1521
          %1527 = dma.vmem_to_hbm [thread:$0]  %s1522, 4096, %s1520, %s1508, 128, 128, 8
        $region44: #{spatial_prior_adaptor3_forward.7} parent=39 // pred_fallthru
          _
      $region40: #{spatial_prior_adaptor3_forward.7} parent=5 // pred_fallthru
        _
      %p1528 = scmp.le.s32.totalorder 2, %s14
      // Predicated region
      $region45: #{spatial_prior_adaptor3_forward.7} parent=5 // pred_check
        %p1529 = pneg %p1528
      $region46: #{spatial_prior_adaptor3_forward.7} parent=5 // pred_check_branch
        %1531 = sbr.rel (%p1529) target = $region48
      $region47: #{spatial_prior_adaptor3_forward.7} parent=5 // pred_region
        %s1532 = ssub.s32 %s14, 2
        // Predicated region
        $region49: #{spatial_prior_adaptor3_forward.7} parent=47 // pred_check
          %p1533 = pneg %p153
        $region50: #{spatial_prior_adaptor3_forward.7} parent=47 // pred_check_branch
          %1535 = sbr.rel (%p1533) target = $region52
        $region51: #{spatial_prior_adaptor3_forward.7} parent=47 // pred_region
          %s1536 = sand.u32 %s138, 1
          %s1537 = scalar_lea.sflag [#allocation3], %s1536
          %s1538 = sand.u32 %s138, 1
          %s1539 = smul.addr %s1538, 256
          %s1540 = scalar_lea.vmem [#allocation2], %s1539
          %1541 = dma.done %s1537, 4096
        $region52: #{spatial_prior_adaptor3_forward.7} parent=47 // pred_fallthru
          _
      $region48: #{spatial_prior_adaptor3_forward.7} parent=5 // pred_fallthru
        _
    $region6: #{spatial_prior_adaptor3_forward.7} parent=1 // loop_footer
      %s18 = sadd.s32 1, %s14
    $region7: #{spatial_prior_adaptor3_forward.7} parent=1 // loop_footer_branch
      %13 = sbr.rel target = $region3
    $region8: #{spatial_prior_adaptor3_forward.7} parent=1 // loop_exit
      _
    %1542 = vsyncpa [#allocation3], 1
    %s1543 = scalar_lea.sflag [#allocation3], 1
    %1544 = vsyncpa %s1543, 1

</llo_original>
